<compile_context>
chip_gen: v6e
topology: v6e:2x2x1
jax: 0.10.0
libtpu: 0.0.40
codegen_flags: <defaults>
</compile_context>

<pallas_src>
import functools

import jax
import jax.numpy as jnp
import numpy as np
from jax import lax
from jax.experimental import pallas as pl
from jax.experimental.pallas import tpu as pltpu

EPS = 1e-6


def _mm(a, b):
    # bf16 operands + f32 accumulation (review: MXU-native; halves operand bytes).
    return jnp.dot(a.astype(jnp.bfloat16), b.astype(jnp.bfloat16),
                   preferred_element_type=jnp.float32)


# ---------------------------------------------------------------------------
# generic 3x3 "same" convolution (NHWC), one image per grid step
# ---------------------------------------------------------------------------
def conv3x3_kernel(H, W, Cin, Cout, x_ref, w_ref, b_ref, o_ref, pad_ref):
    # Zero only the 1-pixel border (never overwritten below): cheaper than a full
    # per-step memset and safe under megacore grid partitioning.
    pad_ref[0:1, :, :] = jnp.zeros((1, W + 2, Cin), jnp.float32)
    pad_ref[H + 1:H + 2, :, :] = jnp.zeros((1, W + 2, Cin), jnp.float32)
    pad_ref[:, 0:1, :] = jnp.zeros((H + 2, 1, Cin), jnp.float32)
    pad_ref[:, W + 1:W + 2, :] = jnp.zeros((H + 2, 1, Cin), jnp.float32)
    pad_ref[1:H + 1, 1:W + 1, :] = x_ref[0]

    acc = jnp.zeros((H * W, Cout), jnp.float32)
    for k in range(9):                                   # static 3x3 taps
        dy, dx = k // 3, k % 3
        xs = pad_ref[dy:dy + H, dx:dx + W, :].reshape(H * W, Cin)
        acc = acc + _mm(xs, w_ref[k])
    o_ref[...] = (acc + b_ref[...]).reshape(1, H, W, Cout)


def conv3x3(x, w, b):
    """x: (N, H, W, Cin) f32; w: (9, Cin, Cout) tap-major (ky*3+kx); b: (1, Cout)."""
    N, H, W, Cin = x.shape
    Cout = w.shape[-1]
    kernel = functools.partial(conv3x3_kernel, H, W, Cin, Cout)
    return pl.pallas_call(
        kernel,
        out_shape=jax.ShapeDtypeStruct((N, H, W, Cout), jnp.float32),
        grid_spec=pltpu.PrefetchScalarGridSpec(
            num_scalar_prefetch=0,
            grid=(N,),
            in_specs=[
                pl.BlockSpec((1, H, W, Cin), lambda n: (n, 0, 0, 0)),
                pl.BlockSpec((9, Cin, Cout), lambda n: (0, 0, 0)),
                pl.BlockSpec((1, Cout), lambda n: (0, 0)),
            ],
            out_specs=pl.BlockSpec((1, H, W, Cout), lambda n: (n, 0, 0, 0)),
            scratch_shapes=[pltpu.VMEM((H + 2, W + 2, Cin), jnp.float32)],
        ),
        compiler_params=pltpu.CompilerParams(dimension_semantics=("parallel",)),
    )(x, w, b)


# ---------------------------------------------------------------------------
# GCN step: out = relu(x * s[n, c])   (lamda and diag(A) folded into s)
# ---------------------------------------------------------------------------
def scale_relu_kernel(x_ref, s_ref, o_ref):
    o_ref[...] = jnp.maximum(x_ref[...] * s_ref[...], 0.0)


def scale_relu(x, s):
    N, H, W, C = x.shape
    s4 = s.reshape(N, 1, 1, C).astype(jnp.float32)
    return pl.pallas_call(
        scale_relu_kernel,
        out_shape=jax.ShapeDtypeStruct((N, H, W, C), jnp.float32),
        grid_spec=pltpu.PrefetchScalarGridSpec(
            num_scalar_prefetch=0,
            grid=(N,),
            in_specs=[
                pl.BlockSpec((1, H, W, C), lambda n: (n, 0, 0, 0)),
                pl.BlockSpec((1, 1, 1, C), lambda n: (n, 0, 0, 0)),
            ],
            out_specs=pl.BlockSpec((1, H, W, C), lambda n: (n, 0, 0, 0)),
        ),
        compiler_params=pltpu.CompilerParams(dimension_semantics=("parallel",)),
    )(x, s4)


# ---------------------------------------------------------------------------
# NAFBlock (DW_Expand=2, FFN_Expand=2, drop_out_rate=0) -- whole block fused
# ---------------------------------------------------------------------------
NAF_PARAM_ORDER = ['wn1', 'bn1', 'w1', 'b1', 'wdw', 'bdw', 'wsca', 'bsca',
                   'w3', 'b3', 'beta', 'wn2', 'bn2', 'w4', 'b4', 'w5', 'b5', 'gamma']


def nafblock_kernel(B, H, W, C,
                    x_ref,
                    wn1_ref, bn1_ref,
                    w1_ref, b1_ref,
                    wdw_ref, bdw_ref,
                    wsca_ref, bsca_ref,
                    w3_ref, b3_ref, beta_ref,
                    wn2_ref, bn2_ref,
                    w4_ref, b4_ref,
                    w5_ref, b5_ref, gamma_ref,
                    out_ref,
                    pad_ref):
    """Processes B images per grid step; channels on lanes, B*H*W on sublanes."""
    HW = H * W
    C2 = 2 * C
    inp = x_ref[...].reshape(B * HW, C)

    def layernorm(v, w, b):                        # f32 statistics
        mu = jnp.mean(v, axis=-1, keepdims=True)
        d = v - mu
        var = jnp.mean(d * d, axis=-1, keepdims=True)
        return d * lax.rsqrt(var + EPS) * w + b

    # ---- norm1 + conv1 (1x1, c -> 2c) ----
    xn = layernorm(inp, wn1_ref[...], bn1_ref[...])
    x2 = _mm(xn, w1_ref[...]) + b1_ref[...]                     # (B*HW, 2C)

    # ---- conv2: 3x3 depthwise, padding=1 (f32 VPU taps) ----
    # Padded scratch: only the zero border is rewritten each step (no full memset,
    # per review); the interior is fully overwritten below.
    x2 = x2.reshape(B, H, W, C2)
    pad_ref[:, 0:1, :, :] = jnp.zeros((B, 1, W + 2, C2), jnp.float32)
    pad_ref[:, H + 1:H + 2, :, :] = jnp.zeros((B, 1, W + 2, C2), jnp.float32)
    pad_ref[:, :, 0:1, :] = jnp.zeros((B, H + 2, 1, C2), jnp.float32)
    pad_ref[:, :, W + 1:W + 2, :] = jnp.zeros((B, H + 2, 1, C2), jnp.float32)
    pad_ref[:, 1:H + 1, 1:W + 1, :] = x2

    acc = x2 * wdw_ref[4]                                       # centre tap
    for k in range(9):
        if k == 4:
            continue
        dy, dx = k // 3, k % 3
        acc = acc + pad_ref[:, dy:dy + H, dx:dx + W, :] * wdw_ref[k]
    x2 = acc.reshape(B * HW, C2) + bdw_ref[...]

    # ---- SimpleGate ----
    xg = x2[:, :C] * x2[:, C:]                                  # (B*HW, C)

    # ---- SCA: per-image global average pool + 1x1 conv, channel rescale ----
    xg_b = xg.reshape(B, HW, C)
    s = jnp.mean(xg_b, axis=1)                                  # (B, C)
    s = _mm(s, wsca_ref[...]) + bsca_ref[...]                   # (B, C)
    xg = (xg_b * s[:, None, :]).reshape(B * HW, C)

    # ---- conv3 (1x1, c -> c) + residual 1 (dropout1 == identity) ----
    x3 = _mm(xg, w3_ref[...]) + b3_ref[...]
    y = inp + x3 * beta_ref[...]

    # ---- norm2 + conv4 + SimpleGate + conv5 + residual 2 ----
    yn = layernorm(y, wn2_ref[...], bn2_ref[...])
    z = _mm(yn, w4_ref[...]) + b4_ref[...]
    z = z[:, :C] * z[:, C:]
    z = _mm(z, w5_ref[...]) + b5_ref[...]
    out = y + z * gamma_ref[...]
    out_ref[...] = out.reshape(B, H, W, C)


def nafblock(x, p, batch_tile=None):
    N, H, W, C = x.shape
    if batch_tile is None:
        # Several images per grid step (review feedback); remaining grid steps are
        # still "parallel" so they shard across TensorCores on v7x when N is larger.
        batch_tile = min(N, 2)
    assert N % batch_tile == 0
    B = batch_tile
    kernel = functools.partial(nafblock_kernel, B, H, W, C)
    param_arrays = [p[k] for k in NAF_PARAM_ORDER]

    def pspec(a):
        nd = a.ndim
        return pl.BlockSpec(a.shape, lambda n, _nd=nd: (0,) * _nd)

    in_specs = ([pl.BlockSpec((B, H, W, C), lambda n: (n, 0, 0, 0))]
                + [pspec(a) for a in param_arrays])
    out_spec = pl.BlockSpec((B, H, W, C), lambda n: (n, 0, 0, 0))

    return pl.pallas_call(
        kernel,
        out_shape=jax.ShapeDtypeStruct((N, H, W, C), jnp.float32),
        grid_spec=pltpu.PrefetchScalarGridSpec(
            num_scalar_prefetch=0,
            grid=(N // B,),
            in_specs=in_specs,
            out_specs=out_spec,
            scratch_shapes=[pltpu.VMEM((B, H + 2, W + 2, 2 * C), jnp.float32)],
        ),
        compiler_params=pltpu.CompilerParams(dimension_semantics=("parallel",)),
    )(x, *param_arrays)


# ---------------------------------------------------------------------------
# 2x2 / stride-2 down conv: wrapper does space-to-depth, kernel does the matmul
# ---------------------------------------------------------------------------
def conv1x1_kernel(h, w, cin, cout, x_ref, w_ref, b_ref, o_ref):
    x = x_ref[...].reshape(h * w, cin)
    o = _mm(x, w_ref[...]) + b_ref[...]
    o_ref[...] = o.reshape(1, h, w, cout)


def downsample2x2(x, w, b):
    """PyTorch Conv2d(C, Cout, kernel_size=2, stride=2); w is HWIO (2,2,C,Cout)."""
    N, H, W, C = x.shape
    Cout = w.shape[-1]
    h2, w2 = H // 2, W // 2
    # wrapper-side layout plumbing: (N,H,W,C) -> (N,h2,w2,(ky,kx,ci)) lane-dense
    xs = x.reshape(N, h2, 2, w2, 2, C).transpose(0, 1, 3, 2, 4, 5)
    xs = xs.reshape(N, h2, w2, 4 * C)
    wf = w.reshape(4 * C, Cout)
    kernel = functools.partial(conv1x1_kernel, h2, w2, 4 * C, Cout)
    return pl.pallas_call(
        kernel,
        out_shape=jax.ShapeDtypeStruct((N, h2, w2, Cout), jnp.float32),
        grid_spec=pltpu.PrefetchScalarGridSpec(
            num_scalar_prefetch=0,
            grid=(N,),
            in_specs=[
                pl.BlockSpec((1, h2, w2, 4 * C), lambda n: (n, 0, 0, 0)),
                pl.BlockSpec((4 * C, Cout), lambda n: (0, 0)),
                pl.BlockSpec((1, Cout), lambda n: (0, 0)),
            ],
            out_specs=pl.BlockSpec((1, h2, w2, Cout), lambda n: (n, 0, 0, 0)),
        ),
        compiler_params=pltpu.CompilerParams(dimension_semantics=("parallel",)),
    )(xs, wf, b)


# ---------------------------------------------------------------------------
# Encoder_GCN forward (Pallas path)
# ---------------------------------------------------------------------------
def encoder_gcn_forward(inps, params):
    """inps: list of 4 NCHW arrays (N, 3, H, W). Returns the `encs` list (NCHW)."""
    N, _, H, W = inps[0].shape
    nhwc = [jnp.transpose(i, (0, 2, 3, 1)).astype(jnp.float32) for i in inps]

    # conv0 on the 4 frames (shared weights): stack on the batch axis.
    frames = jnp.concatenate(nhwc, axis=0)                       # (4N, H, W, 3)
    f = conv3x3(frames, params['conv0_w'], params['conv0_b'])    # (4N, H, W, 16)
    # channel concat in torch order: [conv0(inp0) | conv0(inp1) | ...]
    x = f.reshape(4, N, H, W, 16).transpose(1, 2, 3, 0, 4).reshape(N, H, W, 64)

    # q1/k1 and the tiny (N,64) adjacency math (plain JAX glue between kernels).
    q1 = conv3x3(x, params['convq_w'], params['convq_b']).mean(axis=(1, 2))
    k1 = conv3x3(x, params['convk_w'], params['convk_b']).mean(axis=(1, 2))
    # torch.einsum('bhwc,bcc->bhwc', x, A) multiplies by diag(A):
    diag_a = jnp.diagonal(params['adj1'])[None, :] + jnp.tanh(q1 - k1)   # (N, 64)
    s_eff = params['lamda'] * diag_a                                     # fold lamda

    x = conv3x3(x, params['conv1_w'], params['conv1_b'])
    x = scale_relu(x, s_eff)                                     # relu(lamda*x*diagA)

    encs = []
    for blocks, down in zip(params['encoders'], params['downs']):
        for bp in blocks:
            x = nafblock(x, bp)
        encs.append(x)
        x = downsample2x2(x, down['w'], down['b'])
    encs.append(x)
    return [jnp.transpose(e, (0, 3, 1, 2)) for e in encs]


# ---------------------------------------------------------------------------
# parameter init (deterministic, synthetic)
# ---------------------------------------------------------------------------
def init_nafblock_params(key, c):
    dw = 2 * c
    ffn = 2 * c
    ks = jax.random.split(key, 16)

    def mat(k, cin, cout):
        return ((1.0 / np.sqrt(cin)) * jax.random.normal(k, (cin, cout))).astype(jnp.float32)

    def vec(k, n, scale=0.1):
        return (scale * jax.random.normal(k, (1, n))).astype(jnp.float32)

    p = {}
    p['wn1'] = (1.0 + 0.1 * jax.random.normal(ks[0], (1, c))).astype(jnp.float32)
    p['bn1'] = vec(ks[1], c)
    p['w1'] = mat(ks[2], c, dw)
    p['b1'] = vec(ks[3], dw)
    p['wdw'] = ((1.0 / 3.0) * jax.random.normal(ks[4], (9, 1, dw))).astype(jnp.float32)
    p['bdw'] = vec(ks[5], dw)
    p['wsca'] = mat(ks[6], dw // 2, dw // 2)
    p['bsca'] = vec(ks[7], dw // 2)
    p['w3'] = mat(ks[8], dw // 2, c)
    p['b3'] = vec(ks[9], c)
    p['wn2'] = (1.0 + 0.1 * jax.random.normal(ks[10], (1, c))).astype(jnp.float32)
    p['bn2'] = vec(ks[11], c)
    p['w4'] = mat(ks[12], c, ffn)
    p['b4'] = vec(ks[13], ffn)
    p['w5'] = mat(ks[14], ffn // 2, c)
    p['b5'] = vec(ks[15], c)
    # PyTorch inits beta/gamma to zeros (block == identity); nonzero here so the
    # whole data path is exercised by the check.
    p['beta'] = jnp.full((1, c), 0.5, jnp.float32)
    p['gamma'] = jnp.full((1, c), 0.25, jnp.float32)
    return p


def init_params(key, width=64, enc_blk_nums=(1,)):
    ks = iter(jax.random.split(key, 64))

    def conv_w(k, cin, cout):
        return ((1.0 / np.sqrt(9 * cin)) *
                jax.random.normal(k, (9, cin, cout))).astype(jnp.float32)

    def vec(k, n, scale=0.1):
        return (scale * jax.random.normal(k, (1, n))).astype(jnp.float32)

    p = {}
    p['conv0_w'] = conv_w(next(ks), 3, 16)
    p['conv0_b'] = vec(next(ks), 16)
    p['convq_w'] = conv_w(next(ks), 64, 64)
    p['convq_b'] = vec(next(ks), 64)
    p['convk_w'] = conv_w(next(ks), 64, 64)
    p['convk_b'] = vec(next(ks), 64)
    p['conv1_w'] = conv_w(next(ks), 64, 64)
    p['conv1_b'] = vec(next(ks), 64)
    p['adj1'] = jnp.ones((64, 64), jnp.float32)        # torch init: ones
    p['lamda'] = jnp.float32(1.0 / 64.0)               # torch init: 1/64

    p['encoders'] = []
    p['downs'] = []
    if enc_blk_nums:
        assert width == 64  # GCN front-end emits 64 channels
    chan = width
    for num in enc_blk_nums:
        p['encoders'].append([init_nafblock_params(next(ks), chan) for _ in range(num)])
        wd = ((1.0 / np.sqrt(4 * chan)) *
              jax.random.normal(next(ks), (2, 2, chan, 2 * chan))).astype(jnp.float32)
        p['downs'].append({'w': wd, 'b': vec(next(ks), 2 * chan)})
        chan *= 2
    return p


# ---------------------------------------------------------------------------
# pure-JAX reference (same bf16-operand / f32-accumulation rounding as kernels)
# ---------------------------------------------------------------------------
def _bmm(eq, a, b):
    return jnp.einsum(eq, a.astype(jnp.bfloat16), b.astype(jnp.bfloat16),
                      preferred_element_type=jnp.float32)


def conv3x3_ref(x, w, b):
    cin, cout = w.shape[1], w.shape[2]
    whwio = w.reshape(3, 3, cin, cout).astype(jnp.bfloat16)
    y = lax.conv_general_dilated(
        x.astype(jnp.bfloat16), whwio, window_strides=(1, 1),
        padding=((1, 1), (1, 1)), dimension_numbers=('NHWC', 'HWIO', 'NHWC'),
        preferred_element_type=jnp.float32)
    return y + b[0]


def nafblock_ref(x, p):
    C = x.shape[-1]

    def ln(v, w, b):
        mu = v.mean(-1, keepdims=True)
        var = ((v - mu) ** 2).mean(-1, keepdims=True)
        return (v - mu) / jnp.sqrt(var + EPS) * w[0] + b[0]

    xn = ln(x, p['wn1'], p['bn1'])
    x2 = _bmm('nhwc,cd->nhwd', xn, p['w1']) + p['b1'][0]
    wdw = p['wdw'].reshape(3, 3, 1, 2 * C)
    x2 = lax.conv_general_dilated(
        x2, wdw, window_strides=(1, 1), padding=((1, 1), (1, 1)),
        dimension_numbers=('NHWC', 'HWIO', 'NHWC'),
        feature_group_count=2 * C, precision=lax.Precision.HIGHEST) + p['bdw'][0]
    x3 = x2[..., :C] * x2[..., C:]
    s = x3.mean(axis=(1, 2), keepdims=True)
    s = _bmm('nhwc,cd->nhwd', s, p['wsca']) + p['bsca'][0]
    x3 = x3 * s
    x3 = _bmm('nhwc,cd->nhwd', x3, p['w3']) + p['b3'][0]
    y = x + x3 * p['beta'][0]
    yn = ln(y, p['wn2'], p['bn2'])
    z = _bmm('nhwc,cd->nhwd', yn, p['w4']) + p['b4'][0]
    z = z[..., :C] * z[..., C:]
    z = _bmm('nhwc,cd->nhwd', z, p['w5']) + p['b5'][0]
    return y + z * p['gamma'][0]


def encoder_gcn_reference(inps, p):
    nhwc = [jnp.transpose(i, (0, 2, 3, 1)).astype(jnp.float32) for i in inps]
    feats = [conv3x3_ref(v, p['conv0_w'], p['conv0_b']) for v in nhwc]
    x = jnp.concatenate(feats, axis=-1)                          # (N, H, W, 64)
    q1 = conv3x3_ref(x, p['convq_w'], p['convq_b']).mean(axis=(1, 2))
    k1 = conv3x3_ref(x, p['convk_w'], p['convk_b']).mean(axis=(1, 2))
    a = p['adj1'][None] + jnp.tanh(q1[:, :, None] - k1[:, None, :])
    diag_a = jnp.diagonal(a, axis1=1, axis2=2)       # einsum('bhwc,bcc->bhwc') scale
    x = conv3x3_ref(x, p['conv1_w'], p['conv1_b'])
    x = x * diag_a[:, None, None, :]
    x = jax.nn.relu(p['lamda'] * x)
    encs = []
    for blocks, down in zip(p['encoders'], p['downs']):
        for bp in blocks:
            x = nafblock_ref(x, bp)
        encs.append(x)
        x = lax.conv_general_dilated(
            x.astype(jnp.bfloat16), down['w'].astype(jnp.bfloat16),
            window_strides=(2, 2), padding='VALID',
            dimension_numbers=('NHWC', 'HWIO', 'NHWC'),
            preferred_element_type=jnp.float32) + down['b'][0]
    encs.append(x)
    return [jnp.transpose(e, (0, 3, 1, 2)) for e in encs]


if __name__ == "__main__":
    key = jax.random.PRNGKey(0)
    kx, kp = jax.random.split(key)

    N, H, W = 2, 16, 16
    WIDTH = 64           # GCN front-end emits 64 channels -> width must be 64 for
                         # a non-empty encoder stack
    ENC_BLK_NUMS = (1,)

    kin = jax.random.split(kx, 4)
    inps = [jax.random.normal(kin[i], (N, 3, H, W), jnp.float32) for i in range(4)]
    params = init_params(kp, width=WIDTH, enc_blk_nums=ENC_BLK_NUMS)

    encs = encoder_gcn_forward(inps, params)
    encs = jax.block_until_ready(encs)
    assert len(encs) == len(ENC_BLK_NUMS) + 1
    assert encs[0].shape == (N, 64, H, W)
    assert encs[1].shape == (N, 128, H // 2, W // 2)

    refs = encoder_gcn_reference(inps, params)
    for got, want in zip(encs, refs):
        np.testing.assert_allclose(np.asarray(got), np.asarray(want),
                                   atol=2e-3, rtol=2e-3)

    print("KERNEL_OK")
</pallas_src>

<mosaic_0001>
module attributes {stable_mosaic.version = 11 : i64} {
  func.func @conv3x3_kernel(%arg0: i32, %arg1: memref<1x16x16x3xf32, #tpu.memory_space<vmem>>, %arg2: memref<9x3x16xf32, #tpu.memory_space<vmem>>, %arg3: memref<1x16xf32, #tpu.memory_space<vmem>>, %arg4: memref<1x16x16x16xf32, #tpu.memory_space<vmem>>, %arg5: memref<18x18x3xf32, #tpu.memory_space<vmem>>) attributes {dimension_semantics = [#tpu.dimension_semantics<parallel>], iteration_bounds = array<i64: 8>, scalar_prefetch = 0 : i64, scratch_operands = 1 : i64, tpu.core_type = #tpu.core_type<tc>, window_params = [{transform_indices = @transform_0, window_bounds = array<i64: 1, 16, 16, 3>}, {pipeline_mode = #tpu.pipeline_mode<synchronous>, transform_indices = @transform_1, window_bounds = array<i64: 9, 3, 16>}, {pipeline_mode = #tpu.pipeline_mode<synchronous>, transform_indices = @transform_2, window_bounds = array<i64: 1, 16>}, {transform_indices = @transform_3, window_bounds = array<i64: 1, 16, 16, 16>}]} {
    %cst = arith.constant 0.000000e+00 : f32
    %0 = vector.broadcast %cst : f32 to vector<1x18x3xf32>
    %c0 = arith.constant 0 : index
    %c0_0 = arith.constant 0 : index
    %c0_1 = arith.constant 0 : index
    %1 = vector.load %arg5[%c0, %c0_0, %c0_1] : memref<18x18x3xf32, #tpu.memory_space<vmem>>, vector<1x18x3xf32>
    tpu.vector_store %arg5[%c0, %c0_0, %c0_1], %0 {strides = array<i32>} : memref<18x18x3xf32, #tpu.memory_space<vmem>>, vector<1x18x3xf32>,
    %cst_2 = arith.constant 0.000000e+00 : f32
    %2 = vector.broadcast %cst_2 : f32 to vector<1x18x3xf32>
    %c17 = arith.constant 17 : index
    %c0_3 = arith.constant 0 : index
    %c0_4 = arith.constant 0 : index
    %3 = vector.load %arg5[%c17, %c0_3, %c0_4] : memref<18x18x3xf32, #tpu.memory_space<vmem>>, vector<1x18x3xf32>
    tpu.vector_store %arg5[%c17, %c0_3, %c0_4], %2 {strides = array<i32>} : memref<18x18x3xf32, #tpu.memory_space<vmem>>, vector<1x18x3xf32>,
    %cst_5 = arith.constant 0.000000e+00 : f32
    %4 = vector.broadcast %cst_5 : f32 to vector<18x1x3xf32>
    %c0_6 = arith.constant 0 : index
    %c0_7 = arith.constant 0 : index
    %c0_8 = arith.constant 0 : index
    %5 = vector.load %arg5[%c0_6, %c0_7, %c0_8] : memref<18x18x3xf32, #tpu.memory_space<vmem>>, vector<18x1x3xf32>
    tpu.vector_store %arg5[%c0_6, %c0_7, %c0_8], %4 {strides = array<i32>} : memref<18x18x3xf32, #tpu.memory_space<vmem>>, vector<18x1x3xf32>,
    %cst_9 = arith.constant 0.000000e+00 : f32
    %6 = vector.broadcast %cst_9 : f32 to vector<18x1x3xf32>
    %c0_10 = arith.constant 0 : index
    %c17_11 = arith.constant 17 : index
    %c0_12 = arith.constant 0 : index
    %7 = vector.load %arg5[%c0_10, %c17_11, %c0_12] : memref<18x18x3xf32, #tpu.memory_space<vmem>>, vector<18x1x3xf32>
    tpu.vector_store %arg5[%c0_10, %c17_11, %c0_12], %6 {strides = array<i32>} : memref<18x18x3xf32, #tpu.memory_space<vmem>>, vector<18x1x3xf32>,
    %c0_13 = arith.constant 0 : index
    %c0_14 = arith.constant 0 : index
    %c0_15 = arith.constant 0 : index
    %c0_16 = arith.constant 0 : index
    %8 = vector.load %arg1[%c0_13, %c0_14, %c0_15, %c0_16] : memref<1x16x16x3xf32, #tpu.memory_space<vmem>>, vector<1x16x16x3xf32>
    %9 = vector.shape_cast %8 : vector<1x16x16x3xf32> to vector<16x16x3xf32>
    %c1 = arith.constant 1 : index
    %c1_17 = arith.constant 1 : index
    %c0_18 = arith.constant 0 : index
    %10 = vector.load %arg5[%c1, %c1_17, %c0_18] : memref<18x18x3xf32, #tpu.memory_space<vmem>>, vector<16x16x3xf32>
    tpu.vector_store %arg5[%c1, %c1_17, %c0_18], %9 {strides = array<i32>} : memref<18x18x3xf32, #tpu.memory_space<vmem>>, vector<16x16x3xf32>,
    %cst_19 = arith.constant 0.000000e+00 : f32
    %11 = vector.broadcast %cst_19 : f32 to vector<256x16xf32>
    %c0_20 = arith.constant 0 : index
    %c0_21 = arith.constant 0 : index
    %c0_22 = arith.constant 0 : index
    %12 = vector.load %arg5[%c0_20, %c0_21, %c0_22] : memref<18x18x3xf32, #tpu.memory_space<vmem>>, vector<16x16x3xf32>
    %13 = vector.shape_cast %12 : vector<16x16x3xf32> to vector<256x3xf32>
    %c0_23 = arith.constant 0 : index
    %c0_24 = arith.constant 0 : index
    %c0_25 = arith.constant 0 : index
    %14 = vector.load %arg2[%c0_23, %c0_24, %c0_25] : memref<9x3x16xf32, #tpu.memory_space<vmem>>, vector<1x3x16xf32>
    %15 = vector.shape_cast %14 : vector<1x3x16xf32> to vector<3x16xf32>
    %16 = arith.truncf %13 : vector<256x3xf32> to vector<256x3xbf16>
    %17 = arith.truncf %15 : vector<3x16xf32> to vector<3x16xbf16>
    %cst_26 = arith.constant dense<0.000000e+00> : vector<256x16xf32>
    %18 = tpu.matmul %16, %17, %cst_26 {dimension_numbers = #tpu.dot_dimension_numbers<[1], [0], [0], [1], [0, 0, 1, 1], [], []>} : vector<256x3xbf16>, vector<3x16xbf16>, vector<256x16xf32> -> vector<256x16xf32>
    %19 = arith.addf %11, %18 : vector<256x16xf32>
    %c0_27 = arith.constant 0 : index
    %c1_28 = arith.constant 1 : index
    %c0_29 = arith.constant 0 : index
    %20 = vector.load %arg5[%c0_27, %c1_28, %c0_29] : memref<18x18x3xf32, #tpu.memory_space<vmem>>, vector<16x16x3xf32>
    %21 = vector.shape_cast %20 : vector<16x16x3xf32> to vector<256x3xf32>
    %c1_30 = arith.constant 1 : index
    %c0_31 = arith.constant 0 : index
    %c0_32 = arith.constant 0 : index
    %22 = vector.load %arg2[%c1_30, %c0_31, %c0_32] : memref<9x3x16xf32, #tpu.memory_space<vmem>>, vector<1x3x16xf32>
    %23 = vector.shape_cast %22 : vector<1x3x16xf32> to vector<3x16xf32>
    %24 = arith.truncf %21 : vector<256x3xf32> to vector<256x3xbf16>
    %25 = arith.truncf %23 : vector<3x16xf32> to vector<3x16xbf16>
    %cst_33 = arith.constant dense<0.000000e+00> : vector<256x16xf32>
    %26 = tpu.matmul %24, %25, %cst_33 {dimension_numbers = #tpu.dot_dimension_numbers<[1], [0], [0], [1], [0, 0, 1, 1], [], []>} : vector<256x3xbf16>, vector<3x16xbf16>, vector<256x16xf32> -> vector<256x16xf32>
    %27 = arith.addf %19, %26 : vector<256x16xf32>
    %c0_34 = arith.constant 0 : index
    %c2 = arith.constant 2 : index
    %c0_35 = arith.constant 0 : index
    %28 = vector.load %arg5[%c0_34, %c2, %c0_35] : memref<18x18x3xf32, #tpu.memory_space<vmem>>, vector<16x16x3xf32>
    %29 = vector.shape_cast %28 : vector<16x16x3xf32> to vector<256x3xf32>
    %c2_36 = arith.constant 2 : index
    %c0_37 = arith.constant 0 : index
    %c0_38 = arith.constant 0 : index
    %30 = vector.load %arg2[%c2_36, %c0_37, %c0_38] : memref<9x3x16xf32, #tpu.memory_space<vmem>>, vector<1x3x16xf32>
    %31 = vector.shape_cast %30 : vector<1x3x16xf32> to vector<3x16xf32>
    %32 = arith.truncf %29 : vector<256x3xf32> to vector<256x3xbf16>
    %33 = arith.truncf %31 : vector<3x16xf32> to vector<3x16xbf16>
    %cst_39 = arith.constant dense<0.000000e+00> : vector<256x16xf32>
    %34 = tpu.matmul %32, %33, %cst_39 {dimension_numbers = #tpu.dot_dimension_numbers<[1], [0], [0], [1], [0, 0, 1, 1], [], []>} : vector<256x3xbf16>, vector<3x16xbf16>, vector<256x16xf32> -> vector<256x16xf32>
    %35 = arith.addf %27, %34 : vector<256x16xf32>
    %c1_40 = arith.constant 1 : index
    %c0_41 = arith.constant 0 : index
    %c0_42 = arith.constant 0 : index
    %36 = vector.load %arg5[%c1_40, %c0_41, %c0_42] : memref<18x18x3xf32, #tpu.memory_space<vmem>>, vector<16x16x3xf32>
    %37 = vector.shape_cast %36 : vector<16x16x3xf32> to vector<256x3xf32>
    %c3 = arith.constant 3 : index
    %c0_43 = arith.constant 0 : index
    %c0_44 = arith.constant 0 : index
    %38 = vector.load %arg2[%c3, %c0_43, %c0_44] : memref<9x3x16xf32, #tpu.memory_space<vmem>>, vector<1x3x16xf32>
    %39 = vector.shape_cast %38 : vector<1x3x16xf32> to vector<3x16xf32>
    %40 = arith.truncf %37 : vector<256x3xf32> to vector<256x3xbf16>
    %41 = arith.truncf %39 : vector<3x16xf32> to vector<3x16xbf16>
    %cst_45 = arith.constant dense<0.000000e+00> : vector<256x16xf32>
    %42 = tpu.matmul %40, %41, %cst_45 {dimension_numbers = #tpu.dot_dimension_numbers<[1], [0], [0], [1], [0, 0, 1, 1], [], []>} : vector<256x3xbf16>, vector<3x16xbf16>, vector<256x16xf32> -> vector<256x16xf32>
    %43 = arith.addf %35, %42 : vector<256x16xf32>
    %c1_46 = arith.constant 1 : index
    %c1_47 = arith.constant 1 : index
    %c0_48 = arith.constant 0 : index
    %44 = vector.load %arg5[%c1_46, %c1_47, %c0_48] : memref<18x18x3xf32, #tpu.memory_space<vmem>>, vector<16x16x3xf32>
    %45 = vector.shape_cast %44 : vector<16x16x3xf32> to vector<256x3xf32>
    %c4 = arith.constant 4 : index
    %c0_49 = arith.constant 0 : index
    %c0_50 = arith.constant 0 : index
    %46 = vector.load %arg2[%c4, %c0_49, %c0_50] : memref<9x3x16xf32, #tpu.memory_space<vmem>>, vector<1x3x16xf32>
    %47 = vector.shape_cast %46 : vector<1x3x16xf32> to vector<3x16xf32>
    %48 = arith.truncf %45 : vector<256x3xf32> to vector<256x3xbf16>
    %49 = arith.truncf %47 : vector<3x16xf32> to vector<3x16xbf16>
    %cst_51 = arith.constant dense<0.000000e+00> : vector<256x16xf32>
    %50 = tpu.matmul %48, %49, %cst_51 {dimension_numbers = #tpu.dot_dimension_numbers<[1], [0], [0], [1], [0, 0, 1, 1], [], []>} : vector<256x3xbf16>, vector<3x16xbf16>, vector<256x16xf32> -> vector<256x16xf32>
    %51 = arith.addf %43, %50 : vector<256x16xf32>
    %c1_52 = arith.constant 1 : index
    %c2_53 = arith.constant 2 : index
    %c0_54 = arith.constant 0 : index
    %52 = vector.load %arg5[%c1_52, %c2_53, %c0_54] : memref<18x18x3xf32, #tpu.memory_space<vmem>>, vector<16x16x3xf32>
    %53 = vector.shape_cast %52 : vector<16x16x3xf32> to vector<256x3xf32>
    %c5 = arith.constant 5 : index
    %c0_55 = arith.constant 0 : index
    %c0_56 = arith.constant 0 : index
    %54 = vector.load %arg2[%c5, %c0_55, %c0_56] : memref<9x3x16xf32, #tpu.memory_space<vmem>>, vector<1x3x16xf32>
    %55 = vector.shape_cast %54 : vector<1x3x16xf32> to vector<3x16xf32>
    %56 = arith.truncf %53 : vector<256x3xf32> to vector<256x3xbf16>
    %57 = arith.truncf %55 : vector<3x16xf32> to vector<3x16xbf16>
    %cst_57 = arith.constant dense<0.000000e+00> : vector<256x16xf32>
    %58 = tpu.matmul %56, %57, %cst_57 {dimension_numbers = #tpu.dot_dimension_numbers<[1], [0], [0], [1], [0, 0, 1, 1], [], []>} : vector<256x3xbf16>, vector<3x16xbf16>, vector<256x16xf32> -> vector<256x16xf32>
    %59 = arith.addf %51, %58 : vector<256x16xf32>
    %c2_58 = arith.constant 2 : index
    %c0_59 = arith.constant 0 : index
    %c0_60 = arith.constant 0 : index
    %60 = vector.load %arg5[%c2_58, %c0_59, %c0_60] : memref<18x18x3xf32, #tpu.memory_space<vmem>>, vector<16x16x3xf32>
    %61 = vector.shape_cast %60 : vector<16x16x3xf32> to vector<256x3xf32>
    %c6 = arith.constant 6 : index
    %c0_61 = arith.constant 0 : index
    %c0_62 = arith.constant 0 : index
    %62 = vector.load %arg2[%c6, %c0_61, %c0_62] : memref<9x3x16xf32, #tpu.memory_space<vmem>>, vector<1x3x16xf32>
    %63 = vector.shape_cast %62 : vector<1x3x16xf32> to vector<3x16xf32>
    %64 = arith.truncf %61 : vector<256x3xf32> to vector<256x3xbf16>
    %65 = arith.truncf %63 : vector<3x16xf32> to vector<3x16xbf16>
    %cst_63 = arith.constant dense<0.000000e+00> : vector<256x16xf32>
    %66 = tpu.matmul %64, %65, %cst_63 {dimension_numbers = #tpu.dot_dimension_numbers<[1], [0], [0], [1], [0, 0, 1, 1], [], []>} : vector<256x3xbf16>, vector<3x16xbf16>, vector<256x16xf32> -> vector<256x16xf32>
    %67 = arith.addf %59, %66 : vector<256x16xf32>
    %c2_64 = arith.constant 2 : index
    %c1_65 = arith.constant 1 : index
    %c0_66 = arith.constant 0 : index
    %68 = vector.load %arg5[%c2_64, %c1_65, %c0_66] : memref<18x18x3xf32, #tpu.memory_space<vmem>>, vector<16x16x3xf32>
    %69 = vector.shape_cast %68 : vector<16x16x3xf32> to vector<256x3xf32>
    %c7 = arith.constant 7 : index
    %c0_67 = arith.constant 0 : index
    %c0_68 = arith.constant 0 : index
    %70 = vector.load %arg2[%c7, %c0_67, %c0_68] : memref<9x3x16xf32, #tpu.memory_space<vmem>>, vector<1x3x16xf32>
    %71 = vector.shape_cast %70 : vector<1x3x16xf32> to vector<3x16xf32>
    %72 = arith.truncf %69 : vector<256x3xf32> to vector<256x3xbf16>
    %73 = arith.truncf %71 : vector<3x16xf32> to vector<3x16xbf16>
    %cst_69 = arith.constant dense<0.000000e+00> : vector<256x16xf32>
    %74 = tpu.matmul %72, %73, %cst_69 {dimension_numbers = #tpu.dot_dimension_numbers<[1], [0], [0], [1], [0, 0, 1, 1], [], []>} : vector<256x3xbf16>, vector<3x16xbf16>, vector<256x16xf32> -> vector<256x16xf32>
    %75 = arith.addf %67, %74 : vector<256x16xf32>
    %c2_70 = arith.constant 2 : index
    %c2_71 = arith.constant 2 : index
    %c0_72 = arith.constant 0 : index
    %76 = vector.load %arg5[%c2_70, %c2_71, %c0_72] : memref<18x18x3xf32, #tpu.memory_space<vmem>>, vector<16x16x3xf32>
    %77 = vector.shape_cast %76 : vector<16x16x3xf32> to vector<256x3xf32>
    %c8 = arith.constant 8 : index
    %c0_73 = arith.constant 0 : index
    %c0_74 = arith.constant 0 : index
    %78 = vector.load %arg2[%c8, %c0_73, %c0_74] : memref<9x3x16xf32, #tpu.memory_space<vmem>>, vector<1x3x16xf32>
    %79 = vector.shape_cast %78 : vector<1x3x16xf32> to vector<3x16xf32>
    %80 = arith.truncf %77 : vector<256x3xf32> to vector<256x3xbf16>
    %81 = arith.truncf %79 : vector<3x16xf32> to vector<3x16xbf16>
    %cst_75 = arith.constant dense<0.000000e+00> : vector<256x16xf32>
    %82 = tpu.matmul %80, %81, %cst_75 {dimension_numbers = #tpu.dot_dimension_numbers<[1], [0], [0], [1], [0, 0, 1, 1], [], []>} : vector<256x3xbf16>, vector<3x16xbf16>, vector<256x16xf32> -> vector<256x16xf32>
    %83 = arith.addf %75, %82 : vector<256x16xf32>
    %c0_76 = arith.constant 0 : index
    %c0_77 = arith.constant 0 : index
    %84 = vector.load %arg3[%c0_76, %c0_77] : memref<1x16xf32, #tpu.memory_space<vmem>>, vector<1x16xf32>
    %85 = vector.broadcast %84 : vector<1x16xf32> to vector<256x16xf32>
    %86 = arith.addf %83, %85 : vector<256x16xf32>
    %87 = vector.shape_cast %86 : vector<256x16xf32> to vector<1x16x16x16xf32>
    %c0_78 = arith.constant 0 : index
    %c0_79 = arith.constant 0 : index
    %c0_80 = arith.constant 0 : index
    %c0_81 = arith.constant 0 : index
    %88 = vector.load %arg4[%c0_78, %c0_79, %c0_80, %c0_81] : memref<1x16x16x16xf32, #tpu.memory_space<vmem>>, vector<1x16x16x16xf32>
    tpu.vector_store %arg4[%c0_78, %c0_79, %c0_80, %c0_81], %87 {strides = array<i32>} : memref<1x16x16x16xf32, #tpu.memory_space<vmem>>, vector<1x16x16x16xf32>,
    return
  }
  func.func @transform_0(%arg0: i32) -> (i32, i32, i32, i32) {
    %c0_i32 = arith.constant 0 : i32
    %c0_i32_0 = arith.constant 0 : i32
    %c0_i32_1 = arith.constant 0 : i32
    %c0_i32_2 = arith.constant 0 : i32
    return %arg0, %c0_i32, %c0_i32_0, %c0_i32_1 : i32, i32, i32, i32
  }
  func.func @transform_1(%arg0: i32) -> (i32, i32, i32) {
    %c0_i32 = arith.constant 0 : i32
    %c0_i32_0 = arith.constant 0 : i32
    %c0_i32_1 = arith.constant 0 : i32
    %c0_i32_2 = arith.constant 0 : i32
    return %c0_i32, %c0_i32_0, %c0_i32_1 : i32, i32, i32
  }
  func.func @transform_2(%arg0: i32) -> (i32, i32) {
    %c0_i32 = arith.constant 0 : i32
    %c0_i32_0 = arith.constant 0 : i32
    %c0_i32_1 = arith.constant 0 : i32
    return %c0_i32, %c0_i32_0 : i32, i32
  }
  func.func @transform_3(%arg0: i32) -> (i32, i32, i32, i32) {
    %c0_i32 = arith.constant 0 : i32
    %c0_i32_0 = arith.constant 0 : i32
    %c0_i32_1 = arith.constant 0 : i32
    %c0_i32_2 = arith.constant 0 : i32
    return %arg0, %c0_i32, %c0_i32_0, %c0_i32_1 : i32, i32, i32, i32
  }
}

</mosaic_0001>

<llo_original>
// kernel: tpu_custom_call.1
$region0: #{tpu_custom_call.1}
  #allocation0 [shape = 'u32[]', space=smem, size = 0x4, offset = 0x4, fixed_abs, tag = 'smem constant byte address 0x4 - core index']
  #allocation1 [shape = 'u32[144,128]{1,0:T(1,128)}', space=vmem, size = 0x12000, scoped, tag = 'internal scratch']
  #allocation2 [shape = 'f32[18,18,3]{2,1,0:T(8,128)}', space=vmem, size = 0x36000, scoped, tag = 'scratch operand']
  %s0 = inlined_call_operand.vmem [shape: f32[8,16,16,3], index: 0, kind: input, shape index: {}]
  %s1 = inlined_call_operand.vmem [shape: f32[9,3,16], index: 1, kind: input, shape index: {}]
  %s2 = inlined_call_operand.vmem [shape: f32[1,16], index: 2, kind: input, shape index: {}]
  %s3 = inlined_call_operand.hbm [shape: f32[8,16,16,16], index: 3, kind: output, shape index: {}]
  %s4 = sld [smem:[#allocation0]]
  $region45: #{tpu_custom_call.1} parent=0
    _
  %s6 = ssub.s32 1, %s4
  %s7 = scalar_select 0, %s6, %s4
  $region1: #{tpu_custom_call.1} parent=0
    #allocation3 [shape = 'u8[262144]{0}', space=vmem, size = 0x40000, scoped, tag = 'output window, operand 0']
    #allocation4 [shape = 's32[2]{0}', space=sflag, size = 0x8, scoped, tag = 'scoped memory for tpu_custom_call.1']
    %8 = vsyncpa [#allocation4], 0
    %s9 = scalar_lea.sflag [#allocation4], 1
    %10 = vsyncpa %s9, 0
    loop: start=0, step=1, limit=10
    $region2: #{tpu_custom_call.1} parent=1 // loop_pre_header
      _
    $region3: #{tpu_custom_call.1} parent=1 // loop_header
      %s12 = sphi 0, %s16
      %p13 = scmp.ge.s32.totalorder %s12, 10
      %s22 = sphi 0, %s24
      %s25 = sphi 0, %s22
      %s26 = sphi 0, %s25
      %s42 = sphi 0, %s26
      %s46 = sphi 0, %s46
      %s48 = sphi 0, %s46
      %s49 = sphi 0, %s48
      %s63 = sphi 0, %s49
      %s67 = sphi 0, %s67
      %s69 = sphi 0, %s67
      %s70 = sphi 0, %s69
      %s84 = sphi 0, %s70
      %s90 = sphi 0, %s92
      %s93 = sphi 0, %s90
      %s94 = sphi 0, %s93
      %s110 = sphi 0, %s94
    $region4: #{tpu_custom_call.1} parent=1 // loop_header_branch
      %15 = sbr.rel (%p13) target = $region8
    $region5: #{tpu_custom_call.1} parent=1 // loop_body
      %s17 = ssub.s32 %s12, 1
      %s18 = ssub.s32 %s12, 2
      %s19 = sadd.s32 %s12, 1
      %s20 = ssub.s32 %s12, %s19
      %p21 = scmp.eq.s32.totalorder %s20, 0
      %s23 = sadd.s32 %s22, 1
      %s24 = scalar_select %p21, %s22, %s23
      %p27 = pneg %p21
      %p28 = scmp.eq.s32.totalorder %s12, 7
      %p29 = por %p27, %p28
      %p30 = scmp.ne.s32.totalorder %s22, %s25
      %p31 = scmp.eq.s32.totalorder %s12, 0
      %p32 = por %p30, %p31
      %p33 = scmp.ne.s32.totalorder %s22, %s25
      %p34 = scmp.eq.s32.totalorder %s17, 7
      %p35 = por %p33, %p34
      %p36 = scmp.ne.s32.totalorder %s25, %s26
      %p37 = scmp.eq.s32.totalorder %s17, 0
      %p38 = por %p36, %p37
      %p39 = scmp.ne.s32.totalorder %s25, %s26
      %p40 = scmp.eq.s32.totalorder %s18, 7
      %p41 = por %p39, %p40
      %p43 = scmp.ne.s32.totalorder %s26, %s42
      %p44 = scmp.eq.s32.totalorder %s18, 0
      %p45 = por %p43, %p44
      %s47 = sadd.s32 %s46, 1
      %p50 = scmp.eq.s32.totalorder %s12, 7
      %p51 = scmp.ne.s32.totalorder %s46, %s48
      %p52 = scmp.eq.s32.totalorder %s12, 0
      %p53 = por %p51, %p52
      %p54 = scmp.ne.s32.totalorder %s46, %s48
      %p55 = scmp.eq.s32.totalorder %s17, 7
      %p56 = por %p54, %p55
      %p57 = scmp.ne.s32.totalorder %s48, %s49
      %p58 = scmp.eq.s32.totalorder %s17, 0
      %p59 = por %p57, %p58
      %p60 = scmp.ne.s32.totalorder %s48, %s49
      %p61 = scmp.eq.s32.totalorder %s18, 7
      %p62 = por %p60, %p61
      %p64 = scmp.ne.s32.totalorder %s49, %s63
      %p65 = scmp.eq.s32.totalorder %s18, 0
      %p66 = por %p64, %p65
      %s68 = sadd.s32 %s67, 1
      %p71 = scmp.eq.s32.totalorder %s12, 7
      %p72 = scmp.ne.s32.totalorder %s67, %s69
      %p73 = scmp.eq.s32.totalorder %s12, 0
      %p74 = por %p72, %p73
      %p75 = scmp.ne.s32.totalorder %s67, %s69
      %p76 = scmp.eq.s32.totalorder %s17, 7
      %p77 = por %p75, %p76
      %p78 = scmp.ne.s32.totalorder %s69, %s70
      %p79 = scmp.eq.s32.totalorder %s17, 0
      %p80 = por %p78, %p79
      %p81 = scmp.ne.s32.totalorder %s69, %s70
      %p82 = scmp.eq.s32.totalorder %s18, 7
      %p83 = por %p81, %p82
      %p85 = scmp.ne.s32.totalorder %s70, %s84
      %p86 = scmp.eq.s32.totalorder %s18, 0
      %p87 = por %p85, %p86
      %s88 = ssub.s32 %s12, %s19
      %p89 = scmp.eq.s32.totalorder %s88, 0
      %s91 = sadd.s32 %s90, 1
      %s92 = scalar_select %p89, %s90, %s91
      %p95 = pneg %p89
      %p96 = scmp.eq.s32.totalorder %s12, 7
      %p97 = por %p95, %p96
      %p98 = scmp.ne.s32.totalorder %s90, %s93
      %p99 = scmp.eq.s32.totalorder %s12, 0
      %p100 = por %p98, %p99
      %p101 = scmp.ne.s32.totalorder %s90, %s93
      %p102 = scmp.eq.s32.totalorder %s17, 7
      %p103 = por %p101, %p102
      %p104 = scmp.ne.s32.totalorder %s93, %s94
      %p105 = scmp.eq.s32.totalorder %s17, 0
      %p106 = por %p104, %p105
      %p107 = scmp.ne.s32.totalorder %s93, %s94
      %p108 = scmp.eq.s32.totalorder %s18, 7
      %p109 = por %p107, %p108
      %p111 = scmp.ne.s32.totalorder %s94, %s110
      %p112 = scmp.eq.s32.totalorder %s18, 0
      %p113 = por %p111, %p112
      %p114 = scmp.le.s32.totalorder 1, %s12
      %p115 = scmp.lt.s32.totalorder %s12, 9
      %p116 = pnand %p114, %p115
      %p117 = pneg %p116
      // Predicated region
      $region9: #{tpu_custom_call.1} parent=5 // pred_check
        _
      $region10: #{tpu_custom_call.1} parent=5 // pred_check_branch
        %119 = sbr.rel (%p116) target = $region12
      $region11: #{tpu_custom_call.1} parent=5 // pred_region
        %s120 = ssub.s32 %s12, 1
        // Predicated region
        $region13: #{tpu_custom_call.1} parent=11 // pred_check
          %p121 = pneg %p59
        $region14: #{tpu_custom_call.1} parent=11 // pred_check_branch
          %123 = sbr.rel (%p121) target = $region16
        $region15: #{tpu_custom_call.1} parent=11 // pred_region
          _
        $region16: #{tpu_custom_call.1} parent=11 // pred_fallthru
          _
        // Predicated region
        $region17: #{tpu_custom_call.1} parent=11 // pred_check
          %p124 = pneg %p80
        $region18: #{tpu_custom_call.1} parent=11 // pred_check_branch
          %126 = sbr.rel (%p124) target = $region20
        $region19: #{tpu_custom_call.1} parent=11 // pred_region
          _
        $region20: #{tpu_custom_call.1} parent=11 // pred_fallthru
          _
      $region12: #{tpu_custom_call.1} parent=5 // pred_fallthru
        _
      %p127 = scmp.lt.s32.totalorder %s12, 8
      // Predicated region
      $region21: #{tpu_custom_call.1} parent=5 // pred_check
        %p128 = pneg %p127
      $region22: #{tpu_custom_call.1} parent=5 // pred_check_branch
        %130 = sbr.rel (%p128) target = $region24
      $region23: #{tpu_custom_call.1} parent=5 // pred_region
        // Predicated region
        $region25: #{tpu_custom_call.1} parent=23 // pred_check
          %p131 = pneg %p32
        $region26: #{tpu_custom_call.1} parent=23 // pred_check_branch
          %133 = sbr.rel (%p131) target = $region28
        $region27: #{tpu_custom_call.1} parent=23 // pred_region
          %p134 = scmp.lt.s32.totalorder %s12, 7
          %s135 = scalar_select %p134, %s12, 7
          %s136 = smul.addr %s135, 32
          %s137 = smul.addr %s136, 8
          %s138 = scalar_lea.vmem %s0, %s137
        $region28: #{tpu_custom_call.1} parent=23 // pred_fallthru
          _
      $region24: #{tpu_custom_call.1} parent=5 // pred_fallthru
        _
      %p139 = scmp.le.s32.totalorder 1, %s12
      %p140 = scmp.lt.s32.totalorder %s12, 9
      %p141 = pnand %p139, %p140
      %p142 = pneg %p141
      // Predicated region
      $region29: #{tpu_custom_call.1} parent=5 // pred_check
        _
      $region30: #{tpu_custom_call.1} parent=5 // pred_check_branch
        %144 = sbr.rel (%p141) target = $region32
      $region31: #{tpu_custom_call.1} parent=5 // pred_region
        %s145 = ssub.s32 %s12, 1
        %p146 = scmp.lt.s32.totalorder %s17, 7
        %s147 = scalar_select %p146, %s17, 7
        %s148 = smul.addr %s147, 32
        %s149 = smul.addr %s148, 8
        %s150 = scalar_lea.vmem %s0, %s149
        %p151 = pneg %p38
        %p152 = pneg %p35
        %p153 = pneg %p59
        %p154 = pneg %p56
        %p155 = pneg %p80
        %p156 = pneg %p77
        %p157 = pneg %p106
        %p158 = pneg %p103
        %s159 = sand.u32 %s93, 1
        %s160 = scalar_lea.sflag [#allocation4], %s159
        %s161 = sand.u32 %s93, 1
        %s162 = smul.addr %s161, 256
        %s163 = scalar_lea.vmem [#allocation3], %s162
        %p164 = scmp.lt.s32.totalorder %s17, 7
        %s165 = scalar_select %p164, %s17, 7
        %s166 = smul.addr %s165, 32
        %s167 = smul.addr %s166, 8
        %s168 = scalar_lea.vmem %s0, %s167
        %vm170 = vcmask 23552
        %171 = vst.msk [vmem:[#allocation2] sm:$0xff] %vm170, 0.0
        %172 = vst.msk [vmem:[#allocation2 + $0x8] sm:$0xff] %vm170, 0.0
        %vm173 = vcmask 17408
        %174 = vst.msk [vmem:[#allocation2 + $0x10] sm:$0x3] %vm173, 0.0
        %s175 = scalar_lea.vmem [#allocation2], 408
        %176 = vst.msk [vmem:[%s175] sm:$0xff] %vm170, 0.0
        %177 = vst.msk [vmem:[%s175 + $0x8] sm:$0xff] %vm170, 0.0
        %178 = vst.msk [vmem:[%s175 + $0x10] sm:$0x3] %vm173, 0.0
        %vm179 = vcmask 16384
        %180 = vst.msk [vmem:[#allocation2] sm:$0x1] %vm179, 0.0
        %181 = vst.msk [vmem:[#allocation2 + $0x18] sm:$0x1] %vm179, 0.0
        %182 = vst.msk [vmem:[#allocation2 + $0x30] sm:$0x1] %vm179, 0.0
        %183 = vst.msk [vmem:[#allocation2 + $0x48] sm:$0x1] %vm179, 0.0
        %184 = vst.msk [vmem:[#allocation2 + $0x60] sm:$0x1] %vm179, 0.0
        %185 = vst.msk [vmem:[#allocation2 + $0x78] sm:$0x1] %vm179, 0.0
        %186 = vst.msk [vmem:[#allocation2 + $0x90] sm:$0x1] %vm179, 0.0
        %187 = vst.msk [vmem:[#allocation2 + $0xa8] sm:$0x1] %vm179, 0.0
        %188 = vst.msk [vmem:[#allocation2 + $0xc0] sm:$0x1] %vm179, 0.0
        %189 = vst.msk [vmem:[#allocation2 + $0xd8] sm:$0x1] %vm179, 0.0
        %190 = vst.msk [vmem:[#allocation2 + $0xf0] sm:$0x1] %vm179, 0.0
        %191 = vst.msk [vmem:[#allocation2 + $0x108] sm:$0x1] %vm179, 0.0
        %192 = vst.msk [vmem:[#allocation2 + $0x120] sm:$0x1] %vm179, 0.0
        %193 = vst.msk [vmem:[#allocation2 + $0x138] sm:$0x1] %vm179, 0.0
        %194 = vst.msk [vmem:[#allocation2 + $0x150] sm:$0x1] %vm179, 0.0
        %195 = vst.msk [vmem:[#allocation2 + $0x168] sm:$0x1] %vm179, 0.0
        %196 = vst.msk [vmem:[#allocation2 + $0x180] sm:$0x1] %vm179, 0.0
        %197 = vst.msk [vmem:[#allocation2 + $0x198] sm:$0x1] %vm179, 0.0
        %198 = vst.msk [vmem:[#allocation2 + $0x11] sm:$0x1] %vm179, 0.0
        %199 = vst.msk [vmem:[#allocation2 + $0x29] sm:$0x1] %vm179, 0.0
        %200 = vst.msk [vmem:[#allocation2 + $0x41] sm:$0x1] %vm179, 0.0
        %201 = vst.msk [vmem:[#allocation2 + $0x59] sm:$0x1] %vm179, 0.0
        %202 = vst.msk [vmem:[#allocation2 + $0x71] sm:$0x1] %vm179, 0.0
        %203 = vst.msk [vmem:[#allocation2 + $0x89] sm:$0x1] %vm179, 0.0
        %204 = vst.msk [vmem:[#allocation2 + $0xa1] sm:$0x1] %vm179, 0.0
        %205 = vst.msk [vmem:[#allocation2 + $0xb9] sm:$0x1] %vm179, 0.0
        %206 = vst.msk [vmem:[#allocation2 + $0xd1] sm:$0x1] %vm179, 0.0
        %207 = vst.msk [vmem:[#allocation2 + $0xe9] sm:$0x1] %vm179, 0.0
        %208 = vst.msk [vmem:[#allocation2 + $0x101] sm:$0x1] %vm179, 0.0
        %209 = vst.msk [vmem:[#allocation2 + $0x119] sm:$0x1] %vm179, 0.0
        %210 = vst.msk [vmem:[#allocation2 + $0x131] sm:$0x1] %vm179, 0.0
        %211 = vst.msk [vmem:[#allocation2 + $0x149] sm:$0x1] %vm179, 0.0
        %212 = vst.msk [vmem:[#allocation2 + $0x161] sm:$0x1] %vm179, 0.0
        %213 = vst.msk [vmem:[#allocation2 + $0x179] sm:$0x1] %vm179, 0.0
        %214 = vst.msk [vmem:[#allocation2 + $0x191] sm:$0x1] %vm179, 0.0
        %215 = vst.msk [vmem:[#allocation2 + $0x1a9] sm:$0x1] %vm179, 0.0
        %v216 = vld [vmem:[%s168] sm:$0xff]
        %v217 = vld [vmem:[%s168 + $0x8] sm:$0xff]
        %v218 = vld [vmem:[%s168 + $0x10] sm:$0xff]
        %v219 = vld [vmem:[%s168 + $0x18] sm:$0xff]
        %v220 = vld [vmem:[%s168 + $0x20] sm:$0xff]
        %v221 = vld [vmem:[%s168 + $0x28] sm:$0xff]
        %v222 = vld [vmem:[%s168 + $0x30] sm:$0xff]
        %v223 = vld [vmem:[%s168 + $0x38] sm:$0xff]
        %v224 = vld [vmem:[%s168 + $0x40] sm:$0xff]
        %v225 = vld [vmem:[%s168 + $0x48] sm:$0xff]
        %v226 = vld [vmem:[%s168 + $0x50] sm:$0xff]
        %v227 = vld [vmem:[%s168 + $0x58] sm:$0xff]
        %v228 = vld [vmem:[%s168 + $0x60] sm:$0xff]
        %v229 = vld [vmem:[%s168 + $0x68] sm:$0xff]
        %v230 = vld [vmem:[%s168 + $0x70] sm:$0xff]
        %v231 = vld [vmem:[%s168 + $0x78] sm:$0xff]
        %v232 = vld [vmem:[%s168 + $0x80] sm:$0xff]
        %v233 = vld [vmem:[%s168 + $0x88] sm:$0xff]
        %v234 = vld [vmem:[%s168 + $0x90] sm:$0xff]
        %v235 = vld [vmem:[%s168 + $0x98] sm:$0xff]
        %v236 = vld [vmem:[%s168 + $0xa0] sm:$0xff]
        %v237 = vld [vmem:[%s168 + $0xa8] sm:$0xff]
        %v238 = vld [vmem:[%s168 + $0xb0] sm:$0xff]
        %v239 = vld [vmem:[%s168 + $0xb8] sm:$0xff]
        %v240 = vld [vmem:[%s168 + $0xc0] sm:$0xff]
        %v241 = vld [vmem:[%s168 + $0xc8] sm:$0xff]
        %v242 = vld [vmem:[%s168 + $0xd0] sm:$0xff]
        %v243 = vld [vmem:[%s168 + $0xd8] sm:$0xff]
        %v244 = vld [vmem:[%s168 + $0xe0] sm:$0xff]
        %v245 = vld [vmem:[%s168 + $0xe8] sm:$0xff]
        %v246 = vld [vmem:[%s168 + $0xf0] sm:$0xff]
        %v247 = vld [vmem:[%s168 + $0xf8] sm:$0xff]
        %s248 = scalar_lea.vmem [#allocation2], 24
        %249 = vst.msk [vmem:[%s248 + $0x1] sm:$0xff] %vm170, %v216
        %250 = vst.msk [vmem:[%s248 + $0x9] sm:$0xff] %vm170, %v217
        %251 = vst.msk [vmem:[%s248 + $0x19] sm:$0xff] %vm170, %v218
        %252 = vst.msk [vmem:[%s248 + $0x21] sm:$0xff] %vm170, %v219
        %253 = vst.msk [vmem:[%s248 + $0x31] sm:$0xff] %vm170, %v220
        %254 = vst.msk [vmem:[%s248 + $0x39] sm:$0xff] %vm170, %v221
        %255 = vst.msk [vmem:[%s248 + $0x49] sm:$0xff] %vm170, %v222
        %256 = vst.msk [vmem:[%s248 + $0x51] sm:$0xff] %vm170, %v223
        %257 = vst.msk [vmem:[%s248 + $0x61] sm:$0xff] %vm170, %v224
        %258 = vst.msk [vmem:[%s248 + $0x69] sm:$0xff] %vm170, %v225
        %259 = vst.msk [vmem:[%s248 + $0x79] sm:$0xff] %vm170, %v226
        %260 = vst.msk [vmem:[%s248 + $0x81] sm:$0xff] %vm170, %v227
        %261 = vst.msk [vmem:[%s248 + $0x91] sm:$0xff] %vm170, %v228
        %262 = vst.msk [vmem:[%s248 + $0x99] sm:$0xff] %vm170, %v229
        %263 = vst.msk [vmem:[%s248 + $0xa9] sm:$0xff] %vm170, %v230
        %264 = vst.msk [vmem:[%s248 + $0xb1] sm:$0xff] %vm170, %v231
        %265 = vst.msk [vmem:[%s248 + $0xc1] sm:$0xff] %vm170, %v232
        %266 = vst.msk [vmem:[%s248 + $0xc9] sm:$0xff] %vm170, %v233
        %267 = vst.msk [vmem:[%s248 + $0xd9] sm:$0xff] %vm170, %v234
        %268 = vst.msk [vmem:[%s248 + $0xe1] sm:$0xff] %vm170, %v235
        %269 = vst.msk [vmem:[%s248 + $0xf1] sm:$0xff] %vm170, %v236
        %270 = vst.msk [vmem:[%s248 + $0xf9] sm:$0xff] %vm170, %v237
        %271 = vst.msk [vmem:[%s248 + $0x109] sm:$0xff] %vm170, %v238
        %272 = vst.msk [vmem:[%s248 + $0x111] sm:$0xff] %vm170, %v239
        %273 = vst.msk [vmem:[%s248 + $0x121] sm:$0xff] %vm170, %v240
        %274 = vst.msk [vmem:[%s248 + $0x129] sm:$0xff] %vm170, %v241
        %275 = vst.msk [vmem:[%s248 + $0x139] sm:$0xff] %vm170, %v242
        %276 = vst.msk [vmem:[%s248 + $0x141] sm:$0xff] %vm170, %v243
        %277 = vst.msk [vmem:[%s248 + $0x151] sm:$0xff] %vm170, %v244
        %278 = vst.msk [vmem:[%s248 + $0x159] sm:$0xff] %vm170, %v245
        %279 = vst.msk [vmem:[%s248 + $0x169] sm:$0xff] %vm170, %v246
        %280 = vst.msk [vmem:[%s248 + $0x171] sm:$0xff] %vm170, %v247
        %v281 = vld [vmem:[#allocation2] sm:$0xff]
        %v282 = vld [vmem:[#allocation2 + $0x8] sm:$0xff]
        %v283 = vld [vmem:[#allocation2 + $0x18] sm:$0xff]
        %v284 = vld [vmem:[#allocation2 + $0x20] sm:$0xff]
        %v285 = vld [vmem:[#allocation2 + $0x30] sm:$0xff]
        %v286 = vld [vmem:[#allocation2 + $0x38] sm:$0xff]
        %v287 = vld [vmem:[#allocation2 + $0x48] sm:$0xff]
        %v288 = vld [vmem:[#allocation2 + $0x50] sm:$0xff]
        %v289 = vld [vmem:[#allocation2 + $0x60] sm:$0xff]
        %v290 = vld [vmem:[#allocation2 + $0x68] sm:$0xff]
        %v291 = vld [vmem:[#allocation2 + $0x78] sm:$0xff]
        %v292 = vld [vmem:[#allocation2 + $0x80] sm:$0xff]
        %v293 = vld [vmem:[#allocation2 + $0x90] sm:$0xff]
        %v294 = vld [vmem:[#allocation2 + $0x98] sm:$0xff]
        %v295 = vld [vmem:[#allocation2 + $0xa8] sm:$0xff]
        %v296 = vld [vmem:[#allocation2 + $0xb0] sm:$0xff]
        %v297 = vld [vmem:[#allocation2 + $0xc0] sm:$0xff]
        %v298 = vld [vmem:[#allocation2 + $0xc8] sm:$0xff]
        %v299 = vld [vmem:[#allocation2 + $0xd8] sm:$0xff]
        %v300 = vld [vmem:[#allocation2 + $0xe0] sm:$0xff]
        %v301 = vld [vmem:[#allocation2 + $0xf0] sm:$0xff]
        %v302 = vld [vmem:[#allocation2 + $0xf8] sm:$0xff]
        %v303 = vld [vmem:[#allocation2 + $0x108] sm:$0xff]
        %v304 = vld [vmem:[#allocation2 + $0x110] sm:$0xff]
        %v305 = vld [vmem:[#allocation2 + $0x120] sm:$0xff]
        %v306 = vld [vmem:[#allocation2 + $0x128] sm:$0xff]
        %v307 = vld [vmem:[#allocation2 + $0x138] sm:$0xff]
        %v308 = vld [vmem:[#allocation2 + $0x140] sm:$0xff]
        %v309 = vld [vmem:[#allocation2 + $0x150] sm:$0xff]
        %v310 = vld [vmem:[#allocation2 + $0x158] sm:$0xff]
        %v311 = vld [vmem:[#allocation2 + $0x168] sm:$0xff]
        %v312 = vld [vmem:[#allocation2 + $0x170] sm:$0xff]
        %v313 = vld [vmem:[%s1] sm:$0x7]
        %v314 = vpack.c.bf16 %v282, %v281
        %v315 = vpack.c.bf16 %v284, %v283
        %v316 = vpack.c.bf16 %v286, %v285
        %v317 = vpack.c.bf16 %v288, %v287
        %v318 = vpack.c.bf16 %v290, %v289
        %v319 = vpack.c.bf16 %v292, %v291
        %v320 = vpack.c.bf16 %v294, %v293
        %v321 = vpack.c.bf16 %v296, %v295
        %v322 = vpack.c.bf16 %v298, %v297
        %v323 = vpack.c.bf16 %v300, %v299
        %v324 = vpack.c.bf16 %v302, %v301
        %v325 = vpack.c.bf16 %v304, %v303
        %v326 = vpack.c.bf16 %v306, %v305
        %v327 = vpack.c.bf16 %v308, %v307
        %v328 = vpack.c.bf16 %v310, %v309
        %v329 = vpack.c.bf16 %v312, %v311
        %v330 = vpack.c.bf16 %v313, %v313
        %v331 = vld [vmem:[#allocation2 + $0x1] sm:$0xff]
        %v332 = vld [vmem:[#allocation2 + $0x9] sm:$0xff]
        %v333 = vld [vmem:[#allocation2 + $0x19] sm:$0xff]
        %v334 = vld [vmem:[#allocation2 + $0x21] sm:$0xff]
        %v335 = vld [vmem:[#allocation2 + $0x31] sm:$0xff]
        %v336 = vld [vmem:[#allocation2 + $0x39] sm:$0xff]
        %v337 = vld [vmem:[#allocation2 + $0x49] sm:$0xff]
        %v338 = vld [vmem:[#allocation2 + $0x51] sm:$0xff]
        %v339 = vld [vmem:[#allocation2 + $0x61] sm:$0xff]
        %v340 = vld [vmem:[#allocation2 + $0x69] sm:$0xff]
        %v341 = vld [vmem:[#allocation2 + $0x79] sm:$0xff]
        %v342 = vld [vmem:[#allocation2 + $0x81] sm:$0xff]
        %v343 = vld [vmem:[#allocation2 + $0x91] sm:$0xff]
        %v344 = vld [vmem:[#allocation2 + $0x99] sm:$0xff]
        %v345 = vld [vmem:[#allocation2 + $0xa9] sm:$0xff]
        %v346 = vld [vmem:[#allocation2 + $0xb1] sm:$0xff]
        %v347 = vld [vmem:[#allocation2 + $0xc1] sm:$0xff]
        %v348 = vld [vmem:[#allocation2 + $0xc9] sm:$0xff]
        %v349 = vld [vmem:[#allocation2 + $0xd9] sm:$0xff]
        %v350 = vld [vmem:[#allocation2 + $0xe1] sm:$0xff]
        %v351 = vld [vmem:[#allocation2 + $0xf1] sm:$0xff]
        %v352 = vld [vmem:[#allocation2 + $0xf9] sm:$0xff]
        %v353 = vld [vmem:[#allocation2 + $0x109] sm:$0xff]
        %v354 = vld [vmem:[#allocation2 + $0x111] sm:$0xff]
        %v355 = vld [vmem:[#allocation2 + $0x121] sm:$0xff]
        %v356 = vld [vmem:[#allocation2 + $0x129] sm:$0xff]
        %v357 = vld [vmem:[#allocation2 + $0x139] sm:$0xff]
        %v358 = vld [vmem:[#allocation2 + $0x141] sm:$0xff]
        %v359 = vld [vmem:[#allocation2 + $0x151] sm:$0xff]
        %v360 = vld [vmem:[#allocation2 + $0x159] sm:$0xff]
        %v361 = vld [vmem:[#allocation2 + $0x169] sm:$0xff]
        %v362 = vld [vmem:[#allocation2 + $0x171] sm:$0xff]
        %s363 = scalar_lea.vmem %s1, 4
        %v364 = vld [vmem:[%s363] sm:$0x7]
        %v365 = vpack.c.bf16 %v332, %v331
        %v366 = vpack.c.bf16 %v334, %v333
        %v367 = vpack.c.bf16 %v336, %v335
        %v368 = vpack.c.bf16 %v338, %v337
        %v369 = vpack.c.bf16 %v340, %v339
        %v370 = vpack.c.bf16 %v342, %v341
        %v371 = vpack.c.bf16 %v344, %v343
        %v372 = vpack.c.bf16 %v346, %v345
        %v373 = vpack.c.bf16 %v348, %v347
        %v374 = vpack.c.bf16 %v350, %v349
        %v375 = vpack.c.bf16 %v352, %v351
        %v376 = vpack.c.bf16 %v354, %v353
        %v377 = vpack.c.bf16 %v356, %v355
        %v378 = vpack.c.bf16 %v358, %v357
        %v379 = vpack.c.bf16 %v360, %v359
        %v380 = vpack.c.bf16 %v362, %v361
        %v381 = vpack.c.bf16 %v364, %v364
        %v383 = vsel %vm170, %v365, 0
        %v386 = vsel %vm170, %v366, 0
        %v389 = vsel %vm170, %v367, 0
        %v392 = vsel %vm170, %v368, 0
        %v395 = vsel %vm170, %v369, 0
        %v398 = vsel %vm170, %v370, 0
        %v401 = vsel %vm170, %v371, 0
        %v404 = vsel %vm170, %v372, 0
        %v407 = vsel %vm170, %v373, 0
        %v410 = vsel %vm170, %v374, 0
        %v413 = vsel %vm170, %v375, 0
        %v416 = vsel %vm170, %v376, 0
        %v419 = vsel %vm170, %v377, 0
        %v422 = vsel %vm170, %v378, 0
        %v425 = vsel %vm170, %v379, 0
        %v428 = vsel %vm170, %v380, 0
        %vm430 = vcmask 1040384
        %vm431 = vcmask 1041408
        %v432 = vsel %vm430, 4294967295, 65535
        %v433 = vsel %vm431, %v432, 0
        %v435 = vand.u32 %v381, %v433
        %437 = vmatprep.subr.bf16.mxu0 0
        %438 = vmatpush1.bf16.msra.mxu0 0
        %439 = vmatprep.subr.bf16.mxu0 0
        %440 = vmatpush1.bf16.msra.mxu0 0
        %441 = vmatprep.subr.bf16.mxu0 0
        %442 = vmatpush1.bf16.msra.mxu0 0
        %443 = vmatprep.subr.bf16.mxu0 0
        %444 = vmatpush1.bf16.msra.mxu0 0
        %445 = vmatprep.subr.bf16.mxu0 0
        %446 = vmatpush1.bf16.msra.mxu0 0
        %447 = vmatprep.subr.bf16.mxu0 0
        %448 = vmatpush1.bf16.msra.mxu0 0
        %449 = vmatprep.subr.bf16.mxu0 0
        %450 = vmatpush1.bf16.msra.mxu0 0
        %451 = vmatprep.subr.bf16.mxu0 0
        %452 = vmatpush1.bf16.msra.mxu0 %v435
        %453 = vmatprep.subr.bf16.mxu0 0
        %454 = vmatpush2.bf16.msra.mxu0 0
        %455 = vmatprep.subr.bf16.mxu0 0
        %456 = vmatpush2.bf16.msra.mxu0 0
        %457 = vmatprep.subr.bf16.mxu0 0
        %458 = vmatpush2.bf16.msra.mxu0 0
        %459 = vmatprep.subr.bf16.mxu0 0
        %460 = vmatpush2.bf16.msra.mxu0 0
        %461 = vmatprep.subr.bf16.mxu0 0
        %462 = vmatpush2.bf16.msra.mxu0 0
        %463 = vmatprep.subr.bf16.mxu0 0
        %464 = vmatpush2.bf16.msra.mxu0 0
        %465 = vmatprep.subr.bf16.mxu0 0
        %466 = vmatpush2.bf16.msra.mxu0 0
        %467 = vmatprep.subr.bf16.mxu0 0
        %468 = vmatpush2.bf16.msra.mxu0 0
        %469 = vmatprep.mubr.bf16.mxu0 0
        %470 = vmatmul.mubr.bf16.gmra.mxu0 %v383
        %v471 = vpop.f32.mrf.mxu0
        %v472 = vadd.f32 0.0, %v471
        %v473 = vpop.f32.mrf.mxu0
        %v474 = vpop.f32.mrf.mxu0
        %v475 = vadd.f32 0.0, %v474
        %v476 = vpop.f32.mrf.mxu0
        %477 = vmatprep.mubr.bf16.mxu0 0
        %478 = vmatmul.mubr.bf16.gmra.mxu0 %v386
        %v479 = vpop.f32.mrf.mxu0
        %v480 = vadd.f32 0.0, %v479
        %v481 = vpop.f32.mrf.mxu0
        %v482 = vpop.f32.mrf.mxu0
        %v483 = vadd.f32 0.0, %v482
        %v484 = vpop.f32.mrf.mxu0
        %485 = vmatprep.mubr.bf16.mxu0 0
        %486 = vmatmul.mubr.bf16.gmra.mxu0 %v389
        %v487 = vpop.f32.mrf.mxu0
        %v488 = vadd.f32 0.0, %v487
        %v489 = vpop.f32.mrf.mxu0
        %v490 = vpop.f32.mrf.mxu0
        %v491 = vadd.f32 0.0, %v490
        %v492 = vpop.f32.mrf.mxu0
        %493 = vmatprep.mubr.bf16.mxu0 0
        %494 = vmatmul.mubr.bf16.gmra.mxu0 %v392
        %v495 = vpop.f32.mrf.mxu0
        %v496 = vadd.f32 0.0, %v495
        %v497 = vpop.f32.mrf.mxu0
        %v498 = vpop.f32.mrf.mxu0
        %v499 = vadd.f32 0.0, %v498
        %v500 = vpop.f32.mrf.mxu0
        %501 = vmatprep.mubr.bf16.mxu0 0
        %502 = vmatmul.mubr.bf16.gmra.mxu0 %v395
        %v503 = vpop.f32.mrf.mxu0
        %v504 = vadd.f32 0.0, %v503
        %v505 = vpop.f32.mrf.mxu0
        %v506 = vpop.f32.mrf.mxu0
        %v507 = vadd.f32 0.0, %v506
        %v508 = vpop.f32.mrf.mxu0
        %509 = vmatprep.mubr.bf16.mxu0 0
        %510 = vmatmul.mubr.bf16.gmra.mxu0 %v398
        %v511 = vpop.f32.mrf.mxu0
        %v512 = vadd.f32 0.0, %v511
        %v513 = vpop.f32.mrf.mxu0
        %v514 = vpop.f32.mrf.mxu0
        %v515 = vadd.f32 0.0, %v514
        %v516 = vpop.f32.mrf.mxu0
        %517 = vmatprep.mubr.bf16.mxu0 0
        %518 = vmatmul.mubr.bf16.gmra.mxu0 %v401
        %v519 = vpop.f32.mrf.mxu0
        %v520 = vadd.f32 0.0, %v519
        %v521 = vpop.f32.mrf.mxu0
        %v522 = vpop.f32.mrf.mxu0
        %v523 = vadd.f32 0.0, %v522
        %v524 = vpop.f32.mrf.mxu0
        %525 = vmatprep.mubr.bf16.mxu0 0
        %526 = vmatmul.mubr.bf16.gmra.mxu0 %v404
        %v527 = vpop.f32.mrf.mxu0
        %v528 = vadd.f32 0.0, %v527
        %v529 = vpop.f32.mrf.mxu0
        %v530 = vpop.f32.mrf.mxu0
        %v531 = vadd.f32 0.0, %v530
        %v532 = vpop.f32.mrf.mxu0
        %533 = vmatprep.mubr.bf16.mxu0 0
        %534 = vmatmul.mubr.bf16.gmra.mxu0 %v407
        %v535 = vpop.f32.mrf.mxu0
        %v536 = vadd.f32 0.0, %v535
        %v537 = vpop.f32.mrf.mxu0
        %v538 = vpop.f32.mrf.mxu0
        %v539 = vadd.f32 0.0, %v538
        %v540 = vpop.f32.mrf.mxu0
        %541 = vmatprep.mubr.bf16.mxu0 0
        %542 = vmatmul.mubr.bf16.gmra.mxu0 %v410
        %v543 = vpop.f32.mrf.mxu0
        %v544 = vadd.f32 0.0, %v543
        %v545 = vpop.f32.mrf.mxu0
        %v546 = vpop.f32.mrf.mxu0
        %v547 = vadd.f32 0.0, %v546
        %v548 = vpop.f32.mrf.mxu0
        %549 = vmatprep.mubr.bf16.mxu0 0
        %550 = vmatmul.mubr.bf16.gmra.mxu0 %v413
        %v551 = vpop.f32.mrf.mxu0
        %v552 = vadd.f32 0.0, %v551
        %v553 = vpop.f32.mrf.mxu0
        %v554 = vpop.f32.mrf.mxu0
        %v555 = vadd.f32 0.0, %v554
        %v556 = vpop.f32.mrf.mxu0
        %557 = vmatprep.mubr.bf16.mxu0 0
        %558 = vmatmul.mubr.bf16.gmra.mxu0 %v416
        %v559 = vpop.f32.mrf.mxu0
        %v560 = vadd.f32 0.0, %v559
        %v561 = vpop.f32.mrf.mxu0
        %v562 = vpop.f32.mrf.mxu0
        %v563 = vadd.f32 0.0, %v562
        %v564 = vpop.f32.mrf.mxu0
        %565 = vmatprep.mubr.bf16.mxu0 0
        %566 = vmatmul.mubr.bf16.gmra.mxu0 %v419
        %v567 = vpop.f32.mrf.mxu0
        %v568 = vadd.f32 0.0, %v567
        %v569 = vpop.f32.mrf.mxu0
        %v570 = vpop.f32.mrf.mxu0
        %v571 = vadd.f32 0.0, %v570
        %v572 = vpop.f32.mrf.mxu0
        %573 = vmatprep.mubr.bf16.mxu0 0
        %574 = vmatmul.mubr.bf16.gmra.mxu0 %v422
        %v575 = vpop.f32.mrf.mxu0
        %v576 = vadd.f32 0.0, %v575
        %v577 = vpop.f32.mrf.mxu0
        %v578 = vpop.f32.mrf.mxu0
        %v579 = vadd.f32 0.0, %v578
        %v580 = vpop.f32.mrf.mxu0
        %581 = vmatprep.mubr.bf16.mxu0 0
        %582 = vmatmul.mubr.bf16.gmra.mxu0 %v425
        %v583 = vpop.f32.mrf.mxu0
        %v584 = vadd.f32 0.0, %v583
        %v585 = vpop.f32.mrf.mxu0
        %v586 = vpop.f32.mrf.mxu0
        %v587 = vadd.f32 0.0, %v586
        %v588 = vpop.f32.mrf.mxu0
        %589 = vmatprep.mubr.bf16.mxu0 0
        %590 = vmatmul.mubr.bf16.gmra.mxu0 %v428
        %v591 = vpop.f32.mrf.mxu0
        %v592 = vadd.f32 0.0, %v591
        %v593 = vpop.f32.mrf.mxu0
        %v594 = vpop.f32.mrf.mxu0
        %v595 = vadd.f32 0.0, %v594
        %v596 = vpop.f32.mrf.mxu0
        %597 = vdwg.mxu0
        %v599 = vsel %vm170, %v314, 0
        %v602 = vsel %vm170, %v315, 0
        %v605 = vsel %vm170, %v316, 0
        %v608 = vsel %vm170, %v317, 0
        %v611 = vsel %vm170, %v318, 0
        %v614 = vsel %vm170, %v319, 0
        %v617 = vsel %vm170, %v320, 0
        %v620 = vsel %vm170, %v321, 0
        %v623 = vsel %vm170, %v322, 0
        %v626 = vsel %vm170, %v323, 0
        %v629 = vsel %vm170, %v324, 0
        %v632 = vsel %vm170, %v325, 0
        %v635 = vsel %vm170, %v326, 0
        %v638 = vsel %vm170, %v327, 0
        %v641 = vsel %vm170, %v328, 0
        %v644 = vsel %vm170, %v329, 0
        %v647 = vand.u32 %v330, %v433
        %649 = vmatprep.subr.bf16.mxu0 0
        %650 = vmatpush1.bf16.msra.mxu0 0
        %651 = vmatprep.subr.bf16.mxu0 0
        %652 = vmatpush1.bf16.msra.mxu0 0
        %653 = vmatprep.subr.bf16.mxu0 0
        %654 = vmatpush1.bf16.msra.mxu0 0
        %655 = vmatprep.subr.bf16.mxu0 0
        %656 = vmatpush1.bf16.msra.mxu0 0
        %657 = vmatprep.subr.bf16.mxu0 0
        %658 = vmatpush1.bf16.msra.mxu0 0
        %659 = vmatprep.subr.bf16.mxu0 0
        %660 = vmatpush1.bf16.msra.mxu0 0
        %661 = vmatprep.subr.bf16.mxu0 0
        %662 = vmatpush1.bf16.msra.mxu0 0
        %663 = vmatprep.subr.bf16.mxu0 0
        %664 = vmatpush1.bf16.msra.mxu0 %v647
        %665 = vmatprep.subr.bf16.mxu0 0
        %666 = vmatpush2.bf16.msra.mxu0 0
        %667 = vmatprep.subr.bf16.mxu0 0
        %668 = vmatpush2.bf16.msra.mxu0 0
        %669 = vmatprep.subr.bf16.mxu0 0
        %670 = vmatpush2.bf16.msra.mxu0 0
        %671 = vmatprep.subr.bf16.mxu0 0
        %672 = vmatpush2.bf16.msra.mxu0 0
        %673 = vmatprep.subr.bf16.mxu0 0
        %674 = vmatpush2.bf16.msra.mxu0 0
        %675 = vmatprep.subr.bf16.mxu0 0
        %676 = vmatpush2.bf16.msra.mxu0 0
        %677 = vmatprep.subr.bf16.mxu0 0
        %678 = vmatpush2.bf16.msra.mxu0 0
        %679 = vmatprep.subr.bf16.mxu0 0
        %680 = vmatpush2.bf16.msra.mxu0 0
        %681 = vmatprep.mubr.bf16.mxu0 0
        %682 = vmatmul.mubr.bf16.gmra.mxu0 %v599
        %v683 = vpop.f32.mrf.mxu0
        %v684 = vadd.f32 %v472, %v683
        %v685 = vpop.f32.mrf.mxu0
        %v686 = vpop.f32.mrf.mxu0
        %v687 = vadd.f32 %v475, %v686
        %v688 = vpop.f32.mrf.mxu0
        %689 = vmatprep.mubr.bf16.mxu0 0
        %690 = vmatmul.mubr.bf16.gmra.mxu0 %v602
        %v691 = vpop.f32.mrf.mxu0
        %v692 = vadd.f32 %v480, %v691
        %v693 = vpop.f32.mrf.mxu0
        %v694 = vpop.f32.mrf.mxu0
        %v695 = vadd.f32 %v483, %v694
        %v696 = vpop.f32.mrf.mxu0
        %697 = vmatprep.mubr.bf16.mxu0 0
        %698 = vmatmul.mubr.bf16.gmra.mxu0 %v605
        %v699 = vpop.f32.mrf.mxu0
        %v700 = vadd.f32 %v488, %v699
        %v701 = vpop.f32.mrf.mxu0
        %v702 = vpop.f32.mrf.mxu0
        %v703 = vadd.f32 %v491, %v702
        %v704 = vpop.f32.mrf.mxu0
        %705 = vmatprep.mubr.bf16.mxu0 0
        %706 = vmatmul.mubr.bf16.gmra.mxu0 %v608
        %v707 = vpop.f32.mrf.mxu0
        %v708 = vadd.f32 %v496, %v707
        %v709 = vpop.f32.mrf.mxu0
        %v710 = vpop.f32.mrf.mxu0
        %v711 = vadd.f32 %v499, %v710
        %v712 = vpop.f32.mrf.mxu0
        %713 = vmatprep.mubr.bf16.mxu0 0
        %714 = vmatmul.mubr.bf16.gmra.mxu0 %v611
        %v715 = vpop.f32.mrf.mxu0
        %v716 = vadd.f32 %v504, %v715
        %v717 = vpop.f32.mrf.mxu0
        %v718 = vpop.f32.mrf.mxu0
        %v719 = vadd.f32 %v507, %v718
        %v720 = vpop.f32.mrf.mxu0
        %721 = vmatprep.mubr.bf16.mxu0 0
        %722 = vmatmul.mubr.bf16.gmra.mxu0 %v614
        %v723 = vpop.f32.mrf.mxu0
        %v724 = vadd.f32 %v512, %v723
        %v725 = vpop.f32.mrf.mxu0
        %v726 = vpop.f32.mrf.mxu0
        %v727 = vadd.f32 %v515, %v726
        %v728 = vpop.f32.mrf.mxu0
        %729 = vmatprep.mubr.bf16.mxu0 0
        %730 = vmatmul.mubr.bf16.gmra.mxu0 %v617
        %v731 = vpop.f32.mrf.mxu0
        %v732 = vadd.f32 %v520, %v731
        %v733 = vpop.f32.mrf.mxu0
        %v734 = vpop.f32.mrf.mxu0
        %v735 = vadd.f32 %v523, %v734
        %v736 = vpop.f32.mrf.mxu0
        %737 = vmatprep.mubr.bf16.mxu0 0
        %738 = vmatmul.mubr.bf16.gmra.mxu0 %v620
        %v739 = vpop.f32.mrf.mxu0
        %v740 = vadd.f32 %v528, %v739
        %v741 = vpop.f32.mrf.mxu0
        %v742 = vpop.f32.mrf.mxu0
        %v743 = vadd.f32 %v531, %v742
        %v744 = vpop.f32.mrf.mxu0
        %745 = vmatprep.mubr.bf16.mxu0 0
        %746 = vmatmul.mubr.bf16.gmra.mxu0 %v623
        %v747 = vpop.f32.mrf.mxu0
        %v748 = vadd.f32 %v536, %v747
        %v749 = vpop.f32.mrf.mxu0
        %v750 = vpop.f32.mrf.mxu0
        %v751 = vadd.f32 %v539, %v750
        %v752 = vpop.f32.mrf.mxu0
        %753 = vmatprep.mubr.bf16.mxu0 0
        %754 = vmatmul.mubr.bf16.gmra.mxu0 %v626
        %v755 = vpop.f32.mrf.mxu0
        %v756 = vadd.f32 %v544, %v755
        %v757 = vpop.f32.mrf.mxu0
        %v758 = vpop.f32.mrf.mxu0
        %v759 = vadd.f32 %v547, %v758
        %v760 = vpop.f32.mrf.mxu0
        %761 = vmatprep.mubr.bf16.mxu0 0
        %762 = vmatmul.mubr.bf16.gmra.mxu0 %v629
        %v763 = vpop.f32.mrf.mxu0
        %v764 = vadd.f32 %v552, %v763
        %v765 = vpop.f32.mrf.mxu0
        %v766 = vpop.f32.mrf.mxu0
        %v767 = vadd.f32 %v555, %v766
        %v768 = vpop.f32.mrf.mxu0
        %769 = vmatprep.mubr.bf16.mxu0 0
        %770 = vmatmul.mubr.bf16.gmra.mxu0 %v632
        %v771 = vpop.f32.mrf.mxu0
        %v772 = vadd.f32 %v560, %v771
        %v773 = vpop.f32.mrf.mxu0
        %v774 = vpop.f32.mrf.mxu0
        %v775 = vadd.f32 %v563, %v774
        %v776 = vpop.f32.mrf.mxu0
        %777 = vmatprep.mubr.bf16.mxu0 0
        %778 = vmatmul.mubr.bf16.gmra.mxu0 %v635
        %v779 = vpop.f32.mrf.mxu0
        %v780 = vadd.f32 %v568, %v779
        %v781 = vpop.f32.mrf.mxu0
        %v782 = vpop.f32.mrf.mxu0
        %v783 = vadd.f32 %v571, %v782
        %v784 = vpop.f32.mrf.mxu0
        %785 = vmatprep.mubr.bf16.mxu0 0
        %786 = vmatmul.mubr.bf16.gmra.mxu0 %v638
        %v787 = vpop.f32.mrf.mxu0
        %v788 = vadd.f32 %v576, %v787
        %v789 = vpop.f32.mrf.mxu0
        %v790 = vpop.f32.mrf.mxu0
        %v791 = vadd.f32 %v579, %v790
        %v792 = vpop.f32.mrf.mxu0
        %793 = vmatprep.mubr.bf16.mxu0 0
        %794 = vmatmul.mubr.bf16.gmra.mxu0 %v641
        %v795 = vpop.f32.mrf.mxu0
        %v796 = vadd.f32 %v584, %v795
        %v797 = vpop.f32.mrf.mxu0
        %v798 = vpop.f32.mrf.mxu0
        %v799 = vadd.f32 %v587, %v798
        %v800 = vpop.f32.mrf.mxu0
        %801 = vmatprep.mubr.bf16.mxu0 0
        %802 = vmatmul.mubr.bf16.gmra.mxu0 %v644
        %v803 = vpop.f32.mrf.mxu0
        %v804 = vadd.f32 %v592, %v803
        %v805 = vpop.f32.mrf.mxu0
        %v806 = vpop.f32.mrf.mxu0
        %v807 = vadd.f32 %v595, %v806
        %v808 = vpop.f32.mrf.mxu0
        %809 = vdwg.mxu0
        %v810 = vld [vmem:[#allocation2 + $0x2] sm:$0xff]
        %v811 = vld [vmem:[#allocation2 + $0xa] sm:$0xff]
        %v812 = vld [vmem:[#allocation2 + $0x1a] sm:$0xff]
        %v813 = vld [vmem:[#allocation2 + $0x22] sm:$0xff]
        %v814 = vld [vmem:[#allocation2 + $0x32] sm:$0xff]
        %v815 = vld [vmem:[#allocation2 + $0x3a] sm:$0xff]
        %v816 = vld [vmem:[#allocation2 + $0x4a] sm:$0xff]
        %v817 = vld [vmem:[#allocation2 + $0x52] sm:$0xff]
        %v818 = vld [vmem:[#allocation2 + $0x62] sm:$0xff]
        %v819 = vld [vmem:[#allocation2 + $0x6a] sm:$0xff]
        %v820 = vld [vmem:[#allocation2 + $0x7a] sm:$0xff]
        %v821 = vld [vmem:[#allocation2 + $0x82] sm:$0xff]
        %v822 = vld [vmem:[#allocation2 + $0x92] sm:$0xff]
        %v823 = vld [vmem:[#allocation2 + $0x9a] sm:$0xff]
        %v824 = vld [vmem:[#allocation2 + $0xaa] sm:$0xff]
        %v825 = vld [vmem:[#allocation2 + $0xb2] sm:$0xff]
        %v826 = vld [vmem:[#allocation2 + $0xc2] sm:$0xff]
        %v827 = vld [vmem:[#allocation2 + $0xca] sm:$0xff]
        %v828 = vld [vmem:[#allocation2 + $0xda] sm:$0xff]
        %v829 = vld [vmem:[#allocation2 + $0xe2] sm:$0xff]
        %v830 = vld [vmem:[#allocation2 + $0xf2] sm:$0xff]
        %v831 = vld [vmem:[#allocation2 + $0xfa] sm:$0xff]
        %v832 = vld [vmem:[#allocation2 + $0x10a] sm:$0xff]
        %v833 = vld [vmem:[#allocation2 + $0x112] sm:$0xff]
        %v834 = vld [vmem:[#allocation2 + $0x122] sm:$0xff]
        %v835 = vld [vmem:[#allocation2 + $0x12a] sm:$0xff]
        %v836 = vld [vmem:[#allocation2 + $0x13a] sm:$0xff]
        %v837 = vld [vmem:[#allocation2 + $0x142] sm:$0xff]
        %v838 = vld [vmem:[#allocation2 + $0x152] sm:$0xff]
        %v839 = vld [vmem:[#allocation2 + $0x15a] sm:$0xff]
        %v840 = vld [vmem:[#allocation2 + $0x16a] sm:$0xff]
        %v841 = vld [vmem:[#allocation2 + $0x172] sm:$0xff]
        %s842 = scalar_lea.vmem %s1, 8
        %v843 = vld [vmem:[%s842] sm:$0x7]
        %v844 = vpack.c.bf16 %v811, %v810
        %v845 = vpack.c.bf16 %v813, %v812
        %v846 = vpack.c.bf16 %v815, %v814
        %v847 = vpack.c.bf16 %v817, %v816
        %v848 = vpack.c.bf16 %v819, %v818
        %v849 = vpack.c.bf16 %v821, %v820
        %v850 = vpack.c.bf16 %v823, %v822
        %v851 = vpack.c.bf16 %v825, %v824
        %v852 = vpack.c.bf16 %v827, %v826
        %v853 = vpack.c.bf16 %v829, %v828
        %v854 = vpack.c.bf16 %v831, %v830
        %v855 = vpack.c.bf16 %v833, %v832
        %v856 = vpack.c.bf16 %v835, %v834
        %v857 = vpack.c.bf16 %v837, %v836
        %v858 = vpack.c.bf16 %v839, %v838
        %v859 = vpack.c.bf16 %v841, %v840
        %v860 = vpack.c.bf16 %v843, %v843
        %v862 = vsel %vm170, %v844, 0
        %v865 = vsel %vm170, %v845, 0
        %v868 = vsel %vm170, %v846, 0
        %v871 = vsel %vm170, %v847, 0
        %v874 = vsel %vm170, %v848, 0
        %v877 = vsel %vm170, %v849, 0
        %v880 = vsel %vm170, %v850, 0
        %v883 = vsel %vm170, %v851, 0
        %v886 = vsel %vm170, %v852, 0
        %v889 = vsel %vm170, %v853, 0
        %v892 = vsel %vm170, %v854, 0
        %v895 = vsel %vm170, %v855, 0
        %v898 = vsel %vm170, %v856, 0
        %v901 = vsel %vm170, %v857, 0
        %v904 = vsel %vm170, %v858, 0
        %v907 = vsel %vm170, %v859, 0
        %v910 = vand.u32 %v860, %v433
        %912 = vmatprep.subr.bf16.mxu0 0
        %913 = vmatpush1.bf16.msra.mxu0 0
        %914 = vmatprep.subr.bf16.mxu0 0
        %915 = vmatpush1.bf16.msra.mxu0 0
        %916 = vmatprep.subr.bf16.mxu0 0
        %917 = vmatpush1.bf16.msra.mxu0 0
        %918 = vmatprep.subr.bf16.mxu0 0
        %919 = vmatpush1.bf16.msra.mxu0 0
        %920 = vmatprep.subr.bf16.mxu0 0
        %921 = vmatpush1.bf16.msra.mxu0 0
        %922 = vmatprep.subr.bf16.mxu0 0
        %923 = vmatpush1.bf16.msra.mxu0 0
        %924 = vmatprep.subr.bf16.mxu0 0
        %925 = vmatpush1.bf16.msra.mxu0 0
        %926 = vmatprep.subr.bf16.mxu0 0
        %927 = vmatpush1.bf16.msra.mxu0 %v910
        %928 = vmatprep.subr.bf16.mxu0 0
        %929 = vmatpush2.bf16.msra.mxu0 0
        %930 = vmatprep.subr.bf16.mxu0 0
        %931 = vmatpush2.bf16.msra.mxu0 0
        %932 = vmatprep.subr.bf16.mxu0 0
        %933 = vmatpush2.bf16.msra.mxu0 0
        %934 = vmatprep.subr.bf16.mxu0 0
        %935 = vmatpush2.bf16.msra.mxu0 0
        %936 = vmatprep.subr.bf16.mxu0 0
        %937 = vmatpush2.bf16.msra.mxu0 0
        %938 = vmatprep.subr.bf16.mxu0 0
        %939 = vmatpush2.bf16.msra.mxu0 0
        %940 = vmatprep.subr.bf16.mxu0 0
        %941 = vmatpush2.bf16.msra.mxu0 0
        %942 = vmatprep.subr.bf16.mxu0 0
        %943 = vmatpush2.bf16.msra.mxu0 0
        %944 = vmatprep.mubr.bf16.mxu0 0
        %945 = vmatmul.mubr.bf16.gmra.mxu0 %v862
        %v946 = vpop.f32.mrf.mxu0
        %v947 = vadd.f32 0.0, %v946
        %v948 = vpop.f32.mrf.mxu0
        %v949 = vpop.f32.mrf.mxu0
        %v950 = vadd.f32 0.0, %v949
        %v951 = vpop.f32.mrf.mxu0
        %952 = vmatprep.mubr.bf16.mxu0 0
        %953 = vmatmul.mubr.bf16.gmra.mxu0 %v865
        %v954 = vpop.f32.mrf.mxu0
        %v955 = vadd.f32 0.0, %v954
        %v956 = vpop.f32.mrf.mxu0
        %v957 = vpop.f32.mrf.mxu0
        %v958 = vadd.f32 0.0, %v957
        %v959 = vpop.f32.mrf.mxu0
        %960 = vmatprep.mubr.bf16.mxu0 0
        %961 = vmatmul.mubr.bf16.gmra.mxu0 %v868
        %v962 = vpop.f32.mrf.mxu0
        %v963 = vadd.f32 0.0, %v962
        %v964 = vpop.f32.mrf.mxu0
        %v965 = vpop.f32.mrf.mxu0
        %v966 = vadd.f32 0.0, %v965
        %v967 = vpop.f32.mrf.mxu0
        %968 = vmatprep.mubr.bf16.mxu0 0
        %969 = vmatmul.mubr.bf16.gmra.mxu0 %v871
        %v970 = vpop.f32.mrf.mxu0
        %v971 = vadd.f32 0.0, %v970
        %v972 = vpop.f32.mrf.mxu0
        %v973 = vpop.f32.mrf.mxu0
        %v974 = vadd.f32 0.0, %v973
        %v975 = vpop.f32.mrf.mxu0
        %976 = vmatprep.mubr.bf16.mxu0 0
        %977 = vmatmul.mubr.bf16.gmra.mxu0 %v874
        %v978 = vpop.f32.mrf.mxu0
        %v979 = vadd.f32 0.0, %v978
        %v980 = vpop.f32.mrf.mxu0
        %v981 = vpop.f32.mrf.mxu0
        %v982 = vadd.f32 0.0, %v981
        %v983 = vpop.f32.mrf.mxu0
        %984 = vmatprep.mubr.bf16.mxu0 0
        %985 = vmatmul.mubr.bf16.gmra.mxu0 %v877
        %v986 = vpop.f32.mrf.mxu0
        %v987 = vadd.f32 0.0, %v986
        %v988 = vpop.f32.mrf.mxu0
        %v989 = vpop.f32.mrf.mxu0
        %v990 = vadd.f32 0.0, %v989
        %v991 = vpop.f32.mrf.mxu0
        %992 = vmatprep.mubr.bf16.mxu0 0
        %993 = vmatmul.mubr.bf16.gmra.mxu0 %v880
        %v994 = vpop.f32.mrf.mxu0
        %v995 = vadd.f32 0.0, %v994
        %v996 = vpop.f32.mrf.mxu0
        %v997 = vpop.f32.mrf.mxu0
        %v998 = vadd.f32 0.0, %v997
        %v999 = vpop.f32.mrf.mxu0
        %1000 = vmatprep.mubr.bf16.mxu0 0
        %1001 = vmatmul.mubr.bf16.gmra.mxu0 %v883
        %v1002 = vpop.f32.mrf.mxu0
        %v1003 = vadd.f32 0.0, %v1002
        %v1004 = vpop.f32.mrf.mxu0
        %v1005 = vpop.f32.mrf.mxu0
        %v1006 = vadd.f32 0.0, %v1005
        %v1007 = vpop.f32.mrf.mxu0
        %1008 = vmatprep.mubr.bf16.mxu0 0
        %1009 = vmatmul.mubr.bf16.gmra.mxu0 %v886
        %v1010 = vpop.f32.mrf.mxu0
        %v1011 = vadd.f32 0.0, %v1010
        %v1012 = vpop.f32.mrf.mxu0
        %v1013 = vpop.f32.mrf.mxu0
        %v1014 = vadd.f32 0.0, %v1013
        %v1015 = vpop.f32.mrf.mxu0
        %1016 = vmatprep.mubr.bf16.mxu0 0
        %1017 = vmatmul.mubr.bf16.gmra.mxu0 %v889
        %v1018 = vpop.f32.mrf.mxu0
        %v1019 = vadd.f32 0.0, %v1018
        %v1020 = vpop.f32.mrf.mxu0
        %v1021 = vpop.f32.mrf.mxu0
        %v1022 = vadd.f32 0.0, %v1021
        %v1023 = vpop.f32.mrf.mxu0
        %1024 = vmatprep.mubr.bf16.mxu0 0
        %1025 = vmatmul.mubr.bf16.gmra.mxu0 %v892
        %v1026 = vpop.f32.mrf.mxu0
        %v1027 = vadd.f32 0.0, %v1026
        %v1028 = vpop.f32.mrf.mxu0
        %v1029 = vpop.f32.mrf.mxu0
        %v1030 = vadd.f32 0.0, %v1029
        %v1031 = vpop.f32.mrf.mxu0
        %1032 = vmatprep.mubr.bf16.mxu0 0
        %1033 = vmatmul.mubr.bf16.gmra.mxu0 %v895
        %v1034 = vpop.f32.mrf.mxu0
        %v1035 = vadd.f32 0.0, %v1034
        %v1036 = vpop.f32.mrf.mxu0
        %v1037 = vpop.f32.mrf.mxu0
        %v1038 = vadd.f32 0.0, %v1037
        %v1039 = vpop.f32.mrf.mxu0
        %1040 = vmatprep.mubr.bf16.mxu0 0
        %1041 = vmatmul.mubr.bf16.gmra.mxu0 %v898
        %v1042 = vpop.f32.mrf.mxu0
        %v1043 = vadd.f32 0.0, %v1042
        %v1044 = vpop.f32.mrf.mxu0
        %v1045 = vpop.f32.mrf.mxu0
        %v1046 = vadd.f32 0.0, %v1045
        %v1047 = vpop.f32.mrf.mxu0
        %1048 = vmatprep.mubr.bf16.mxu0 0
        %1049 = vmatmul.mubr.bf16.gmra.mxu0 %v901
        %v1050 = vpop.f32.mrf.mxu0
        %v1051 = vadd.f32 0.0, %v1050
        %v1052 = vpop.f32.mrf.mxu0
        %v1053 = vpop.f32.mrf.mxu0
        %v1054 = vadd.f32 0.0, %v1053
        %v1055 = vpop.f32.mrf.mxu0
        %1056 = vmatprep.mubr.bf16.mxu0 0
        %1057 = vmatmul.mubr.bf16.gmra.mxu0 %v904
        %v1058 = vpop.f32.mrf.mxu0
        %v1059 = vadd.f32 0.0, %v1058
        %v1060 = vpop.f32.mrf.mxu0
        %v1061 = vpop.f32.mrf.mxu0
        %v1062 = vadd.f32 0.0, %v1061
        %v1063 = vpop.f32.mrf.mxu0
        %1064 = vmatprep.mubr.bf16.mxu0 0
        %1065 = vmatmul.mubr.bf16.gmra.mxu0 %v907
        %v1066 = vpop.f32.mrf.mxu0
        %v1067 = vadd.f32 0.0, %v1066
        %v1068 = vpop.f32.mrf.mxu0
        %v1069 = vpop.f32.mrf.mxu0
        %v1070 = vadd.f32 0.0, %v1069
        %v1071 = vpop.f32.mrf.mxu0
        %1072 = vdwg.mxu0
        %v1073 = vadd.f32 %v684, %v947
        %v1074 = vadd.f32 %v687, %v950
        %v1075 = vadd.f32 %v692, %v955
        %v1076 = vadd.f32 %v695, %v958
        %v1077 = vadd.f32 %v700, %v963
        %v1078 = vadd.f32 %v703, %v966
        %v1079 = vadd.f32 %v708, %v971
        %v1080 = vadd.f32 %v711, %v974
        %v1081 = vadd.f32 %v716, %v979
        %v1082 = vadd.f32 %v719, %v982
        %v1083 = vadd.f32 %v724, %v987
        %v1084 = vadd.f32 %v727, %v990
        %v1085 = vadd.f32 %v732, %v995
        %v1086 = vadd.f32 %v735, %v998
        %v1087 = vadd.f32 %v740, %v1003
        %v1088 = vadd.f32 %v743, %v1006
        %v1089 = vadd.f32 %v748, %v1011
        %v1090 = vadd.f32 %v751, %v1014
        %v1091 = vadd.f32 %v756, %v1019
        %v1092 = vadd.f32 %v759, %v1022
        %v1093 = vadd.f32 %v764, %v1027
        %v1094 = vadd.f32 %v767, %v1030
        %v1095 = vadd.f32 %v772, %v1035
        %v1096 = vadd.f32 %v775, %v1038
        %v1097 = vadd.f32 %v780, %v1043
        %v1098 = vadd.f32 %v783, %v1046
        %v1099 = vadd.f32 %v788, %v1051
        %v1100 = vadd.f32 %v791, %v1054
        %v1101 = vadd.f32 %v796, %v1059
        %v1102 = vadd.f32 %v799, %v1062
        %v1103 = vadd.f32 %v804, %v1067
        %v1104 = vadd.f32 %v807, %v1070
        %v1105 = vld [vmem:[%s248] sm:$0xff]
        %v1106 = vld [vmem:[%s248 + $0x8] sm:$0xff]
        %v1107 = vld [vmem:[%s248 + $0x18] sm:$0xff]
        %v1108 = vld [vmem:[%s248 + $0x20] sm:$0xff]
        %v1109 = vld [vmem:[%s248 + $0x30] sm:$0xff]
        %v1110 = vld [vmem:[%s248 + $0x38] sm:$0xff]
        %v1111 = vld [vmem:[%s248 + $0x48] sm:$0xff]
        %v1112 = vld [vmem:[%s248 + $0x50] sm:$0xff]
        %v1113 = vld [vmem:[%s248 + $0x60] sm:$0xff]
        %v1114 = vld [vmem:[%s248 + $0x68] sm:$0xff]
        %v1115 = vld [vmem:[%s248 + $0x78] sm:$0xff]
        %v1116 = vld [vmem:[%s248 + $0x80] sm:$0xff]
        %v1117 = vld [vmem:[%s248 + $0x90] sm:$0xff]
        %v1118 = vld [vmem:[%s248 + $0x98] sm:$0xff]
        %v1119 = vld [vmem:[%s248 + $0xa8] sm:$0xff]
        %v1120 = vld [vmem:[%s248 + $0xb0] sm:$0xff]
        %v1121 = vld [vmem:[%s248 + $0xc0] sm:$0xff]
        %v1122 = vld [vmem:[%s248 + $0xc8] sm:$0xff]
        %v1123 = vld [vmem:[%s248 + $0xd8] sm:$0xff]
        %v1124 = vld [vmem:[%s248 + $0xe0] sm:$0xff]
        %v1125 = vld [vmem:[%s248 + $0xf0] sm:$0xff]
        %v1126 = vld [vmem:[%s248 + $0xf8] sm:$0xff]
        %v1127 = vld [vmem:[%s248 + $0x108] sm:$0xff]
        %v1128 = vld [vmem:[%s248 + $0x110] sm:$0xff]
        %v1129 = vld [vmem:[%s248 + $0x120] sm:$0xff]
        %v1130 = vld [vmem:[%s248 + $0x128] sm:$0xff]
        %v1131 = vld [vmem:[%s248 + $0x138] sm:$0xff]
        %v1132 = vld [vmem:[%s248 + $0x140] sm:$0xff]
        %v1133 = vld [vmem:[%s248 + $0x150] sm:$0xff]
        %v1134 = vld [vmem:[%s248 + $0x158] sm:$0xff]
        %v1135 = vld [vmem:[%s248 + $0x168] sm:$0xff]
        %v1136 = vld [vmem:[%s248 + $0x170] sm:$0xff]
        %s1137 = scalar_lea.vmem %s1, 12
        %v1138 = vld [vmem:[%s1137] sm:$0x7]
        %v1139 = vpack.c.bf16 %v1106, %v1105
        %v1140 = vpack.c.bf16 %v1108, %v1107
        %v1141 = vpack.c.bf16 %v1110, %v1109
        %v1142 = vpack.c.bf16 %v1112, %v1111
        %v1143 = vpack.c.bf16 %v1114, %v1113
        %v1144 = vpack.c.bf16 %v1116, %v1115
        %v1145 = vpack.c.bf16 %v1118, %v1117
        %v1146 = vpack.c.bf16 %v1120, %v1119
        %v1147 = vpack.c.bf16 %v1122, %v1121
        %v1148 = vpack.c.bf16 %v1124, %v1123
        %v1149 = vpack.c.bf16 %v1126, %v1125
        %v1150 = vpack.c.bf16 %v1128, %v1127
        %v1151 = vpack.c.bf16 %v1130, %v1129
        %v1152 = vpack.c.bf16 %v1132, %v1131
        %v1153 = vpack.c.bf16 %v1134, %v1133
        %v1154 = vpack.c.bf16 %v1136, %v1135
        %v1155 = vpack.c.bf16 %v1138, %v1138
        %v1157 = vsel %vm170, %v1139, 0
        %v1160 = vsel %vm170, %v1140, 0
        %v1163 = vsel %vm170, %v1141, 0
        %v1166 = vsel %vm170, %v1142, 0
        %v1169 = vsel %vm170, %v1143, 0
        %v1172 = vsel %vm170, %v1144, 0
        %v1175 = vsel %vm170, %v1145, 0
        %v1178 = vsel %vm170, %v1146, 0
        %v1181 = vsel %vm170, %v1147, 0
        %v1184 = vsel %vm170, %v1148, 0
        %v1187 = vsel %vm170, %v1149, 0
        %v1190 = vsel %vm170, %v1150, 0
        %v1193 = vsel %vm170, %v1151, 0
        %v1196 = vsel %vm170, %v1152, 0
        %v1199 = vsel %vm170, %v1153, 0
        %v1202 = vsel %vm170, %v1154, 0
        %v1205 = vand.u32 %v1155, %v433
        %1207 = vmatprep.subr.bf16.mxu0 0
        %1208 = vmatpush1.bf16.msra.mxu0 0
        %1209 = vmatprep.subr.bf16.mxu0 0
        %1210 = vmatpush1.bf16.msra.mxu0 0
        %1211 = vmatprep.subr.bf16.mxu0 0
        %1212 = vmatpush1.bf16.msra.mxu0 0
        %1213 = vmatprep.subr.bf16.mxu0 0
        %1214 = vmatpush1.bf16.msra.mxu0 0
        %1215 = vmatprep.subr.bf16.mxu0 0
        %1216 = vmatpush1.bf16.msra.mxu0 0
        %1217 = vmatprep.subr.bf16.mxu0 0
        %1218 = vmatpush1.bf16.msra.mxu0 0
        %1219 = vmatprep.subr.bf16.mxu0 0
        %1220 = vmatpush1.bf16.msra.mxu0 0
        %1221 = vmatprep.subr.bf16.mxu0 0
        %1222 = vmatpush1.bf16.msra.mxu0 %v1205
        %1223 = vmatprep.subr.bf16.mxu0 0
        %1224 = vmatpush2.bf16.msra.mxu0 0
        %1225 = vmatprep.subr.bf16.mxu0 0
        %1226 = vmatpush2.bf16.msra.mxu0 0
        %1227 = vmatprep.subr.bf16.mxu0 0
        %1228 = vmatpush2.bf16.msra.mxu0 0
        %1229 = vmatprep.subr.bf16.mxu0 0
        %1230 = vmatpush2.bf16.msra.mxu0 0
        %1231 = vmatprep.subr.bf16.mxu0 0
        %1232 = vmatpush2.bf16.msra.mxu0 0
        %1233 = vmatprep.subr.bf16.mxu0 0
        %1234 = vmatpush2.bf16.msra.mxu0 0
        %1235 = vmatprep.subr.bf16.mxu0 0
        %1236 = vmatpush2.bf16.msra.mxu0 0
        %1237 = vmatprep.subr.bf16.mxu0 0
        %1238 = vmatpush2.bf16.msra.mxu0 0
        %1239 = vmatprep.mubr.bf16.mxu0 0
        %1240 = vmatmul.mubr.bf16.gmra.mxu0 %v1157
        %v1241 = vpop.f32.mrf.mxu0
        %v1242 = vadd.f32 0.0, %v1241
        %v1243 = vpop.f32.mrf.mxu0
        %v1244 = vpop.f32.mrf.mxu0
        %v1245 = vadd.f32 0.0, %v1244
        %v1246 = vpop.f32.mrf.mxu0
        %1247 = vmatprep.mubr.bf16.mxu0 0
        %1248 = vmatmul.mubr.bf16.gmra.mxu0 %v1160
        %v1249 = vpop.f32.mrf.mxu0
        %v1250 = vadd.f32 0.0, %v1249
        %v1251 = vpop.f32.mrf.mxu0
        %v1252 = vpop.f32.mrf.mxu0
        %v1253 = vadd.f32 0.0, %v1252
        %v1254 = vpop.f32.mrf.mxu0
        %1255 = vmatprep.mubr.bf16.mxu0 0
        %1256 = vmatmul.mubr.bf16.gmra.mxu0 %v1163
        %v1257 = vpop.f32.mrf.mxu0
        %v1258 = vadd.f32 0.0, %v1257
        %v1259 = vpop.f32.mrf.mxu0
        %v1260 = vpop.f32.mrf.mxu0
        %v1261 = vadd.f32 0.0, %v1260
        %v1262 = vpop.f32.mrf.mxu0
        %1263 = vmatprep.mubr.bf16.mxu0 0
        %1264 = vmatmul.mubr.bf16.gmra.mxu0 %v1166
        %v1265 = vpop.f32.mrf.mxu0
        %v1266 = vadd.f32 0.0, %v1265
        %v1267 = vpop.f32.mrf.mxu0
        %v1268 = vpop.f32.mrf.mxu0
        %v1269 = vadd.f32 0.0, %v1268
        %v1270 = vpop.f32.mrf.mxu0
        %1271 = vmatprep.mubr.bf16.mxu0 0
        %1272 = vmatmul.mubr.bf16.gmra.mxu0 %v1169
        %v1273 = vpop.f32.mrf.mxu0
        %v1274 = vadd.f32 0.0, %v1273
        %v1275 = vpop.f32.mrf.mxu0
        %v1276 = vpop.f32.mrf.mxu0
        %v1277 = vadd.f32 0.0, %v1276
        %v1278 = vpop.f32.mrf.mxu0
        %1279 = vmatprep.mubr.bf16.mxu0 0
        %1280 = vmatmul.mubr.bf16.gmra.mxu0 %v1172
        %v1281 = vpop.f32.mrf.mxu0
        %v1282 = vadd.f32 0.0, %v1281
        %v1283 = vpop.f32.mrf.mxu0
        %v1284 = vpop.f32.mrf.mxu0
        %v1285 = vadd.f32 0.0, %v1284
        %v1286 = vpop.f32.mrf.mxu0
        %1287 = vmatprep.mubr.bf16.mxu0 0
        %1288 = vmatmul.mubr.bf16.gmra.mxu0 %v1175
        %v1289 = vpop.f32.mrf.mxu0
        %v1290 = vadd.f32 0.0, %v1289
        %v1291 = vpop.f32.mrf.mxu0
        %v1292 = vpop.f32.mrf.mxu0
        %v1293 = vadd.f32 0.0, %v1292
        %v1294 = vpop.f32.mrf.mxu0
        %1295 = vmatprep.mubr.bf16.mxu0 0
        %1296 = vmatmul.mubr.bf16.gmra.mxu0 %v1178
        %v1297 = vpop.f32.mrf.mxu0
        %v1298 = vadd.f32 0.0, %v1297
        %v1299 = vpop.f32.mrf.mxu0
        %v1300 = vpop.f32.mrf.mxu0
        %v1301 = vadd.f32 0.0, %v1300
        %v1302 = vpop.f32.mrf.mxu0
        %1303 = vmatprep.mubr.bf16.mxu0 0
        %1304 = vmatmul.mubr.bf16.gmra.mxu0 %v1181
        %v1305 = vpop.f32.mrf.mxu0
        %v1306 = vadd.f32 0.0, %v1305
        %v1307 = vpop.f32.mrf.mxu0
        %v1308 = vpop.f32.mrf.mxu0
        %v1309 = vadd.f32 0.0, %v1308
        %v1310 = vpop.f32.mrf.mxu0
        %1311 = vmatprep.mubr.bf16.mxu0 0
        %1312 = vmatmul.mubr.bf16.gmra.mxu0 %v1184
        %v1313 = vpop.f32.mrf.mxu0
        %v1314 = vadd.f32 0.0, %v1313
        %v1315 = vpop.f32.mrf.mxu0
        %v1316 = vpop.f32.mrf.mxu0
        %v1317 = vadd.f32 0.0, %v1316
        %v1318 = vpop.f32.mrf.mxu0
        %1319 = vmatprep.mubr.bf16.mxu0 0
        %1320 = vmatmul.mubr.bf16.gmra.mxu0 %v1187
        %v1321 = vpop.f32.mrf.mxu0
        %v1322 = vadd.f32 0.0, %v1321
        %v1323 = vpop.f32.mrf.mxu0
        %v1324 = vpop.f32.mrf.mxu0
        %v1325 = vadd.f32 0.0, %v1324
        %v1326 = vpop.f32.mrf.mxu0
        %1327 = vmatprep.mubr.bf16.mxu0 0
        %1328 = vmatmul.mubr.bf16.gmra.mxu0 %v1190
        %v1329 = vpop.f32.mrf.mxu0
        %v1330 = vadd.f32 0.0, %v1329
        %v1331 = vpop.f32.mrf.mxu0
        %v1332 = vpop.f32.mrf.mxu0
        %v1333 = vadd.f32 0.0, %v1332
        %v1334 = vpop.f32.mrf.mxu0
        %1335 = vmatprep.mubr.bf16.mxu0 0
        %1336 = vmatmul.mubr.bf16.gmra.mxu0 %v1193
        %v1337 = vpop.f32.mrf.mxu0
        %v1338 = vadd.f32 0.0, %v1337
        %v1339 = vpop.f32.mrf.mxu0
        %v1340 = vpop.f32.mrf.mxu0
        %v1341 = vadd.f32 0.0, %v1340
        %v1342 = vpop.f32.mrf.mxu0
        %1343 = vmatprep.mubr.bf16.mxu0 0
        %1344 = vmatmul.mubr.bf16.gmra.mxu0 %v1196
        %v1345 = vpop.f32.mrf.mxu0
        %v1346 = vadd.f32 0.0, %v1345
        %v1347 = vpop.f32.mrf.mxu0
        %v1348 = vpop.f32.mrf.mxu0
        %v1349 = vadd.f32 0.0, %v1348
        %v1350 = vpop.f32.mrf.mxu0
        %1351 = vmatprep.mubr.bf16.mxu0 0
        %1352 = vmatmul.mubr.bf16.gmra.mxu0 %v1199
        %v1353 = vpop.f32.mrf.mxu0
        %v1354 = vadd.f32 0.0, %v1353
        %v1355 = vpop.f32.mrf.mxu0
        %v1356 = vpop.f32.mrf.mxu0
        %v1357 = vadd.f32 0.0, %v1356
        %v1358 = vpop.f32.mrf.mxu0
        %1359 = vmatprep.mubr.bf16.mxu0 0
        %1360 = vmatmul.mubr.bf16.gmra.mxu0 %v1202
        %v1361 = vpop.f32.mrf.mxu0
        %v1362 = vadd.f32 0.0, %v1361
        %v1363 = vpop.f32.mrf.mxu0
        %v1364 = vpop.f32.mrf.mxu0
        %v1365 = vadd.f32 0.0, %v1364
        %v1366 = vpop.f32.mrf.mxu0
        %1367 = vdwg.mxu0
        %v1368 = vadd.f32 %v1073, %v1242
        %v1369 = vadd.f32 %v1074, %v1245
        %v1370 = vadd.f32 %v1075, %v1250
        %v1371 = vadd.f32 %v1076, %v1253
        %v1372 = vadd.f32 %v1077, %v1258
        %v1373 = vadd.f32 %v1078, %v1261
        %v1374 = vadd.f32 %v1079, %v1266
        %v1375 = vadd.f32 %v1080, %v1269
        %v1376 = vadd.f32 %v1081, %v1274
        %v1377 = vadd.f32 %v1082, %v1277
        %v1378 = vadd.f32 %v1083, %v1282
        %v1379 = vadd.f32 %v1084, %v1285
        %v1380 = vadd.f32 %v1085, %v1290
        %v1381 = vadd.f32 %v1086, %v1293
        %v1382 = vadd.f32 %v1087, %v1298
        %v1383 = vadd.f32 %v1088, %v1301
        %v1384 = vadd.f32 %v1089, %v1306
        %v1385 = vadd.f32 %v1090, %v1309
        %v1386 = vadd.f32 %v1091, %v1314
        %v1387 = vadd.f32 %v1092, %v1317
        %v1388 = vadd.f32 %v1093, %v1322
        %v1389 = vadd.f32 %v1094, %v1325
        %v1390 = vadd.f32 %v1095, %v1330
        %v1391 = vadd.f32 %v1096, %v1333
        %v1392 = vadd.f32 %v1097, %v1338
        %v1393 = vadd.f32 %v1098, %v1341
        %v1394 = vadd.f32 %v1099, %v1346
        %v1395 = vadd.f32 %v1100, %v1349
        %v1396 = vadd.f32 %v1101, %v1354
        %v1397 = vadd.f32 %v1102, %v1357
        %v1398 = vadd.f32 %v1103, %v1362
        %v1399 = vadd.f32 %v1104, %v1365
        %v1400 = vld [vmem:[%s248 + $0x1] sm:$0xff]
        %v1401 = vld [vmem:[%s248 + $0x9] sm:$0xff]
        %v1402 = vld [vmem:[%s248 + $0x19] sm:$0xff]
        %v1403 = vld [vmem:[%s248 + $0x21] sm:$0xff]
        %v1404 = vld [vmem:[%s248 + $0x31] sm:$0xff]
        %v1405 = vld [vmem:[%s248 + $0x39] sm:$0xff]
        %v1406 = vld [vmem:[%s248 + $0x49] sm:$0xff]
        %v1407 = vld [vmem:[%s248 + $0x51] sm:$0xff]
        %v1408 = vld [vmem:[%s248 + $0x61] sm:$0xff]
        %v1409 = vld [vmem:[%s248 + $0x69] sm:$0xff]
        %v1410 = vld [vmem:[%s248 + $0x79] sm:$0xff]
        %v1411 = vld [vmem:[%s248 + $0x81] sm:$0xff]
        %v1412 = vld [vmem:[%s248 + $0x91] sm:$0xff]
        %v1413 = vld [vmem:[%s248 + $0x99] sm:$0xff]
        %v1414 = vld [vmem:[%s248 + $0xa9] sm:$0xff]
        %v1415 = vld [vmem:[%s248 + $0xb1] sm:$0xff]
        %v1416 = vld [vmem:[%s248 + $0xc1] sm:$0xff]
        %v1417 = vld [vmem:[%s248 + $0xc9] sm:$0xff]
        %v1418 = vld [vmem:[%s248 + $0xd9] sm:$0xff]
        %v1419 = vld [vmem:[%s248 + $0xe1] sm:$0xff]
        %v1420 = vld [vmem:[%s248 + $0xf1] sm:$0xff]
        %v1421 = vld [vmem:[%s248 + $0xf9] sm:$0xff]
        %v1422 = vld [vmem:[%s248 + $0x109] sm:$0xff]
        %v1423 = vld [vmem:[%s248 + $0x111] sm:$0xff]
        %v1424 = vld [vmem:[%s248 + $0x121] sm:$0xff]
        %v1425 = vld [vmem:[%s248 + $0x129] sm:$0xff]
        %v1426 = vld [vmem:[%s248 + $0x139] sm:$0xff]
        %v1427 = vld [vmem:[%s248 + $0x141] sm:$0xff]
        %v1428 = vld [vmem:[%s248 + $0x151] sm:$0xff]
        %v1429 = vld [vmem:[%s248 + $0x159] sm:$0xff]
        %v1430 = vld [vmem:[%s248 + $0x169] sm:$0xff]
        %v1431 = vld [vmem:[%s248 + $0x171] sm:$0xff]
        %s1432 = scalar_lea.vmem %s1, 16
        %v1433 = vld [vmem:[%s1432] sm:$0x7]
        %v1434 = vpack.c.bf16 %v1401, %v1400
        %v1435 = vpack.c.bf16 %v1403, %v1402
        %v1436 = vpack.c.bf16 %v1405, %v1404
        %v1437 = vpack.c.bf16 %v1407, %v1406
        %v1438 = vpack.c.bf16 %v1409, %v1408
        %v1439 = vpack.c.bf16 %v1411, %v1410
        %v1440 = vpack.c.bf16 %v1413, %v1412
        %v1441 = vpack.c.bf16 %v1415, %v1414
        %v1442 = vpack.c.bf16 %v1417, %v1416
        %v1443 = vpack.c.bf16 %v1419, %v1418
        %v1444 = vpack.c.bf16 %v1421, %v1420
        %v1445 = vpack.c.bf16 %v1423, %v1422
        %v1446 = vpack.c.bf16 %v1425, %v1424
        %v1447 = vpack.c.bf16 %v1427, %v1426
        %v1448 = vpack.c.bf16 %v1429, %v1428
        %v1449 = vpack.c.bf16 %v1431, %v1430
        %v1450 = vpack.c.bf16 %v1433, %v1433
        %v1452 = vsel %vm170, %v1434, 0
        %v1455 = vsel %vm170, %v1435, 0
        %v1458 = vsel %vm170, %v1436, 0
        %v1461 = vsel %vm170, %v1437, 0
        %v1464 = vsel %vm170, %v1438, 0
        %v1467 = vsel %vm170, %v1439, 0
        %v1470 = vsel %vm170, %v1440, 0
        %v1473 = vsel %vm170, %v1441, 0
        %v1476 = vsel %vm170, %v1442, 0
        %v1479 = vsel %vm170, %v1443, 0
        %v1482 = vsel %vm170, %v1444, 0
        %v1485 = vsel %vm170, %v1445, 0
        %v1488 = vsel %vm170, %v1446, 0
        %v1491 = vsel %vm170, %v1447, 0
        %v1494 = vsel %vm170, %v1448, 0
        %v1497 = vsel %vm170, %v1449, 0
        %v1500 = vand.u32 %v1450, %v433
        %1502 = vmatprep.subr.bf16.mxu0 0
        %1503 = vmatpush1.bf16.msra.mxu0 0
        %1504 = vmatprep.subr.bf16.mxu0 0
        %1505 = vmatpush1.bf16.msra.mxu0 0
        %1506 = vmatprep.subr.bf16.mxu0 0
        %1507 = vmatpush1.bf16.msra.mxu0 0
        %1508 = vmatprep.subr.bf16.mxu0 0
        %1509 = vmatpush1.bf16.msra.mxu0 0
        %1510 = vmatprep.subr.bf16.mxu0 0
        %1511 = vmatpush1.bf16.msra.mxu0 0
        %1512 = vmatprep.subr.bf16.mxu0 0
        %1513 = vmatpush1.bf16.msra.mxu0 0
        %1514 = vmatprep.subr.bf16.mxu0 0
        %1515 = vmatpush1.bf16.msra.mxu0 0
        %1516 = vmatprep.subr.bf16.mxu0 0
        %1517 = vmatpush1.bf16.msra.mxu0 %v1500
        %1518 = vmatprep.subr.bf16.mxu0 0
        %1519 = vmatpush2.bf16.msra.mxu0 0
        %1520 = vmatprep.subr.bf16.mxu0 0
        %1521 = vmatpush2.bf16.msra.mxu0 0
        %1522 = vmatprep.subr.bf16.mxu0 0
        %1523 = vmatpush2.bf16.msra.mxu0 0
        %1524 = vmatprep.subr.bf16.mxu0 0
        %1525 = vmatpush2.bf16.msra.mxu0 0
        %1526 = vmatprep.subr.bf16.mxu0 0
        %1527 = vmatpush2.bf16.msra.mxu0 0
        %1528 = vmatprep.subr.bf16.mxu0 0
        %1529 = vmatpush2.bf16.msra.mxu0 0
        %1530 = vmatprep.subr.bf16.mxu0 0
        %1531 = vmatpush2.bf16.msra.mxu0 0
        %1532 = vmatprep.subr.bf16.mxu0 0
        %1533 = vmatpush2.bf16.msra.mxu0 0
        %1534 = vmatprep.mubr.bf16.mxu0 0
        %1535 = vmatmul.mubr.bf16.gmra.mxu0 %v1452
        %v1536 = vpop.f32.mrf.mxu0
        %v1537 = vadd.f32 0.0, %v1536
        %v1538 = vpop.f32.mrf.mxu0
        %v1539 = vpop.f32.mrf.mxu0
        %v1540 = vadd.f32 0.0, %v1539
        %v1541 = vpop.f32.mrf.mxu0
        %1542 = vmatprep.mubr.bf16.mxu0 0
        %1543 = vmatmul.mubr.bf16.gmra.mxu0 %v1455
        %v1544 = vpop.f32.mrf.mxu0
        %v1545 = vadd.f32 0.0, %v1544
        %v1546 = vpop.f32.mrf.mxu0
        %v1547 = vpop.f32.mrf.mxu0
        %v1548 = vadd.f32 0.0, %v1547
        %v1549 = vpop.f32.mrf.mxu0
        %1550 = vmatprep.mubr.bf16.mxu0 0
        %1551 = vmatmul.mubr.bf16.gmra.mxu0 %v1458
        %v1552 = vpop.f32.mrf.mxu0
        %v1553 = vadd.f32 0.0, %v1552
        %v1554 = vpop.f32.mrf.mxu0
        %v1555 = vpop.f32.mrf.mxu0
        %v1556 = vadd.f32 0.0, %v1555
        %v1557 = vpop.f32.mrf.mxu0
        %1558 = vmatprep.mubr.bf16.mxu0 0
        %1559 = vmatmul.mubr.bf16.gmra.mxu0 %v1461
        %v1560 = vpop.f32.mrf.mxu0
        %v1561 = vadd.f32 0.0, %v1560
        %v1562 = vpop.f32.mrf.mxu0
        %v1563 = vpop.f32.mrf.mxu0
        %v1564 = vadd.f32 0.0, %v1563
        %v1565 = vpop.f32.mrf.mxu0
        %1566 = vmatprep.mubr.bf16.mxu0 0
        %1567 = vmatmul.mubr.bf16.gmra.mxu0 %v1464
        %v1568 = vpop.f32.mrf.mxu0
        %v1569 = vadd.f32 0.0, %v1568
        %v1570 = vpop.f32.mrf.mxu0
        %v1571 = vpop.f32.mrf.mxu0
        %v1572 = vadd.f32 0.0, %v1571
        %v1573 = vpop.f32.mrf.mxu0
        %1574 = vmatprep.mubr.bf16.mxu0 0
        %1575 = vmatmul.mubr.bf16.gmra.mxu0 %v1467
        %v1576 = vpop.f32.mrf.mxu0
        %v1577 = vadd.f32 0.0, %v1576
        %v1578 = vpop.f32.mrf.mxu0
        %v1579 = vpop.f32.mrf.mxu0
        %v1580 = vadd.f32 0.0, %v1579
        %v1581 = vpop.f32.mrf.mxu0
        %1582 = vmatprep.mubr.bf16.mxu0 0
        %1583 = vmatmul.mubr.bf16.gmra.mxu0 %v1470
        %v1584 = vpop.f32.mrf.mxu0
        %v1585 = vadd.f32 0.0, %v1584
        %v1586 = vpop.f32.mrf.mxu0
        %v1587 = vpop.f32.mrf.mxu0
        %v1588 = vadd.f32 0.0, %v1587
        %v1589 = vpop.f32.mrf.mxu0
        %1590 = vmatprep.mubr.bf16.mxu0 0
        %1591 = vmatmul.mubr.bf16.gmra.mxu0 %v1473
        %v1592 = vpop.f32.mrf.mxu0
        %v1593 = vadd.f32 0.0, %v1592
        %v1594 = vpop.f32.mrf.mxu0
        %v1595 = vpop.f32.mrf.mxu0
        %v1596 = vadd.f32 0.0, %v1595
        %v1597 = vpop.f32.mrf.mxu0
        %1598 = vmatprep.mubr.bf16.mxu0 0
        %1599 = vmatmul.mubr.bf16.gmra.mxu0 %v1476
        %v1600 = vpop.f32.mrf.mxu0
        %v1601 = vadd.f32 0.0, %v1600
        %v1602 = vpop.f32.mrf.mxu0
        %v1603 = vpop.f32.mrf.mxu0
        %v1604 = vadd.f32 0.0, %v1603
        %v1605 = vpop.f32.mrf.mxu0
        %1606 = vmatprep.mubr.bf16.mxu0 0
        %1607 = vmatmul.mubr.bf16.gmra.mxu0 %v1479
        %v1608 = vpop.f32.mrf.mxu0
        %v1609 = vadd.f32 0.0, %v1608
        %v1610 = vpop.f32.mrf.mxu0
        %v1611 = vpop.f32.mrf.mxu0
        %v1612 = vadd.f32 0.0, %v1611
        %v1613 = vpop.f32.mrf.mxu0
        %1614 = vmatprep.mubr.bf16.mxu0 0
        %1615 = vmatmul.mubr.bf16.gmra.mxu0 %v1482
        %v1616 = vpop.f32.mrf.mxu0
        %v1617 = vadd.f32 0.0, %v1616
        %v1618 = vpop.f32.mrf.mxu0
        %v1619 = vpop.f32.mrf.mxu0
        %v1620 = vadd.f32 0.0, %v1619
        %v1621 = vpop.f32.mrf.mxu0
        %1622 = vmatprep.mubr.bf16.mxu0 0
        %1623 = vmatmul.mubr.bf16.gmra.mxu0 %v1485
        %v1624 = vpop.f32.mrf.mxu0
        %v1625 = vadd.f32 0.0, %v1624
        %v1626 = vpop.f32.mrf.mxu0
        %v1627 = vpop.f32.mrf.mxu0
        %v1628 = vadd.f32 0.0, %v1627
        %v1629 = vpop.f32.mrf.mxu0
        %1630 = vmatprep.mubr.bf16.mxu0 0
        %1631 = vmatmul.mubr.bf16.gmra.mxu0 %v1488
        %v1632 = vpop.f32.mrf.mxu0
        %v1633 = vadd.f32 0.0, %v1632
        %v1634 = vpop.f32.mrf.mxu0
        %v1635 = vpop.f32.mrf.mxu0
        %v1636 = vadd.f32 0.0, %v1635
        %v1637 = vpop.f32.mrf.mxu0
        %1638 = vmatprep.mubr.bf16.mxu0 0
        %1639 = vmatmul.mubr.bf16.gmra.mxu0 %v1491
        %v1640 = vpop.f32.mrf.mxu0
        %v1641 = vadd.f32 0.0, %v1640
        %v1642 = vpop.f32.mrf.mxu0
        %v1643 = vpop.f32.mrf.mxu0
        %v1644 = vadd.f32 0.0, %v1643
        %v1645 = vpop.f32.mrf.mxu0
        %1646 = vmatprep.mubr.bf16.mxu0 0
        %1647 = vmatmul.mubr.bf16.gmra.mxu0 %v1494
        %v1648 = vpop.f32.mrf.mxu0
        %v1649 = vadd.f32 0.0, %v1648
        %v1650 = vpop.f32.mrf.mxu0
        %v1651 = vpop.f32.mrf.mxu0
        %v1652 = vadd.f32 0.0, %v1651
        %v1653 = vpop.f32.mrf.mxu0
        %1654 = vmatprep.mubr.bf16.mxu0 0
        %1655 = vmatmul.mubr.bf16.gmra.mxu0 %v1497
        %v1656 = vpop.f32.mrf.mxu0
        %v1657 = vadd.f32 0.0, %v1656
        %v1658 = vpop.f32.mrf.mxu0
        %v1659 = vpop.f32.mrf.mxu0
        %v1660 = vadd.f32 0.0, %v1659
        %v1661 = vpop.f32.mrf.mxu0
        %1662 = vdwg.mxu0
        %v1663 = vadd.f32 %v1368, %v1537
        %v1664 = vadd.f32 %v1369, %v1540
        %v1665 = vadd.f32 %v1370, %v1545
        %v1666 = vadd.f32 %v1371, %v1548
        %v1667 = vadd.f32 %v1372, %v1553
        %v1668 = vadd.f32 %v1373, %v1556
        %v1669 = vadd.f32 %v1374, %v1561
        %v1670 = vadd.f32 %v1375, %v1564
        %v1671 = vadd.f32 %v1376, %v1569
        %v1672 = vadd.f32 %v1377, %v1572
        %v1673 = vadd.f32 %v1378, %v1577
        %v1674 = vadd.f32 %v1379, %v1580
        %v1675 = vadd.f32 %v1380, %v1585
        %v1676 = vadd.f32 %v1381, %v1588
        %v1677 = vadd.f32 %v1382, %v1593
        %v1678 = vadd.f32 %v1383, %v1596
        %v1679 = vadd.f32 %v1384, %v1601
        %v1680 = vadd.f32 %v1385, %v1604
        %v1681 = vadd.f32 %v1386, %v1609
        %v1682 = vadd.f32 %v1387, %v1612
        %v1683 = vadd.f32 %v1388, %v1617
        %v1684 = vadd.f32 %v1389, %v1620
        %v1685 = vadd.f32 %v1390, %v1625
        %v1686 = vadd.f32 %v1391, %v1628
        %v1687 = vadd.f32 %v1392, %v1633
        %v1688 = vadd.f32 %v1393, %v1636
        %v1689 = vadd.f32 %v1394, %v1641
        %v1690 = vadd.f32 %v1395, %v1644
        %v1691 = vadd.f32 %v1396, %v1649
        %v1692 = vadd.f32 %v1397, %v1652
        %v1693 = vadd.f32 %v1398, %v1657
        %v1694 = vadd.f32 %v1399, %v1660
        %v1695 = vld [vmem:[%s248 + $0x2] sm:$0xff]
        %v1696 = vld [vmem:[%s248 + $0xa] sm:$0xff]
        %v1697 = vld [vmem:[%s248 + $0x1a] sm:$0xff]
        %v1698 = vld [vmem:[%s248 + $0x22] sm:$0xff]
        %v1699 = vld [vmem:[%s248 + $0x32] sm:$0xff]
        %v1700 = vld [vmem:[%s248 + $0x3a] sm:$0xff]
        %v1701 = vld [vmem:[%s248 + $0x4a] sm:$0xff]
        %v1702 = vld [vmem:[%s248 + $0x52] sm:$0xff]
        %v1703 = vld [vmem:[%s248 + $0x62] sm:$0xff]
        %v1704 = vld [vmem:[%s248 + $0x6a] sm:$0xff]
        %v1705 = vld [vmem:[%s248 + $0x7a] sm:$0xff]
        %v1706 = vld [vmem:[%s248 + $0x82] sm:$0xff]
        %v1707 = vld [vmem:[%s248 + $0x92] sm:$0xff]
        %v1708 = vld [vmem:[%s248 + $0x9a] sm:$0xff]
        %v1709 = vld [vmem:[%s248 + $0xaa] sm:$0xff]
        %v1710 = vld [vmem:[%s248 + $0xb2] sm:$0xff]
        %v1711 = vld [vmem:[%s248 + $0xc2] sm:$0xff]
        %v1712 = vld [vmem:[%s248 + $0xca] sm:$0xff]
        %v1713 = vld [vmem:[%s248 + $0xda] sm:$0xff]
        %v1714 = vld [vmem:[%s248 + $0xe2] sm:$0xff]
        %v1715 = vld [vmem:[%s248 + $0xf2] sm:$0xff]
        %v1716 = vld [vmem:[%s248 + $0xfa] sm:$0xff]
        %v1717 = vld [vmem:[%s248 + $0x10a] sm:$0xff]
        %v1718 = vld [vmem:[%s248 + $0x112] sm:$0xff]
        %v1719 = vld [vmem:[%s248 + $0x122] sm:$0xff]
        %v1720 = vld [vmem:[%s248 + $0x12a] sm:$0xff]
        %v1721 = vld [vmem:[%s248 + $0x13a] sm:$0xff]
        %v1722 = vld [vmem:[%s248 + $0x142] sm:$0xff]
        %v1723 = vld [vmem:[%s248 + $0x152] sm:$0xff]
        %v1724 = vld [vmem:[%s248 + $0x15a] sm:$0xff]
        %v1725 = vld [vmem:[%s248 + $0x16a] sm:$0xff]
        %v1726 = vld [vmem:[%s248 + $0x172] sm:$0xff]
        %s1727 = scalar_lea.vmem %s1, 20
        %v1728 = vld [vmem:[%s1727] sm:$0x7]
        %v1729 = vpack.c.bf16 %v1696, %v1695
        %v1730 = vpack.c.bf16 %v1698, %v1697
        %v1731 = vpack.c.bf16 %v1700, %v1699
        %v1732 = vpack.c.bf16 %v1702, %v1701
        %v1733 = vpack.c.bf16 %v1704, %v1703
        %v1734 = vpack.c.bf16 %v1706, %v1705
        %v1735 = vpack.c.bf16 %v1708, %v1707
        %v1736 = vpack.c.bf16 %v1710, %v1709
        %v1737 = vpack.c.bf16 %v1712, %v1711
        %v1738 = vpack.c.bf16 %v1714, %v1713
        %v1739 = vpack.c.bf16 %v1716, %v1715
        %v1740 = vpack.c.bf16 %v1718, %v1717
        %v1741 = vpack.c.bf16 %v1720, %v1719
        %v1742 = vpack.c.bf16 %v1722, %v1721
        %v1743 = vpack.c.bf16 %v1724, %v1723
        %v1744 = vpack.c.bf16 %v1726, %v1725
        %v1745 = vpack.c.bf16 %v1728, %v1728
        %v1747 = vsel %vm170, %v1729, 0
        %v1750 = vsel %vm170, %v1730, 0
        %v1753 = vsel %vm170, %v1731, 0
        %v1756 = vsel %vm170, %v1732, 0
        %v1759 = vsel %vm170, %v1733, 0
        %v1762 = vsel %vm170, %v1734, 0
        %v1765 = vsel %vm170, %v1735, 0
        %v1768 = vsel %vm170, %v1736, 0
        %v1771 = vsel %vm170, %v1737, 0
        %v1774 = vsel %vm170, %v1738, 0
        %v1777 = vsel %vm170, %v1739, 0
        %v1780 = vsel %vm170, %v1740, 0
        %v1783 = vsel %vm170, %v1741, 0
        %v1786 = vsel %vm170, %v1742, 0
        %v1789 = vsel %vm170, %v1743, 0
        %v1792 = vsel %vm170, %v1744, 0
        %v1795 = vand.u32 %v1745, %v433
        %1797 = vmatprep.subr.bf16.mxu0 0
        %1798 = vmatpush1.bf16.msra.mxu0 0
        %1799 = vmatprep.subr.bf16.mxu0 0
        %1800 = vmatpush1.bf16.msra.mxu0 0
        %1801 = vmatprep.subr.bf16.mxu0 0
        %1802 = vmatpush1.bf16.msra.mxu0 0
        %1803 = vmatprep.subr.bf16.mxu0 0
        %1804 = vmatpush1.bf16.msra.mxu0 0
        %1805 = vmatprep.subr.bf16.mxu0 0
        %1806 = vmatpush1.bf16.msra.mxu0 0
        %1807 = vmatprep.subr.bf16.mxu0 0
        %1808 = vmatpush1.bf16.msra.mxu0 0
        %1809 = vmatprep.subr.bf16.mxu0 0
        %1810 = vmatpush1.bf16.msra.mxu0 0
        %1811 = vmatprep.subr.bf16.mxu0 0
        %1812 = vmatpush1.bf16.msra.mxu0 %v1795
        %1813 = vmatprep.subr.bf16.mxu0 0
        %1814 = vmatpush2.bf16.msra.mxu0 0
        %1815 = vmatprep.subr.bf16.mxu0 0
        %1816 = vmatpush2.bf16.msra.mxu0 0
        %1817 = vmatprep.subr.bf16.mxu0 0
        %1818 = vmatpush2.bf16.msra.mxu0 0
        %1819 = vmatprep.subr.bf16.mxu0 0
        %1820 = vmatpush2.bf16.msra.mxu0 0
        %1821 = vmatprep.subr.bf16.mxu0 0
        %1822 = vmatpush2.bf16.msra.mxu0 0
        %1823 = vmatprep.subr.bf16.mxu0 0
        %1824 = vmatpush2.bf16.msra.mxu0 0
        %1825 = vmatprep.subr.bf16.mxu0 0
        %1826 = vmatpush2.bf16.msra.mxu0 0
        %1827 = vmatprep.subr.bf16.mxu0 0
        %1828 = vmatpush2.bf16.msra.mxu0 0
        %1829 = vmatprep.mubr.bf16.mxu0 0
        %1830 = vmatmul.mubr.bf16.gmra.mxu0 %v1747
        %v1831 = vpop.f32.mrf.mxu0
        %v1832 = vadd.f32 0.0, %v1831
        %v1833 = vpop.f32.mrf.mxu0
        %v1834 = vpop.f32.mrf.mxu0
        %v1835 = vadd.f32 0.0, %v1834
        %v1836 = vpop.f32.mrf.mxu0
        %1837 = vmatprep.mubr.bf16.mxu0 0
        %1838 = vmatmul.mubr.bf16.gmra.mxu0 %v1750
        %v1839 = vpop.f32.mrf.mxu0
        %v1840 = vadd.f32 0.0, %v1839
        %v1841 = vpop.f32.mrf.mxu0
        %v1842 = vpop.f32.mrf.mxu0
        %v1843 = vadd.f32 0.0, %v1842
        %v1844 = vpop.f32.mrf.mxu0
        %1845 = vmatprep.mubr.bf16.mxu0 0
        %1846 = vmatmul.mubr.bf16.gmra.mxu0 %v1753
        %v1847 = vpop.f32.mrf.mxu0
        %v1848 = vadd.f32 0.0, %v1847
        %v1849 = vpop.f32.mrf.mxu0
        %v1850 = vpop.f32.mrf.mxu0
        %v1851 = vadd.f32 0.0, %v1850
        %v1852 = vpop.f32.mrf.mxu0
        %1853 = vmatprep.mubr.bf16.mxu0 0
        %1854 = vmatmul.mubr.bf16.gmra.mxu0 %v1756
        %v1855 = vpop.f32.mrf.mxu0
        %v1856 = vadd.f32 0.0, %v1855
        %v1857 = vpop.f32.mrf.mxu0
        %v1858 = vpop.f32.mrf.mxu0
        %v1859 = vadd.f32 0.0, %v1858
        %v1860 = vpop.f32.mrf.mxu0
        %1861 = vmatprep.mubr.bf16.mxu0 0
        %1862 = vmatmul.mubr.bf16.gmra.mxu0 %v1759
        %v1863 = vpop.f32.mrf.mxu0
        %v1864 = vadd.f32 0.0, %v1863
        %v1865 = vpop.f32.mrf.mxu0
        %v1866 = vpop.f32.mrf.mxu0
        %v1867 = vadd.f32 0.0, %v1866
        %v1868 = vpop.f32.mrf.mxu0
        %1869 = vmatprep.mubr.bf16.mxu0 0
        %1870 = vmatmul.mubr.bf16.gmra.mxu0 %v1762
        %v1871 = vpop.f32.mrf.mxu0
        %v1872 = vadd.f32 0.0, %v1871
        %v1873 = vpop.f32.mrf.mxu0
        %v1874 = vpop.f32.mrf.mxu0
        %v1875 = vadd.f32 0.0, %v1874
        %v1876 = vpop.f32.mrf.mxu0
        %1877 = vmatprep.mubr.bf16.mxu0 0
        %1878 = vmatmul.mubr.bf16.gmra.mxu0 %v1765
        %v1879 = vpop.f32.mrf.mxu0
        %v1880 = vadd.f32 0.0, %v1879
        %v1881 = vpop.f32.mrf.mxu0
        %v1882 = vpop.f32.mrf.mxu0
        %v1883 = vadd.f32 0.0, %v1882
        %v1884 = vpop.f32.mrf.mxu0
        %1885 = vmatprep.mubr.bf16.mxu0 0
        %1886 = vmatmul.mubr.bf16.gmra.mxu0 %v1768
        %v1887 = vpop.f32.mrf.mxu0
        %v1888 = vadd.f32 0.0, %v1887
        %v1889 = vpop.f32.mrf.mxu0
        %v1890 = vpop.f32.mrf.mxu0
        %v1891 = vadd.f32 0.0, %v1890
        %v1892 = vpop.f32.mrf.mxu0
        %1893 = vmatprep.mubr.bf16.mxu0 0
        %1894 = vmatmul.mubr.bf16.gmra.mxu0 %v1771
        %v1895 = vpop.f32.mrf.mxu0
        %v1896 = vadd.f32 0.0, %v1895
        %v1897 = vpop.f32.mrf.mxu0
        %v1898 = vpop.f32.mrf.mxu0
        %v1899 = vadd.f32 0.0, %v1898
        %v1900 = vpop.f32.mrf.mxu0
        %1901 = vmatprep.mubr.bf16.mxu0 0
        %1902 = vmatmul.mubr.bf16.gmra.mxu0 %v1774
        %v1903 = vpop.f32.mrf.mxu0
        %v1904 = vadd.f32 0.0, %v1903
        %v1905 = vpop.f32.mrf.mxu0
        %v1906 = vpop.f32.mrf.mxu0
        %v1907 = vadd.f32 0.0, %v1906
        %v1908 = vpop.f32.mrf.mxu0
        %1909 = vmatprep.mubr.bf16.mxu0 0
        %1910 = vmatmul.mubr.bf16.gmra.mxu0 %v1777
        %v1911 = vpop.f32.mrf.mxu0
        %v1912 = vadd.f32 0.0, %v1911
        %v1913 = vpop.f32.mrf.mxu0
        %v1914 = vpop.f32.mrf.mxu0
        %v1915 = vadd.f32 0.0, %v1914
        %v1916 = vpop.f32.mrf.mxu0
        %1917 = vmatprep.mubr.bf16.mxu0 0
        %1918 = vmatmul.mubr.bf16.gmra.mxu0 %v1780
        %v1919 = vpop.f32.mrf.mxu0
        %v1920 = vadd.f32 0.0, %v1919
        %v1921 = vpop.f32.mrf.mxu0
        %v1922 = vpop.f32.mrf.mxu0
        %v1923 = vadd.f32 0.0, %v1922
        %v1924 = vpop.f32.mrf.mxu0
        %1925 = vmatprep.mubr.bf16.mxu0 0
        %1926 = vmatmul.mubr.bf16.gmra.mxu0 %v1783
        %v1927 = vpop.f32.mrf.mxu0
        %v1928 = vadd.f32 0.0, %v1927
        %v1929 = vpop.f32.mrf.mxu0
        %v1930 = vpop.f32.mrf.mxu0
        %v1931 = vadd.f32 0.0, %v1930
        %v1932 = vpop.f32.mrf.mxu0
        %1933 = vmatprep.mubr.bf16.mxu0 0
        %1934 = vmatmul.mubr.bf16.gmra.mxu0 %v1786
        %v1935 = vpop.f32.mrf.mxu0
        %v1936 = vadd.f32 0.0, %v1935
        %v1937 = vpop.f32.mrf.mxu0
        %v1938 = vpop.f32.mrf.mxu0
        %v1939 = vadd.f32 0.0, %v1938
        %v1940 = vpop.f32.mrf.mxu0
        %1941 = vmatprep.mubr.bf16.mxu0 0
        %1942 = vmatmul.mubr.bf16.gmra.mxu0 %v1789
        %v1943 = vpop.f32.mrf.mxu0
        %v1944 = vadd.f32 0.0, %v1943
        %v1945 = vpop.f32.mrf.mxu0
        %v1946 = vpop.f32.mrf.mxu0
        %v1947 = vadd.f32 0.0, %v1946
        %v1948 = vpop.f32.mrf.mxu0
        %1949 = vmatprep.mubr.bf16.mxu0 0
        %1950 = vmatmul.mubr.bf16.gmra.mxu0 %v1792
        %v1951 = vpop.f32.mrf.mxu0
        %v1952 = vadd.f32 0.0, %v1951
        %v1953 = vpop.f32.mrf.mxu0
        %v1954 = vpop.f32.mrf.mxu0
        %v1955 = vadd.f32 0.0, %v1954
        %v1956 = vpop.f32.mrf.mxu0
        %1957 = vdwg.mxu0
        %v1958 = vadd.f32 %v1663, %v1832
        %v1959 = vadd.f32 %v1664, %v1835
        %v1960 = vadd.f32 %v1665, %v1840
        %v1961 = vadd.f32 %v1666, %v1843
        %v1962 = vadd.f32 %v1667, %v1848
        %v1963 = vadd.f32 %v1668, %v1851
        %v1964 = vadd.f32 %v1669, %v1856
        %v1965 = vadd.f32 %v1670, %v1859
        %v1966 = vadd.f32 %v1671, %v1864
        %v1967 = vadd.f32 %v1672, %v1867
        %v1968 = vadd.f32 %v1673, %v1872
        %v1969 = vadd.f32 %v1674, %v1875
        %v1970 = vadd.f32 %v1675, %v1880
        %v1971 = vadd.f32 %v1676, %v1883
        %v1972 = vadd.f32 %v1677, %v1888
        %v1973 = vadd.f32 %v1678, %v1891
        %v1974 = vadd.f32 %v1679, %v1896
        %v1975 = vadd.f32 %v1680, %v1899
        %v1976 = vadd.f32 %v1681, %v1904
        %v1977 = vadd.f32 %v1682, %v1907
        %v1978 = vadd.f32 %v1683, %v1912
        %v1979 = vadd.f32 %v1684, %v1915
        %v1980 = vadd.f32 %v1685, %v1920
        %v1981 = vadd.f32 %v1686, %v1923
        %v1982 = vadd.f32 %v1687, %v1928
        %v1983 = vadd.f32 %v1688, %v1931
        %v1984 = vadd.f32 %v1689, %v1936
        %v1985 = vadd.f32 %v1690, %v1939
        %v1986 = vadd.f32 %v1691, %v1944
        %v1987 = vadd.f32 %v1692, %v1947
        %v1988 = vadd.f32 %v1693, %v1952
        %v1989 = vadd.f32 %v1694, %v1955
        %s1990 = scalar_lea.vmem [#allocation2], 48
        %v1991 = vld [vmem:[%s1990] sm:$0xff]
        %v1992 = vld [vmem:[%s1990 + $0x8] sm:$0xff]
        %v1993 = vld [vmem:[%s1990 + $0x18] sm:$0xff]
        %v1994 = vld [vmem:[%s1990 + $0x20] sm:$0xff]
        %v1995 = vld [vmem:[%s1990 + $0x30] sm:$0xff]
        %v1996 = vld [vmem:[%s1990 + $0x38] sm:$0xff]
        %v1997 = vld [vmem:[%s1990 + $0x48] sm:$0xff]
        %v1998 = vld [vmem:[%s1990 + $0x50] sm:$0xff]
        %v1999 = vld [vmem:[%s1990 + $0x60] sm:$0xff]
        %v2000 = vld [vmem:[%s1990 + $0x68] sm:$0xff]
        %v2001 = vld [vmem:[%s1990 + $0x78] sm:$0xff]
        %v2002 = vld [vmem:[%s1990 + $0x80] sm:$0xff]
        %v2003 = vld [vmem:[%s1990 + $0x90] sm:$0xff]
        %v2004 = vld [vmem:[%s1990 + $0x98] sm:$0xff]
        %v2005 = vld [vmem:[%s1990 + $0xa8] sm:$0xff]
        %v2006 = vld [vmem:[%s1990 + $0xb0] sm:$0xff]
        %v2007 = vld [vmem:[%s1990 + $0xc0] sm:$0xff]
        %v2008 = vld [vmem:[%s1990 + $0xc8] sm:$0xff]
        %v2009 = vld [vmem:[%s1990 + $0xd8] sm:$0xff]
        %v2010 = vld [vmem:[%s1990 + $0xe0] sm:$0xff]
        %v2011 = vld [vmem:[%s1990 + $0xf0] sm:$0xff]
        %v2012 = vld [vmem:[%s1990 + $0xf8] sm:$0xff]
        %v2013 = vld [vmem:[%s1990 + $0x108] sm:$0xff]
        %v2014 = vld [vmem:[%s1990 + $0x110] sm:$0xff]
        %v2015 = vld [vmem:[%s1990 + $0x120] sm:$0xff]
        %v2016 = vld [vmem:[%s1990 + $0x128] sm:$0xff]
        %v2017 = vld [vmem:[%s1990 + $0x138] sm:$0xff]
        %v2018 = vld [vmem:[%s1990 + $0x140] sm:$0xff]
        %v2019 = vld [vmem:[%s1990 + $0x150] sm:$0xff]
        %v2020 = vld [vmem:[%s1990 + $0x158] sm:$0xff]
        %v2021 = vld [vmem:[%s1990 + $0x168] sm:$0xff]
        %v2022 = vld [vmem:[%s1990 + $0x170] sm:$0xff]
        %s2023 = scalar_lea.vmem %s1, 24
        %v2024 = vld [vmem:[%s2023] sm:$0x7]
        %v2025 = vpack.c.bf16 %v1992, %v1991
        %v2026 = vpack.c.bf16 %v1994, %v1993
        %v2027 = vpack.c.bf16 %v1996, %v1995
        %v2028 = vpack.c.bf16 %v1998, %v1997
        %v2029 = vpack.c.bf16 %v2000, %v1999
        %v2030 = vpack.c.bf16 %v2002, %v2001
        %v2031 = vpack.c.bf16 %v2004, %v2003
        %v2032 = vpack.c.bf16 %v2006, %v2005
        %v2033 = vpack.c.bf16 %v2008, %v2007
        %v2034 = vpack.c.bf16 %v2010, %v2009
        %v2035 = vpack.c.bf16 %v2012, %v2011
        %v2036 = vpack.c.bf16 %v2014, %v2013
        %v2037 = vpack.c.bf16 %v2016, %v2015
        %v2038 = vpack.c.bf16 %v2018, %v2017
        %v2039 = vpack.c.bf16 %v2020, %v2019
        %v2040 = vpack.c.bf16 %v2022, %v2021
        %v2041 = vpack.c.bf16 %v2024, %v2024
        %v2043 = vsel %vm170, %v2025, 0
        %v2046 = vsel %vm170, %v2026, 0
        %v2049 = vsel %vm170, %v2027, 0
        %v2052 = vsel %vm170, %v2028, 0
        %v2055 = vsel %vm170, %v2029, 0
        %v2058 = vsel %vm170, %v2030, 0
        %v2061 = vsel %vm170, %v2031, 0
        %v2064 = vsel %vm170, %v2032, 0
        %v2067 = vsel %vm170, %v2033, 0
        %v2070 = vsel %vm170, %v2034, 0
        %v2073 = vsel %vm170, %v2035, 0
        %v2076 = vsel %vm170, %v2036, 0
        %v2079 = vsel %vm170, %v2037, 0
        %v2082 = vsel %vm170, %v2038, 0
        %v2085 = vsel %vm170, %v2039, 0
        %v2088 = vsel %vm170, %v2040, 0
        %v2091 = vand.u32 %v2041, %v433
        %2093 = vmatprep.subr.bf16.mxu0 0
        %2094 = vmatpush1.bf16.msra.mxu0 0
        %2095 = vmatprep.subr.bf16.mxu0 0
        %2096 = vmatpush1.bf16.msra.mxu0 0
        %2097 = vmatprep.subr.bf16.mxu0 0
        %2098 = vmatpush1.bf16.msra.mxu0 0
        %2099 = vmatprep.subr.bf16.mxu0 0
        %2100 = vmatpush1.bf16.msra.mxu0 0
        %2101 = vmatprep.subr.bf16.mxu0 0
        %2102 = vmatpush1.bf16.msra.mxu0 0
        %2103 = vmatprep.subr.bf16.mxu0 0
        %2104 = vmatpush1.bf16.msra.mxu0 0
        %2105 = vmatprep.subr.bf16.mxu0 0
        %2106 = vmatpush1.bf16.msra.mxu0 0
        %2107 = vmatprep.subr.bf16.mxu0 0
        %2108 = vmatpush1.bf16.msra.mxu0 %v2091
        %2109 = vmatprep.subr.bf16.mxu0 0
        %2110 = vmatpush2.bf16.msra.mxu0 0
        %2111 = vmatprep.subr.bf16.mxu0 0
        %2112 = vmatpush2.bf16.msra.mxu0 0
        %2113 = vmatprep.subr.bf16.mxu0 0
        %2114 = vmatpush2.bf16.msra.mxu0 0
        %2115 = vmatprep.subr.bf16.mxu0 0
        %2116 = vmatpush2.bf16.msra.mxu0 0
        %2117 = vmatprep.subr.bf16.mxu0 0
        %2118 = vmatpush2.bf16.msra.mxu0 0
        %2119 = vmatprep.subr.bf16.mxu0 0
        %2120 = vmatpush2.bf16.msra.mxu0 0
        %2121 = vmatprep.subr.bf16.mxu0 0
        %2122 = vmatpush2.bf16.msra.mxu0 0
        %2123 = vmatprep.subr.bf16.mxu0 0
        %2124 = vmatpush2.bf16.msra.mxu0 0
        %2125 = vmatprep.mubr.bf16.mxu0 0
        %2126 = vmatmul.mubr.bf16.gmra.mxu0 %v2043
        %v2127 = vpop.f32.mrf.mxu0
        %v2128 = vadd.f32 0.0, %v2127
        %v2129 = vpop.f32.mrf.mxu0
        %v2130 = vpop.f32.mrf.mxu0
        %v2131 = vadd.f32 0.0, %v2130
        %v2132 = vpop.f32.mrf.mxu0
        %2133 = vmatprep.mubr.bf16.mxu0 0
        %2134 = vmatmul.mubr.bf16.gmra.mxu0 %v2046
        %v2135 = vpop.f32.mrf.mxu0
        %v2136 = vadd.f32 0.0, %v2135
        %v2137 = vpop.f32.mrf.mxu0
        %v2138 = vpop.f32.mrf.mxu0
        %v2139 = vadd.f32 0.0, %v2138
        %v2140 = vpop.f32.mrf.mxu0
        %2141 = vmatprep.mubr.bf16.mxu0 0
        %2142 = vmatmul.mubr.bf16.gmra.mxu0 %v2049
        %v2143 = vpop.f32.mrf.mxu0
        %v2144 = vadd.f32 0.0, %v2143
        %v2145 = vpop.f32.mrf.mxu0
        %v2146 = vpop.f32.mrf.mxu0
        %v2147 = vadd.f32 0.0, %v2146
        %v2148 = vpop.f32.mrf.mxu0
        %2149 = vmatprep.mubr.bf16.mxu0 0
        %2150 = vmatmul.mubr.bf16.gmra.mxu0 %v2052
        %v2151 = vpop.f32.mrf.mxu0
        %v2152 = vadd.f32 0.0, %v2151
        %v2153 = vpop.f32.mrf.mxu0
        %v2154 = vpop.f32.mrf.mxu0
        %v2155 = vadd.f32 0.0, %v2154
        %v2156 = vpop.f32.mrf.mxu0
        %2157 = vmatprep.mubr.bf16.mxu0 0
        %2158 = vmatmul.mubr.bf16.gmra.mxu0 %v2055
        %v2159 = vpop.f32.mrf.mxu0
        %v2160 = vadd.f32 0.0, %v2159
        %v2161 = vpop.f32.mrf.mxu0
        %v2162 = vpop.f32.mrf.mxu0
        %v2163 = vadd.f32 0.0, %v2162
        %v2164 = vpop.f32.mrf.mxu0
        %2165 = vmatprep.mubr.bf16.mxu0 0
        %2166 = vmatmul.mubr.bf16.gmra.mxu0 %v2058
        %v2167 = vpop.f32.mrf.mxu0
        %v2168 = vadd.f32 0.0, %v2167
        %v2169 = vpop.f32.mrf.mxu0
        %v2170 = vpop.f32.mrf.mxu0
        %v2171 = vadd.f32 0.0, %v2170
        %v2172 = vpop.f32.mrf.mxu0
        %2173 = vmatprep.mubr.bf16.mxu0 0
        %2174 = vmatmul.mubr.bf16.gmra.mxu0 %v2061
        %v2175 = vpop.f32.mrf.mxu0
        %v2176 = vadd.f32 0.0, %v2175
        %v2177 = vpop.f32.mrf.mxu0
        %v2178 = vpop.f32.mrf.mxu0
        %v2179 = vadd.f32 0.0, %v2178
        %v2180 = vpop.f32.mrf.mxu0
        %2181 = vmatprep.mubr.bf16.mxu0 0
        %2182 = vmatmul.mubr.bf16.gmra.mxu0 %v2064
        %v2183 = vpop.f32.mrf.mxu0
        %v2184 = vadd.f32 0.0, %v2183
        %v2185 = vpop.f32.mrf.mxu0
        %v2186 = vpop.f32.mrf.mxu0
        %v2187 = vadd.f32 0.0, %v2186
        %v2188 = vpop.f32.mrf.mxu0
        %2189 = vmatprep.mubr.bf16.mxu0 0
        %2190 = vmatmul.mubr.bf16.gmra.mxu0 %v2067
        %v2191 = vpop.f32.mrf.mxu0
        %v2192 = vadd.f32 0.0, %v2191
        %v2193 = vpop.f32.mrf.mxu0
        %v2194 = vpop.f32.mrf.mxu0
        %v2195 = vadd.f32 0.0, %v2194
        %v2196 = vpop.f32.mrf.mxu0
        %2197 = vmatprep.mubr.bf16.mxu0 0
        %2198 = vmatmul.mubr.bf16.gmra.mxu0 %v2070
        %v2199 = vpop.f32.mrf.mxu0
        %v2200 = vadd.f32 0.0, %v2199
        %v2201 = vpop.f32.mrf.mxu0
        %v2202 = vpop.f32.mrf.mxu0
        %v2203 = vadd.f32 0.0, %v2202
        %v2204 = vpop.f32.mrf.mxu0
        %2205 = vmatprep.mubr.bf16.mxu0 0
        %2206 = vmatmul.mubr.bf16.gmra.mxu0 %v2073
        %v2207 = vpop.f32.mrf.mxu0
        %v2208 = vadd.f32 0.0, %v2207
        %v2209 = vpop.f32.mrf.mxu0
        %v2210 = vpop.f32.mrf.mxu0
        %v2211 = vadd.f32 0.0, %v2210
        %v2212 = vpop.f32.mrf.mxu0
        %2213 = vmatprep.mubr.bf16.mxu0 0
        %2214 = vmatmul.mubr.bf16.gmra.mxu0 %v2076
        %v2215 = vpop.f32.mrf.mxu0
        %v2216 = vadd.f32 0.0, %v2215
        %v2217 = vpop.f32.mrf.mxu0
        %v2218 = vpop.f32.mrf.mxu0
        %v2219 = vadd.f32 0.0, %v2218
        %v2220 = vpop.f32.mrf.mxu0
        %2221 = vmatprep.mubr.bf16.mxu0 0
        %2222 = vmatmul.mubr.bf16.gmra.mxu0 %v2079
        %v2223 = vpop.f32.mrf.mxu0
        %v2224 = vadd.f32 0.0, %v2223
        %v2225 = vpop.f32.mrf.mxu0
        %v2226 = vpop.f32.mrf.mxu0
        %v2227 = vadd.f32 0.0, %v2226
        %v2228 = vpop.f32.mrf.mxu0
        %2229 = vmatprep.mubr.bf16.mxu0 0
        %2230 = vmatmul.mubr.bf16.gmra.mxu0 %v2082
        %v2231 = vpop.f32.mrf.mxu0
        %v2232 = vadd.f32 0.0, %v2231
        %v2233 = vpop.f32.mrf.mxu0
        %v2234 = vpop.f32.mrf.mxu0
        %v2235 = vadd.f32 0.0, %v2234
        %v2236 = vpop.f32.mrf.mxu0
        %2237 = vmatprep.mubr.bf16.mxu0 0
        %2238 = vmatmul.mubr.bf16.gmra.mxu0 %v2085
        %v2239 = vpop.f32.mrf.mxu0
        %v2240 = vadd.f32 0.0, %v2239
        %v2241 = vpop.f32.mrf.mxu0
        %v2242 = vpop.f32.mrf.mxu0
        %v2243 = vadd.f32 0.0, %v2242
        %v2244 = vpop.f32.mrf.mxu0
        %2245 = vmatprep.mubr.bf16.mxu0 0
        %2246 = vmatmul.mubr.bf16.gmra.mxu0 %v2088
        %v2247 = vpop.f32.mrf.mxu0
        %v2248 = vadd.f32 0.0, %v2247
        %v2249 = vpop.f32.mrf.mxu0
        %v2250 = vpop.f32.mrf.mxu0
        %v2251 = vadd.f32 0.0, %v2250
        %v2252 = vpop.f32.mrf.mxu0
        %2253 = vdwg.mxu0
        %v2254 = vadd.f32 %v1958, %v2128
        %v2255 = vadd.f32 %v1959, %v2131
        %v2256 = vadd.f32 %v1960, %v2136
        %v2257 = vadd.f32 %v1961, %v2139
        %v2258 = vadd.f32 %v1962, %v2144
        %v2259 = vadd.f32 %v1963, %v2147
        %v2260 = vadd.f32 %v1964, %v2152
        %v2261 = vadd.f32 %v1965, %v2155
        %v2262 = vadd.f32 %v1966, %v2160
        %v2263 = vadd.f32 %v1967, %v2163
        %v2264 = vadd.f32 %v1968, %v2168
        %v2265 = vadd.f32 %v1969, %v2171
        %v2266 = vadd.f32 %v1970, %v2176
        %v2267 = vadd.f32 %v1971, %v2179
        %v2268 = vadd.f32 %v1972, %v2184
        %v2269 = vadd.f32 %v1973, %v2187
        %v2270 = vadd.f32 %v1974, %v2192
        %v2271 = vadd.f32 %v1975, %v2195
        %v2272 = vadd.f32 %v1976, %v2200
        %v2273 = vadd.f32 %v1977, %v2203
        %v2274 = vadd.f32 %v1978, %v2208
        %v2275 = vadd.f32 %v1979, %v2211
        %v2276 = vadd.f32 %v1980, %v2216
        %v2277 = vadd.f32 %v1981, %v2219
        %v2278 = vadd.f32 %v1982, %v2224
        %v2279 = vadd.f32 %v1983, %v2227
        %v2280 = vadd.f32 %v1984, %v2232
        %v2281 = vadd.f32 %v1985, %v2235
        %v2282 = vadd.f32 %v1986, %v2240
        %v2283 = vadd.f32 %v1987, %v2243
        %v2284 = vadd.f32 %v1988, %v2248
        %v2285 = vadd.f32 %v1989, %v2251
        %v2286 = vld [vmem:[%s1990 + $0x1] sm:$0xff]
        %v2287 = vld [vmem:[%s1990 + $0x9] sm:$0xff]
        %v2288 = vld [vmem:[%s1990 + $0x19] sm:$0xff]
        %v2289 = vld [vmem:[%s1990 + $0x21] sm:$0xff]
        %v2290 = vld [vmem:[%s1990 + $0x31] sm:$0xff]
        %v2291 = vld [vmem:[%s1990 + $0x39] sm:$0xff]
        %v2292 = vld [vmem:[%s1990 + $0x49] sm:$0xff]
        %v2293 = vld [vmem:[%s1990 + $0x51] sm:$0xff]
        %v2294 = vld [vmem:[%s1990 + $0x61] sm:$0xff]
        %v2295 = vld [vmem:[%s1990 + $0x69] sm:$0xff]
        %v2296 = vld [vmem:[%s1990 + $0x79] sm:$0xff]
        %v2297 = vld [vmem:[%s1990 + $0x81] sm:$0xff]
        %v2298 = vld [vmem:[%s1990 + $0x91] sm:$0xff]
        %v2299 = vld [vmem:[%s1990 + $0x99] sm:$0xff]
        %v2300 = vld [vmem:[%s1990 + $0xa9] sm:$0xff]
        %v2301 = vld [vmem:[%s1990 + $0xb1] sm:$0xff]
        %v2302 = vld [vmem:[%s1990 + $0xc1] sm:$0xff]
        %v2303 = vld [vmem:[%s1990 + $0xc9] sm:$0xff]
        %v2304 = vld [vmem:[%s1990 + $0xd9] sm:$0xff]
        %v2305 = vld [vmem:[%s1990 + $0xe1] sm:$0xff]
        %v2306 = vld [vmem:[%s1990 + $0xf1] sm:$0xff]
        %v2307 = vld [vmem:[%s1990 + $0xf9] sm:$0xff]
        %v2308 = vld [vmem:[%s1990 + $0x109] sm:$0xff]
        %v2309 = vld [vmem:[%s1990 + $0x111] sm:$0xff]
        %v2310 = vld [vmem:[%s1990 + $0x121] sm:$0xff]
        %v2311 = vld [vmem:[%s1990 + $0x129] sm:$0xff]
        %v2312 = vld [vmem:[%s1990 + $0x139] sm:$0xff]
        %v2313 = vld [vmem:[%s1990 + $0x141] sm:$0xff]
        %v2314 = vld [vmem:[%s1990 + $0x151] sm:$0xff]
        %v2315 = vld [vmem:[%s1990 + $0x159] sm:$0xff]
        %v2316 = vld [vmem:[%s1990 + $0x169] sm:$0xff]
        %v2317 = vld [vmem:[%s1990 + $0x171] sm:$0xff]
        %s2318 = scalar_lea.vmem %s1, 28
        %v2319 = vld [vmem:[%s2318] sm:$0x7]
        %v2320 = vpack.c.bf16 %v2287, %v2286
        %v2321 = vpack.c.bf16 %v2289, %v2288
        %v2322 = vpack.c.bf16 %v2291, %v2290
        %v2323 = vpack.c.bf16 %v2293, %v2292
        %v2324 = vpack.c.bf16 %v2295, %v2294
        %v2325 = vpack.c.bf16 %v2297, %v2296
        %v2326 = vpack.c.bf16 %v2299, %v2298
        %v2327 = vpack.c.bf16 %v2301, %v2300
        %v2328 = vpack.c.bf16 %v2303, %v2302
        %v2329 = vpack.c.bf16 %v2305, %v2304
        %v2330 = vpack.c.bf16 %v2307, %v2306
        %v2331 = vpack.c.bf16 %v2309, %v2308
        %v2332 = vpack.c.bf16 %v2311, %v2310
        %v2333 = vpack.c.bf16 %v2313, %v2312
        %v2334 = vpack.c.bf16 %v2315, %v2314
        %v2335 = vpack.c.bf16 %v2317, %v2316
        %v2336 = vpack.c.bf16 %v2319, %v2319
        %v2338 = vsel %vm170, %v2320, 0
        %v2341 = vsel %vm170, %v2321, 0
        %v2344 = vsel %vm170, %v2322, 0
        %v2347 = vsel %vm170, %v2323, 0
        %v2350 = vsel %vm170, %v2324, 0
        %v2353 = vsel %vm170, %v2325, 0
        %v2356 = vsel %vm170, %v2326, 0
        %v2359 = vsel %vm170, %v2327, 0
        %v2362 = vsel %vm170, %v2328, 0
        %v2365 = vsel %vm170, %v2329, 0
        %v2368 = vsel %vm170, %v2330, 0
        %v2371 = vsel %vm170, %v2331, 0
        %v2374 = vsel %vm170, %v2332, 0
        %v2377 = vsel %vm170, %v2333, 0
        %v2380 = vsel %vm170, %v2334, 0
        %v2383 = vsel %vm170, %v2335, 0
        %v2386 = vand.u32 %v2336, %v433
        %2388 = vmatprep.subr.bf16.mxu0 0
        %2389 = vmatpush1.bf16.msra.mxu0 0
        %2390 = vmatprep.subr.bf16.mxu0 0
        %2391 = vmatpush1.bf16.msra.mxu0 0
        %2392 = vmatprep.subr.bf16.mxu0 0
        %2393 = vmatpush1.bf16.msra.mxu0 0
        %2394 = vmatprep.subr.bf16.mxu0 0
        %2395 = vmatpush1.bf16.msra.mxu0 0
        %2396 = vmatprep.subr.bf16.mxu0 0
        %2397 = vmatpush1.bf16.msra.mxu0 0
        %2398 = vmatprep.subr.bf16.mxu0 0
        %2399 = vmatpush1.bf16.msra.mxu0 0
        %2400 = vmatprep.subr.bf16.mxu0 0
        %2401 = vmatpush1.bf16.msra.mxu0 0
        %2402 = vmatprep.subr.bf16.mxu0 0
        %2403 = vmatpush1.bf16.msra.mxu0 %v2386
        %2404 = vmatprep.subr.bf16.mxu0 0
        %2405 = vmatpush2.bf16.msra.mxu0 0
        %2406 = vmatprep.subr.bf16.mxu0 0
        %2407 = vmatpush2.bf16.msra.mxu0 0
        %2408 = vmatprep.subr.bf16.mxu0 0
        %2409 = vmatpush2.bf16.msra.mxu0 0
        %2410 = vmatprep.subr.bf16.mxu0 0
        %2411 = vmatpush2.bf16.msra.mxu0 0
        %2412 = vmatprep.subr.bf16.mxu0 0
        %2413 = vmatpush2.bf16.msra.mxu0 0
        %2414 = vmatprep.subr.bf16.mxu0 0
        %2415 = vmatpush2.bf16.msra.mxu0 0
        %2416 = vmatprep.subr.bf16.mxu0 0
        %2417 = vmatpush2.bf16.msra.mxu0 0
        %2418 = vmatprep.subr.bf16.mxu0 0
        %2419 = vmatpush2.bf16.msra.mxu0 0
        %2420 = vmatprep.mubr.bf16.mxu0 0
        %2421 = vmatmul.mubr.bf16.gmra.mxu0 %v2338
        %v2422 = vpop.f32.mrf.mxu0
        %v2423 = vadd.f32 0.0, %v2422
        %v2424 = vpop.f32.mrf.mxu0
        %v2425 = vpop.f32.mrf.mxu0
        %v2426 = vadd.f32 0.0, %v2425
        %v2427 = vpop.f32.mrf.mxu0
        %2428 = vmatprep.mubr.bf16.mxu0 0
        %2429 = vmatmul.mubr.bf16.gmra.mxu0 %v2341
        %v2430 = vpop.f32.mrf.mxu0
        %v2431 = vadd.f32 0.0, %v2430
        %v2432 = vpop.f32.mrf.mxu0
        %v2433 = vpop.f32.mrf.mxu0
        %v2434 = vadd.f32 0.0, %v2433
        %v2435 = vpop.f32.mrf.mxu0
        %2436 = vmatprep.mubr.bf16.mxu0 0
        %2437 = vmatmul.mubr.bf16.gmra.mxu0 %v2344
        %v2438 = vpop.f32.mrf.mxu0
        %v2439 = vadd.f32 0.0, %v2438
        %v2440 = vpop.f32.mrf.mxu0
        %v2441 = vpop.f32.mrf.mxu0
        %v2442 = vadd.f32 0.0, %v2441
        %v2443 = vpop.f32.mrf.mxu0
        %2444 = vmatprep.mubr.bf16.mxu0 0
        %2445 = vmatmul.mubr.bf16.gmra.mxu0 %v2347
        %v2446 = vpop.f32.mrf.mxu0
        %v2447 = vadd.f32 0.0, %v2446
        %v2448 = vpop.f32.mrf.mxu0
        %v2449 = vpop.f32.mrf.mxu0
        %v2450 = vadd.f32 0.0, %v2449
        %v2451 = vpop.f32.mrf.mxu0
        %2452 = vmatprep.mubr.bf16.mxu0 0
        %2453 = vmatmul.mubr.bf16.gmra.mxu0 %v2350
        %v2454 = vpop.f32.mrf.mxu0
        %v2455 = vadd.f32 0.0, %v2454
        %v2456 = vpop.f32.mrf.mxu0
        %v2457 = vpop.f32.mrf.mxu0
        %v2458 = vadd.f32 0.0, %v2457
        %v2459 = vpop.f32.mrf.mxu0
        %2460 = vmatprep.mubr.bf16.mxu0 0
        %2461 = vmatmul.mubr.bf16.gmra.mxu0 %v2353
        %v2462 = vpop.f32.mrf.mxu0
        %v2463 = vadd.f32 0.0, %v2462
        %v2464 = vpop.f32.mrf.mxu0
        %v2465 = vpop.f32.mrf.mxu0
        %v2466 = vadd.f32 0.0, %v2465
        %v2467 = vpop.f32.mrf.mxu0
        %2468 = vmatprep.mubr.bf16.mxu0 0
        %2469 = vmatmul.mubr.bf16.gmra.mxu0 %v2356
        %v2470 = vpop.f32.mrf.mxu0
        %v2471 = vadd.f32 0.0, %v2470
        %v2472 = vpop.f32.mrf.mxu0
        %v2473 = vpop.f32.mrf.mxu0
        %v2474 = vadd.f32 0.0, %v2473
        %v2475 = vpop.f32.mrf.mxu0
        %2476 = vmatprep.mubr.bf16.mxu0 0
        %2477 = vmatmul.mubr.bf16.gmra.mxu0 %v2359
        %v2478 = vpop.f32.mrf.mxu0
        %v2479 = vadd.f32 0.0, %v2478
        %v2480 = vpop.f32.mrf.mxu0
        %v2481 = vpop.f32.mrf.mxu0
        %v2482 = vadd.f32 0.0, %v2481
        %v2483 = vpop.f32.mrf.mxu0
        %2484 = vmatprep.mubr.bf16.mxu0 0
        %2485 = vmatmul.mubr.bf16.gmra.mxu0 %v2362
        %v2486 = vpop.f32.mrf.mxu0
        %v2487 = vadd.f32 0.0, %v2486
        %v2488 = vpop.f32.mrf.mxu0
        %v2489 = vpop.f32.mrf.mxu0
        %v2490 = vadd.f32 0.0, %v2489
        %v2491 = vpop.f32.mrf.mxu0
        %2492 = vmatprep.mubr.bf16.mxu0 0
        %2493 = vmatmul.mubr.bf16.gmra.mxu0 %v2365
        %v2494 = vpop.f32.mrf.mxu0
        %v2495 = vadd.f32 0.0, %v2494
        %v2496 = vpop.f32.mrf.mxu0
        %v2497 = vpop.f32.mrf.mxu0
        %v2498 = vadd.f32 0.0, %v2497
        %v2499 = vpop.f32.mrf.mxu0
        %2500 = vmatprep.mubr.bf16.mxu0 0
        %2501 = vmatmul.mubr.bf16.gmra.mxu0 %v2368
        %v2502 = vpop.f32.mrf.mxu0
        %v2503 = vadd.f32 0.0, %v2502
        %v2504 = vpop.f32.mrf.mxu0
        %v2505 = vpop.f32.mrf.mxu0
        %v2506 = vadd.f32 0.0, %v2505
        %v2507 = vpop.f32.mrf.mxu0
        %2508 = vmatprep.mubr.bf16.mxu0 0
        %2509 = vmatmul.mubr.bf16.gmra.mxu0 %v2371
        %v2510 = vpop.f32.mrf.mxu0
        %v2511 = vadd.f32 0.0, %v2510
        %v2512 = vpop.f32.mrf.mxu0
        %v2513 = vpop.f32.mrf.mxu0
        %v2514 = vadd.f32 0.0, %v2513
        %v2515 = vpop.f32.mrf.mxu0
        %2516 = vmatprep.mubr.bf16.mxu0 0
        %2517 = vmatmul.mubr.bf16.gmra.mxu0 %v2374
        %v2518 = vpop.f32.mrf.mxu0
        %v2519 = vadd.f32 0.0, %v2518
        %v2520 = vpop.f32.mrf.mxu0
        %v2521 = vpop.f32.mrf.mxu0
        %v2522 = vadd.f32 0.0, %v2521
        %v2523 = vpop.f32.mrf.mxu0
        %2524 = vmatprep.mubr.bf16.mxu0 0
        %2525 = vmatmul.mubr.bf16.gmra.mxu0 %v2377
        %v2526 = vpop.f32.mrf.mxu0
        %v2527 = vadd.f32 0.0, %v2526
        %v2528 = vpop.f32.mrf.mxu0
        %v2529 = vpop.f32.mrf.mxu0
        %v2530 = vadd.f32 0.0, %v2529
        %v2531 = vpop.f32.mrf.mxu0
        %2532 = vmatprep.mubr.bf16.mxu0 0
        %2533 = vmatmul.mubr.bf16.gmra.mxu0 %v2380
        %v2534 = vpop.f32.mrf.mxu0
        %v2535 = vadd.f32 0.0, %v2534
        %v2536 = vpop.f32.mrf.mxu0
        %v2537 = vpop.f32.mrf.mxu0
        %v2538 = vadd.f32 0.0, %v2537
        %v2539 = vpop.f32.mrf.mxu0
        %2540 = vmatprep.mubr.bf16.mxu0 0
        %2541 = vmatmul.mubr.bf16.gmra.mxu0 %v2383
        %v2542 = vpop.f32.mrf.mxu0
        %v2543 = vadd.f32 0.0, %v2542
        %v2544 = vpop.f32.mrf.mxu0
        %v2545 = vpop.f32.mrf.mxu0
        %v2546 = vadd.f32 0.0, %v2545
        %v2547 = vpop.f32.mrf.mxu0
        %2548 = vdwg.mxu0
        %v2549 = vadd.f32 %v2254, %v2423
        %v2550 = vadd.f32 %v2255, %v2426
        %v2551 = vadd.f32 %v2256, %v2431
        %v2552 = vadd.f32 %v2257, %v2434
        %v2553 = vadd.f32 %v2258, %v2439
        %v2554 = vadd.f32 %v2259, %v2442
        %v2555 = vadd.f32 %v2260, %v2447
        %v2556 = vadd.f32 %v2261, %v2450
        %v2557 = vadd.f32 %v2262, %v2455
        %v2558 = vadd.f32 %v2263, %v2458
        %v2559 = vadd.f32 %v2264, %v2463
        %v2560 = vadd.f32 %v2265, %v2466
        %v2561 = vadd.f32 %v2266, %v2471
        %v2562 = vadd.f32 %v2267, %v2474
        %v2563 = vadd.f32 %v2268, %v2479
        %v2564 = vadd.f32 %v2269, %v2482
        %v2565 = vadd.f32 %v2270, %v2487
        %v2566 = vadd.f32 %v2271, %v2490
        %v2567 = vadd.f32 %v2272, %v2495
        %v2568 = vadd.f32 %v2273, %v2498
        %v2569 = vadd.f32 %v2274, %v2503
        %v2570 = vadd.f32 %v2275, %v2506
        %v2571 = vadd.f32 %v2276, %v2511
        %v2572 = vadd.f32 %v2277, %v2514
        %v2573 = vadd.f32 %v2278, %v2519
        %v2574 = vadd.f32 %v2279, %v2522
        %v2575 = vadd.f32 %v2280, %v2527
        %v2576 = vadd.f32 %v2281, %v2530
        %v2577 = vadd.f32 %v2282, %v2535
        %v2578 = vadd.f32 %v2283, %v2538
        %v2579 = vadd.f32 %v2284, %v2543
        %v2580 = vadd.f32 %v2285, %v2546
        %v2581 = vld [vmem:[%s1990 + $0x2] sm:$0xff]
        %v2582 = vld [vmem:[%s1990 + $0xa] sm:$0xff]
        %v2583 = vld [vmem:[%s1990 + $0x1a] sm:$0xff]
        %v2584 = vld [vmem:[%s1990 + $0x22] sm:$0xff]
        %v2585 = vld [vmem:[%s1990 + $0x32] sm:$0xff]
        %v2586 = vld [vmem:[%s1990 + $0x3a] sm:$0xff]
        %v2587 = vld [vmem:[%s1990 + $0x4a] sm:$0xff]
        %v2588 = vld [vmem:[%s1990 + $0x52] sm:$0xff]
        %v2589 = vld [vmem:[%s1990 + $0x62] sm:$0xff]
        %v2590 = vld [vmem:[%s1990 + $0x6a] sm:$0xff]
        %v2591 = vld [vmem:[%s1990 + $0x7a] sm:$0xff]
        %v2592 = vld [vmem:[%s1990 + $0x82] sm:$0xff]
        %v2593 = vld [vmem:[%s1990 + $0x92] sm:$0xff]
        %v2594 = vld [vmem:[%s1990 + $0x9a] sm:$0xff]
        %v2595 = vld [vmem:[%s1990 + $0xaa] sm:$0xff]
        %v2596 = vld [vmem:[%s1990 + $0xb2] sm:$0xff]
        %v2597 = vld [vmem:[%s1990 + $0xc2] sm:$0xff]
        %v2598 = vld [vmem:[%s1990 + $0xca] sm:$0xff]
        %v2599 = vld [vmem:[%s1990 + $0xda] sm:$0xff]
        %v2600 = vld [vmem:[%s1990 + $0xe2] sm:$0xff]
        %v2601 = vld [vmem:[%s1990 + $0xf2] sm:$0xff]
        %v2602 = vld [vmem:[%s1990 + $0xfa] sm:$0xff]
        %v2603 = vld [vmem:[%s1990 + $0x10a] sm:$0xff]
        %v2604 = vld [vmem:[%s1990 + $0x112] sm:$0xff]
        %v2605 = vld [vmem:[%s1990 + $0x122] sm:$0xff]
        %v2606 = vld [vmem:[%s1990 + $0x12a] sm:$0xff]
        %v2607 = vld [vmem:[%s1990 + $0x13a] sm:$0xff]
        %v2608 = vld [vmem:[%s1990 + $0x142] sm:$0xff]
        %v2609 = vld [vmem:[%s1990 + $0x152] sm:$0xff]
        %v2610 = vld [vmem:[%s1990 + $0x15a] sm:$0xff]
        %v2611 = vld [vmem:[%s1990 + $0x16a] sm:$0xff]
        %v2612 = vld [vmem:[%s1990 + $0x172] sm:$0xff]
        %s2613 = scalar_lea.vmem %s1, 32
        %v2614 = vld [vmem:[%s2613] sm:$0x7]
        %v2615 = vpack.c.bf16 %v2582, %v2581
        %v2616 = vpack.c.bf16 %v2584, %v2583
        %v2617 = vpack.c.bf16 %v2586, %v2585
        %v2618 = vpack.c.bf16 %v2588, %v2587
        %v2619 = vpack.c.bf16 %v2590, %v2589
        %v2620 = vpack.c.bf16 %v2592, %v2591
        %v2621 = vpack.c.bf16 %v2594, %v2593
        %v2622 = vpack.c.bf16 %v2596, %v2595
        %v2623 = vpack.c.bf16 %v2598, %v2597
        %v2624 = vpack.c.bf16 %v2600, %v2599
        %v2625 = vpack.c.bf16 %v2602, %v2601
        %v2626 = vpack.c.bf16 %v2604, %v2603
        %v2627 = vpack.c.bf16 %v2606, %v2605
        %v2628 = vpack.c.bf16 %v2608, %v2607
        %v2629 = vpack.c.bf16 %v2610, %v2609
        %v2630 = vpack.c.bf16 %v2612, %v2611
        %v2631 = vpack.c.bf16 %v2614, %v2614
        %v2633 = vsel %vm170, %v2615, 0
        %v2636 = vsel %vm170, %v2616, 0
        %v2639 = vsel %vm170, %v2617, 0
        %v2642 = vsel %vm170, %v2618, 0
        %v2645 = vsel %vm170, %v2619, 0
        %v2648 = vsel %vm170, %v2620, 0
        %v2651 = vsel %vm170, %v2621, 0
        %v2654 = vsel %vm170, %v2622, 0
        %v2657 = vsel %vm170, %v2623, 0
        %v2660 = vsel %vm170, %v2624, 0
        %v2663 = vsel %vm170, %v2625, 0
        %v2666 = vsel %vm170, %v2626, 0
        %v2669 = vsel %vm170, %v2627, 0
        %v2672 = vsel %vm170, %v2628, 0
        %v2675 = vsel %vm170, %v2629, 0
        %v2678 = vsel %vm170, %v2630, 0
        %v2681 = vand.u32 %v2631, %v433
        %2683 = vmatprep.subr.bf16.mxu0 0
        %2684 = vmatpush1.bf16.msra.mxu0 0
        %2685 = vmatprep.subr.bf16.mxu0 0
        %2686 = vmatpush1.bf16.msra.mxu0 0
        %2687 = vmatprep.subr.bf16.mxu0 0
        %2688 = vmatpush1.bf16.msra.mxu0 0
        %2689 = vmatprep.subr.bf16.mxu0 0
        %2690 = vmatpush1.bf16.msra.mxu0 0
        %2691 = vmatprep.subr.bf16.mxu0 0
        %2692 = vmatpush1.bf16.msra.mxu0 0
        %2693 = vmatprep.subr.bf16.mxu0 0
        %2694 = vmatpush1.bf16.msra.mxu0 0
        %2695 = vmatprep.subr.bf16.mxu0 0
        %2696 = vmatpush1.bf16.msra.mxu0 0
        %2697 = vmatprep.subr.bf16.mxu0 0
        %2698 = vmatpush1.bf16.msra.mxu0 %v2681
        %2699 = vmatprep.subr.bf16.mxu0 0
        %2700 = vmatpush2.bf16.msra.mxu0 0
        %2701 = vmatprep.subr.bf16.mxu0 0
        %2702 = vmatpush2.bf16.msra.mxu0 0
        %2703 = vmatprep.subr.bf16.mxu0 0
        %2704 = vmatpush2.bf16.msra.mxu0 0
        %2705 = vmatprep.subr.bf16.mxu0 0
        %2706 = vmatpush2.bf16.msra.mxu0 0
        %2707 = vmatprep.subr.bf16.mxu0 0
        %2708 = vmatpush2.bf16.msra.mxu0 0
        %2709 = vmatprep.subr.bf16.mxu0 0
        %2710 = vmatpush2.bf16.msra.mxu0 0
        %2711 = vmatprep.subr.bf16.mxu0 0
        %2712 = vmatpush2.bf16.msra.mxu0 0
        %2713 = vmatprep.subr.bf16.mxu0 0
        %2714 = vmatpush2.bf16.msra.mxu0 0
        %2715 = vmatprep.mubr.bf16.mxu0 0
        %2716 = vmatmul.mubr.bf16.gmra.mxu0 %v2633
        %v2717 = vpop.f32.mrf.mxu0
        %v2718 = vadd.f32 0.0, %v2717
        %v2719 = vpop.f32.mrf.mxu0
        %v2720 = vpop.f32.mrf.mxu0
        %v2721 = vadd.f32 0.0, %v2720
        %v2722 = vpop.f32.mrf.mxu0
        %2723 = vmatprep.mubr.bf16.mxu0 0
        %2724 = vmatmul.mubr.bf16.gmra.mxu0 %v2636
        %v2725 = vpop.f32.mrf.mxu0
        %v2726 = vadd.f32 0.0, %v2725
        %v2727 = vpop.f32.mrf.mxu0
        %v2728 = vpop.f32.mrf.mxu0
        %v2729 = vadd.f32 0.0, %v2728
        %v2730 = vpop.f32.mrf.mxu0
        %2731 = vmatprep.mubr.bf16.mxu0 0
        %2732 = vmatmul.mubr.bf16.gmra.mxu0 %v2639
        %v2733 = vpop.f32.mrf.mxu0
        %v2734 = vadd.f32 0.0, %v2733
        %v2735 = vpop.f32.mrf.mxu0
        %v2736 = vpop.f32.mrf.mxu0
        %v2737 = vadd.f32 0.0, %v2736
        %v2738 = vpop.f32.mrf.mxu0
        %2739 = vmatprep.mubr.bf16.mxu0 0
        %2740 = vmatmul.mubr.bf16.gmra.mxu0 %v2642
        %v2741 = vpop.f32.mrf.mxu0
        %v2742 = vadd.f32 0.0, %v2741
        %v2743 = vpop.f32.mrf.mxu0
        %v2744 = vpop.f32.mrf.mxu0
        %v2745 = vadd.f32 0.0, %v2744
        %v2746 = vpop.f32.mrf.mxu0
        %2747 = vmatprep.mubr.bf16.mxu0 0
        %2748 = vmatmul.mubr.bf16.gmra.mxu0 %v2645
        %v2749 = vpop.f32.mrf.mxu0
        %v2750 = vadd.f32 0.0, %v2749
        %v2751 = vpop.f32.mrf.mxu0
        %v2752 = vpop.f32.mrf.mxu0
        %v2753 = vadd.f32 0.0, %v2752
        %v2754 = vpop.f32.mrf.mxu0
        %2755 = vmatprep.mubr.bf16.mxu0 0
        %2756 = vmatmul.mubr.bf16.gmra.mxu0 %v2648
        %v2757 = vpop.f32.mrf.mxu0
        %v2758 = vadd.f32 0.0, %v2757
        %v2759 = vpop.f32.mrf.mxu0
        %v2760 = vpop.f32.mrf.mxu0
        %v2761 = vadd.f32 0.0, %v2760
        %v2762 = vpop.f32.mrf.mxu0
        %2763 = vmatprep.mubr.bf16.mxu0 0
        %2764 = vmatmul.mubr.bf16.gmra.mxu0 %v2651
        %v2765 = vpop.f32.mrf.mxu0
        %v2766 = vadd.f32 0.0, %v2765
        %v2767 = vpop.f32.mrf.mxu0
        %v2768 = vpop.f32.mrf.mxu0
        %v2769 = vadd.f32 0.0, %v2768
        %v2770 = vpop.f32.mrf.mxu0
        %2771 = vmatprep.mubr.bf16.mxu0 0
        %2772 = vmatmul.mubr.bf16.gmra.mxu0 %v2654
        %v2773 = vpop.f32.mrf.mxu0
        %v2774 = vadd.f32 0.0, %v2773
        %v2775 = vpop.f32.mrf.mxu0
        %v2776 = vpop.f32.mrf.mxu0
        %v2777 = vadd.f32 0.0, %v2776
        %v2778 = vpop.f32.mrf.mxu0
        %2779 = vmatprep.mubr.bf16.mxu0 0
        %2780 = vmatmul.mubr.bf16.gmra.mxu0 %v2657
        %v2781 = vpop.f32.mrf.mxu0
        %v2782 = vadd.f32 0.0, %v2781
        %v2783 = vpop.f32.mrf.mxu0
        %v2784 = vpop.f32.mrf.mxu0
        %v2785 = vadd.f32 0.0, %v2784
        %v2786 = vpop.f32.mrf.mxu0
        %2787 = vmatprep.mubr.bf16.mxu0 0
        %2788 = vmatmul.mubr.bf16.gmra.mxu0 %v2660
        %v2789 = vpop.f32.mrf.mxu0
        %v2790 = vadd.f32 0.0, %v2789
        %v2791 = vpop.f32.mrf.mxu0
        %v2792 = vpop.f32.mrf.mxu0
        %v2793 = vadd.f32 0.0, %v2792
        %v2794 = vpop.f32.mrf.mxu0
        %2795 = vmatprep.mubr.bf16.mxu0 0
        %2796 = vmatmul.mubr.bf16.gmra.mxu0 %v2663
        %v2797 = vpop.f32.mrf.mxu0
        %v2798 = vadd.f32 0.0, %v2797
        %v2799 = vpop.f32.mrf.mxu0
        %v2800 = vpop.f32.mrf.mxu0
        %v2801 = vadd.f32 0.0, %v2800
        %v2802 = vpop.f32.mrf.mxu0
        %2803 = vmatprep.mubr.bf16.mxu0 0
        %2804 = vmatmul.mubr.bf16.gmra.mxu0 %v2666
        %v2805 = vpop.f32.mrf.mxu0
        %v2806 = vadd.f32 0.0, %v2805
        %v2807 = vpop.f32.mrf.mxu0
        %v2808 = vpop.f32.mrf.mxu0
        %v2809 = vadd.f32 0.0, %v2808
        %v2810 = vpop.f32.mrf.mxu0
        %2811 = vmatprep.mubr.bf16.mxu0 0
        %2812 = vmatmul.mubr.bf16.gmra.mxu0 %v2669
        %v2813 = vpop.f32.mrf.mxu0
        %v2814 = vadd.f32 0.0, %v2813
        %v2815 = vpop.f32.mrf.mxu0
        %v2816 = vpop.f32.mrf.mxu0
        %v2817 = vadd.f32 0.0, %v2816
        %v2818 = vpop.f32.mrf.mxu0
        %2819 = vmatprep.mubr.bf16.mxu0 0
        %2820 = vmatmul.mubr.bf16.gmra.mxu0 %v2672
        %v2821 = vpop.f32.mrf.mxu0
        %v2822 = vadd.f32 0.0, %v2821
        %v2823 = vpop.f32.mrf.mxu0
        %v2824 = vpop.f32.mrf.mxu0
        %v2825 = vadd.f32 0.0, %v2824
        %v2826 = vpop.f32.mrf.mxu0
        %2827 = vmatprep.mubr.bf16.mxu0 0
        %2828 = vmatmul.mubr.bf16.gmra.mxu0 %v2675
        %v2829 = vpop.f32.mrf.mxu0
        %v2830 = vadd.f32 0.0, %v2829
        %v2831 = vpop.f32.mrf.mxu0
        %v2832 = vpop.f32.mrf.mxu0
        %v2833 = vadd.f32 0.0, %v2832
        %v2834 = vpop.f32.mrf.mxu0
        %2835 = vmatprep.mubr.bf16.mxu0 0
        %2836 = vmatmul.mubr.bf16.gmra.mxu0 %v2678
        %v2837 = vpop.f32.mrf.mxu0
        %v2838 = vadd.f32 0.0, %v2837
        %v2839 = vpop.f32.mrf.mxu0
        %v2840 = vpop.f32.mrf.mxu0
        %v2841 = vadd.f32 0.0, %v2840
        %v2842 = vpop.f32.mrf.mxu0
        %2843 = vdwg.mxu0
        %v2844 = vadd.f32 %v2549, %v2718
        %v2845 = vadd.f32 %v2550, %v2721
        %v2846 = vadd.f32 %v2551, %v2726
        %v2847 = vadd.f32 %v2552, %v2729
        %v2848 = vadd.f32 %v2553, %v2734
        %v2849 = vadd.f32 %v2554, %v2737
        %v2850 = vadd.f32 %v2555, %v2742
        %v2851 = vadd.f32 %v2556, %v2745
        %v2852 = vadd.f32 %v2557, %v2750
        %v2853 = vadd.f32 %v2558, %v2753
        %v2854 = vadd.f32 %v2559, %v2758
        %v2855 = vadd.f32 %v2560, %v2761
        %v2856 = vadd.f32 %v2561, %v2766
        %v2857 = vadd.f32 %v2562, %v2769
        %v2858 = vadd.f32 %v2563, %v2774
        %v2859 = vadd.f32 %v2564, %v2777
        %v2860 = vadd.f32 %v2565, %v2782
        %v2861 = vadd.f32 %v2566, %v2785
        %v2862 = vadd.f32 %v2567, %v2790
        %v2863 = vadd.f32 %v2568, %v2793
        %v2864 = vadd.f32 %v2569, %v2798
        %v2865 = vadd.f32 %v2570, %v2801
        %v2866 = vadd.f32 %v2571, %v2806
        %v2867 = vadd.f32 %v2572, %v2809
        %v2868 = vadd.f32 %v2573, %v2814
        %v2869 = vadd.f32 %v2574, %v2817
        %v2870 = vadd.f32 %v2575, %v2822
        %v2871 = vadd.f32 %v2576, %v2825
        %v2872 = vadd.f32 %v2577, %v2830
        %v2873 = vadd.f32 %v2578, %v2833
        %v2874 = vadd.f32 %v2579, %v2838
        %v2875 = vadd.f32 %v2580, %v2841
        %v2876 = vld [vmem:[%s2] sm:$0x1]
        %v2878 = vlaneseq
        %v2879 = vshrl.u32 %v2878, 7
        %v2880 = vsub.s32 0, %v2879
        %v2881 = vrot.slane %v2876, %v2880
        %v2883 = vadd.f32 %v2844, %v2881
        %v2884 = vadd.f32 %v2845, %v2881
        %v2885 = vadd.f32 %v2846, %v2881
        %v2886 = vadd.f32 %v2847, %v2881
        %v2887 = vadd.f32 %v2848, %v2881
        %v2888 = vadd.f32 %v2849, %v2881
        %v2889 = vadd.f32 %v2850, %v2881
        %v2890 = vadd.f32 %v2851, %v2881
        %v2891 = vadd.f32 %v2852, %v2881
        %v2892 = vadd.f32 %v2853, %v2881
        %v2893 = vadd.f32 %v2854, %v2881
        %v2894 = vadd.f32 %v2855, %v2881
        %v2895 = vadd.f32 %v2856, %v2881
        %v2896 = vadd.f32 %v2857, %v2881
        %v2897 = vadd.f32 %v2858, %v2881
        %v2898 = vadd.f32 %v2859, %v2881
        %v2899 = vadd.f32 %v2860, %v2881
        %v2900 = vadd.f32 %v2861, %v2881
        %v2901 = vadd.f32 %v2862, %v2881
        %v2902 = vadd.f32 %v2863, %v2881
        %v2903 = vadd.f32 %v2864, %v2881
        %v2904 = vadd.f32 %v2865, %v2881
        %v2905 = vadd.f32 %v2866, %v2881
        %v2906 = vadd.f32 %v2867, %v2881
        %v2907 = vadd.f32 %v2868, %v2881
        %v2908 = vadd.f32 %v2869, %v2881
        %v2909 = vadd.f32 %v2870, %v2881
        %v2910 = vadd.f32 %v2871, %v2881
        %v2911 = vadd.f32 %v2872, %v2881
        %v2912 = vadd.f32 %v2873, %v2881
        %v2913 = vadd.f32 %v2874, %v2881
        %v2914 = vadd.f32 %v2875, %v2881
        %vm2915 = vcmask 130048
        %2916 = vst.msk [vmem:[%s163] sm:$0xff] %vm2915, %v2883
        %2917 = vst.msk [vmem:[%s163 + $0x8] sm:$0xff] %vm2915, %v2884
        %2918 = vst.msk [vmem:[%s163 + $0x10] sm:$0xff] %vm2915, %v2885
        %2919 = vst.msk [vmem:[%s163 + $0x18] sm:$0xff] %vm2915, %v2886
        %2920 = vst.msk [vmem:[%s163 + $0x20] sm:$0xff] %vm2915, %v2887
        %2921 = vst.msk [vmem:[%s163 + $0x28] sm:$0xff] %vm2915, %v2888
        %2922 = vst.msk [vmem:[%s163 + $0x30] sm:$0xff] %vm2915, %v2889
        %2923 = vst.msk [vmem:[%s163 + $0x38] sm:$0xff] %vm2915, %v2890
        %2924 = vst.msk [vmem:[%s163 + $0x40] sm:$0xff] %vm2915, %v2891
        %2925 = vst.msk [vmem:[%s163 + $0x48] sm:$0xff] %vm2915, %v2892
        %2926 = vst.msk [vmem:[%s163 + $0x50] sm:$0xff] %vm2915, %v2893
        %2927 = vst.msk [vmem:[%s163 + $0x58] sm:$0xff] %vm2915, %v2894
        %2928 = vst.msk [vmem:[%s163 + $0x60] sm:$0xff] %vm2915, %v2895
        %2929 = vst.msk [vmem:[%s163 + $0x68] sm:$0xff] %vm2915, %v2896
        %2930 = vst.msk [vmem:[%s163 + $0x70] sm:$0xff] %vm2915, %v2897
        %2931 = vst.msk [vmem:[%s163 + $0x78] sm:$0xff] %vm2915, %v2898
        %2932 = vst.msk [vmem:[%s163 + $0x80] sm:$0xff] %vm2915, %v2899
        %2933 = vst.msk [vmem:[%s163 + $0x88] sm:$0xff] %vm2915, %v2900
        %2934 = vst.msk [vmem:[%s163 + $0x90] sm:$0xff] %vm2915, %v2901
        %2935 = vst.msk [vmem:[%s163 + $0x98] sm:$0xff] %vm2915, %v2902
        %2936 = vst.msk [vmem:[%s163 + $0xa0] sm:$0xff] %vm2915, %v2903
        %2937 = vst.msk [vmem:[%s163 + $0xa8] sm:$0xff] %vm2915, %v2904
        %2938 = vst.msk [vmem:[%s163 + $0xb0] sm:$0xff] %vm2915, %v2905
        %2939 = vst.msk [vmem:[%s163 + $0xb8] sm:$0xff] %vm2915, %v2906
        %2940 = vst.msk [vmem:[%s163 + $0xc0] sm:$0xff] %vm2915, %v2907
        %2941 = vst.msk [vmem:[%s163 + $0xc8] sm:$0xff] %vm2915, %v2908
        %2942 = vst.msk [vmem:[%s163 + $0xd0] sm:$0xff] %vm2915, %v2909
        %2943 = vst.msk [vmem:[%s163 + $0xd8] sm:$0xff] %vm2915, %v2910
        %2944 = vst.msk [vmem:[%s163 + $0xe0] sm:$0xff] %vm2915, %v2911
        %2945 = vst.msk [vmem:[%s163 + $0xe8] sm:$0xff] %vm2915, %v2912
        %2946 = vst.msk [vmem:[%s163 + $0xf0] sm:$0xff] %vm2915, %v2913
        %2947 = vst.msk [vmem:[%s163 + $0xf8] sm:$0xff] %vm2915, %v2914
        %s2948 = sand.u32 %s93, 1
        %s2949 = scalar_lea.sflag [#allocation4], %s2948
        %s2950 = sand.u32 %s93, 1
        %s2951 = smul.addr %s2950, 256
        %s2952 = scalar_lea.vmem [#allocation3], %s2951
        // Predicated region
        $region33: #{tpu_custom_call.1} parent=31 // pred_check
          %p2953 = pneg %p103
        $region34: #{tpu_custom_call.1} parent=31 // pred_check_branch
          %2955 = sbr.rel (%p2953) target = $region36
        $region35: #{tpu_custom_call.1} parent=31 // pred_region
          %s2957 = ssub.s32 4096, 4096
          %2958 = vsyncadd %s2949, %s2957
          %s2959 = smul.addr %s17, 32
          %s2960 = smul.addr %s2959, 128
          %s2961 = scalar_lea.hbm %s3, %s2960
          %s2962 = sshll.u32 %s2952, 4
          %s2963 = int_to_ptr.vmem [resolvable:$true] %s2962
          %2968 = dma.vmem_to_hbm [thread:$0]  %s2963, 4096, %s2961, %s2949, 128, 128, 8
        $region36: #{tpu_custom_call.1} parent=31 // pred_fallthru
          _
      $region32: #{tpu_custom_call.1} parent=5 // pred_fallthru
        _
      %p2969 = scmp.le.s32.totalorder 2, %s12
      // Predicated region
      $region37: #{tpu_custom_call.1} parent=5 // pred_check
        %p2970 = pneg %p2969
      $region38: #{tpu_custom_call.1} parent=5 // pred_check_branch
        %2972 = sbr.rel (%p2970) target = $region40
      $region39: #{tpu_custom_call.1} parent=5 // pred_region
        %s2973 = ssub.s32 %s12, 2
        // Predicated region
        $region41: #{tpu_custom_call.1} parent=39 // pred_check
          %p2974 = pneg %p109
        $region42: #{tpu_custom_call.1} parent=39 // pred_check_branch
          %2976 = sbr.rel (%p2974) target = $region44
        $region43: #{tpu_custom_call.1} parent=39 // pred_region
          %s2977 = sand.u32 %s94, 1
          %s2978 = scalar_lea.sflag [#allocation4], %s2977
          %s2979 = sand.u32 %s94, 1
          %s2980 = smul.addr %s2979, 256
          %s2981 = scalar_lea.vmem [#allocation3], %s2980
          %2982 = dma.done %s2978, 4096
        $region44: #{tpu_custom_call.1} parent=39 // pred_fallthru
          _
      $region40: #{tpu_custom_call.1} parent=5 // pred_fallthru
        _
    $region6: #{tpu_custom_call.1} parent=1 // loop_footer
      %s16 = sadd.s32 1, %s12
    $region7: #{tpu_custom_call.1} parent=1 // loop_footer_branch
      %11 = sbr.rel target = $region3
    $region8: #{tpu_custom_call.1} parent=1 // loop_exit
      _
    %2983 = vsyncpa [#allocation4], 1
    %s2984 = scalar_lea.sflag [#allocation4], 1
    %2985 = vsyncpa %s2984, 1

</llo_original>
